<compile_context>
chip_gen: v7x
topology: tpu7x:2x2x1
jax: 0.10.0
libtpu: 0.0.40
codegen_flags: <defaults>
</compile_context>

<pallas_src>
import functools

import jax
import jax.numpy as jnp
from jax import lax
from jax.experimental import pallas as pl
from jax.experimental.pallas import tpu as pltpu

_EPS = 1e-5  # torch.nn.InstanceNorm2d default eps


# ---------------------------------------------------------------------------
# Fused residual-block kernel factory
# ---------------------------------------------------------------------------
def _make_resblock_kernel(H, W, KH, KW, C, mode, compute_dtype):
    P = H * W
    KK = KH * KW
    offsets = [(ky - KH // 2, kx - KW // 2) for ky in range(KH) for kx in range(KW)]

    def kernel(x_ref, w1_ref, w2_ref, gb_ref, mask_ref, o_ref, slab_ref):
        x = x_ref[0]                                            # (C, P) f32

        def conv(src_f32, w_ref):
            # Implicit GEMM: build the (KK*C, P) patch slab from rolled +
            # zero-padding-masked taps (f32 roll/mask, cast on store), then
            # contract in ONE MXU dot with K = KK*C.
            for k, (dy, dx) in enumerate(offsets):
                shift = (-(dy * W + dx)) % P
                t = pltpu.roll(src_f32, shift, axis=1) if shift else src_f32
                if dy or dx:
                    t = t * mask_ref[k:k + 1, :]                # zero padding (f32)
                slab_ref[k * C:(k + 1) * C, :] = t.astype(compute_dtype)
            return jnp.dot(w_ref[...], slab_ref[...],
                           preferred_element_type=jnp.float32)  # (C, P) f32

        def inorm(y, g, b):
            # Per-(sample, channel) stats over the spatial (lane) axis, f32,
            # two-pass variance (matches torch biased-variance default).
            mean = jnp.mean(y, axis=1, keepdims=True)
            var = jnp.mean(jnp.square(y - mean), axis=1, keepdims=True)
            return (y - mean) * lax.rsqrt(var + _EPS) * g + b

        h = jnp.maximum(inorm(conv(x, w1_ref), gb_ref[0], gb_ref[1]), 0.0)
        h = inorm(conv(h, w2_ref), gb_ref[2], gb_ref[3])
        if mode == "add":
            o_ref[0] = x + h
        else:  # 'multi'
            o_ref[0] = x * h + x

    return kernel


# ---------------------------------------------------------------------------
# Wrapper: layout prep (pure reshapes / tiny constants) + pallas_call
# ---------------------------------------------------------------------------
@functools.partial(jax.jit, static_argnames=("mode", "compute_dtype"))
def residual_block(x_nchw, w1, g1, b1, w2, g2, b2, *, mode="add",
                   compute_dtype=jnp.bfloat16):
    """Pallas TPU forward of ResidualBlock.

    x_nchw: (N, C, H, W) float32 (PyTorch NCHW).
    w1, w2: torch Conv2d layout (Cout, Cin, KH, KW), bias-free.
    g*, b*: InstanceNorm2d affine weight / bias, shape (Cout,).
    """
    N, Cin, H, W = x_nchw.shape
    Cout, _, KH, KW = w1.shape
    assert Cin == Cout, "residual combine requires dim_in == dim_out"
    C = Cin
    P = H * W
    KK = KH * KW

    x = x_nchw.reshape(N, C, P).astype(jnp.float32)             # pure reshape

    # (Cout, Cin, KH, KW) -> (Cout, KK*Cin) so that column (k*Cin + ci)
    # matches slab row (k*Cin + ci), k = ky*KW + kx.  MXU dtype (bf16).
    def flatten_w(w):
        return jnp.transpose(w, (0, 2, 3, 1)).reshape(Cout, KK * Cin).astype(compute_dtype)

    w1p = flatten_w(w1)
    w2p = flatten_w(w2)

    # gamma1 / beta1 / gamma2 / beta2 packed into one resident tile.
    gb = jnp.stack([g1, b1, g2, b2], axis=0).reshape(4, Cout, 1).astype(jnp.float32)

    # Precomputed (KK, P) zero-padding masks (hoisted out of the kernel).
    offs = [(ky - KH // 2, kx - KW // 2) for ky in range(KH) for kx in range(KW)]
    ys = jnp.arange(H).reshape(H, 1)
    xs = jnp.arange(W).reshape(1, W)
    rows = []
    for dy, dx in offs:
        m = ((ys + dy >= 0) & (ys + dy < H) & (xs + dx >= 0) & (xs + dx < W))
        rows.append(m.reshape(1, P))
    masks = jnp.concatenate(rows, axis=0).astype(jnp.float32)   # (KK, P)

    kernel = _make_resblock_kernel(H, W, KH, KW, C, mode, compute_dtype)
    out = pl.pallas_call(
        kernel,
        out_shape=jax.ShapeDtypeStruct((N, C, P), jnp.float32),
        grid=(N,),
        in_specs=[
            pl.BlockSpec((1, C, P), lambda n: (n, 0, 0)),        # x, per sample
            pl.BlockSpec((C, KK * C), lambda n: (0, 0)),         # w1 flat (resident)
            pl.BlockSpec((C, KK * C), lambda n: (0, 0)),         # w2 flat (resident)
            pl.BlockSpec((4, C, 1), lambda n: (0, 0, 0)),        # packed gamma/beta
            pl.BlockSpec((KK, P), lambda n: (0, 0)),             # padding masks
        ],
        out_specs=pl.BlockSpec((1, C, P), lambda n: (n, 0, 0)),
        scratch_shapes=[pltpu.VMEM((KK * C, P), compute_dtype)],  # patch slab
        compiler_params=pltpu.CompilerParams(
            dimension_semantics=("parallel",),
            vmem_limit_bytes=32 * 1024 * 1024),
    )(x, w1p, w2p, gb, masks)
    return out.reshape(N, C, H, W)


# ---------------------------------------------------------------------------
# Pure-JAX reference (mirrors the torch module) for correctness checking
# ---------------------------------------------------------------------------
def _reference(x, w1, g1, b1, w2, g2, b2, mode="add"):
    def conv(v, w):
        return lax.conv_general_dilated(
            v, w, window_strides=(1, 1), padding=((1, 1), (1, 1)),
            dimension_numbers=("NCHW", "OIHW", "NCHW"))

    def inorm(y, g, b):
        mean = jnp.mean(y, axis=(2, 3), keepdims=True)
        var = jnp.mean(jnp.square(y - mean), axis=(2, 3), keepdims=True)
        yhat = (y - mean) * lax.rsqrt(var + _EPS)
        return yhat * g.reshape(1, -1, 1, 1) + b.reshape(1, -1, 1, 1)

    h = jnp.maximum(inorm(conv(x, w1), g1, b1), 0.0)
    h = inorm(conv(h, w2), g2, b2)
    return x + h if mode == "add" else x * h + x


if __name__ == "__main__":
    N, C, H, W = 2, 64, 16, 16

    keys = jax.random.split(jax.random.PRNGKey(0), 7)
    x = jax.random.normal(keys[0], (N, C, H, W), jnp.float32)
    w1 = 0.05 * jax.random.normal(keys[1], (C, C, 3, 3), jnp.float32)
    w2 = 0.05 * jax.random.normal(keys[2], (C, C, 3, 3), jnp.float32)
    g1 = 1.0 + 0.1 * jax.random.normal(keys[3], (C,), jnp.float32)
    b1 = 0.1 * jax.random.normal(keys[4], (C,), jnp.float32)
    g2 = 1.0 + 0.1 * jax.random.normal(keys[5], (C,), jnp.float32)
    b2 = 0.1 * jax.random.normal(keys[6], (C,), jnp.float32)

    ref_add = _reference(x, w1, g1, b1, w2, g2, b2, mode="add")
    ref_mul = _reference(x, w1, g1, b1, w2, g2, b2, mode="multi")

    # f32 compute path: tight-ish correctness check against the JAX reference.
    out_add_f32 = jax.block_until_ready(
        residual_block(x, w1, g1, b1, w2, g2, b2,
                       mode="add", compute_dtype=jnp.float32))
    out_mul_f32 = jax.block_until_ready(
        residual_block(x, w1, g1, b1, w2, g2, b2,
                       mode="multi", compute_dtype=jnp.float32))

    # bf16 MXU path (the performance config): loose tolerance, f32 accum/IN.
    out_add_bf16 = jax.block_until_ready(
        residual_block(x, w1, g1, b1, w2, g2, b2,
                       mode="add", compute_dtype=jnp.bfloat16))

    assert out_add_bf16.shape == (N, C, H, W)
    assert bool(jnp.all(jnp.isfinite(out_add_bf16)))
    assert bool(jnp.allclose(out_add_f32, ref_add, atol=5e-2, rtol=5e-2))
    assert bool(jnp.allclose(out_mul_f32, ref_mul, atol=5e-2, rtol=5e-2))
    assert bool(jnp.allclose(out_add_bf16, ref_add, atol=2e-1, rtol=2e-1))
    print("KERNEL_OK")
</pallas_src>

<mosaic_0001>
module attributes {stable_mosaic.version = 11 : i64} {
  func.func @kernel(%arg0: i32, %arg1: memref<1x64x256xf32, #tpu.memory_space<vmem>>, %arg2: memref<64x576xf32, #tpu.memory_space<vmem>>, %arg3: memref<64x576xf32, #tpu.memory_space<vmem>>, %arg4: memref<4x64x1xf32, #tpu.memory_space<vmem>>, %arg5: memref<9x256xf32, #tpu.memory_space<vmem>>, %arg6: memref<1x64x256xf32, #tpu.memory_space<vmem>>, %arg7: memref<576x256xf32, #tpu.memory_space<vmem>>) attributes {dimension_semantics = [#tpu.dimension_semantics<parallel>], iteration_bounds = array<i64: 2>, scalar_prefetch = 0 : i64, scratch_operands = 1 : i64, tpu.core_type = #tpu.core_type<tc>, window_params = [{transform_indices = @transform_0, window_bounds = array<i64: 1, 64, 256>}, {pipeline_mode = #tpu.pipeline_mode<synchronous>, transform_indices = @transform_1, window_bounds = array<i64: 64, 576>}, {pipeline_mode = #tpu.pipeline_mode<synchronous>, transform_indices = @transform_2, window_bounds = array<i64: 64, 576>}, {pipeline_mode = #tpu.pipeline_mode<synchronous>, transform_indices = @transform_3, window_bounds = array<i64: 4, 64, 1>}, {pipeline_mode = #tpu.pipeline_mode<synchronous>, transform_indices = @transform_4, window_bounds = array<i64: 9, 256>}, {transform_indices = @transform_5, window_bounds = array<i64: 1, 64, 256>}]} {
    %c0 = arith.constant 0 : index
    %c0_0 = arith.constant 0 : index
    %c0_1 = arith.constant 0 : index
    %0 = vector.load %arg1[%c0, %c0_0, %c0_1] : memref<1x64x256xf32, #tpu.memory_space<vmem>>, vector<1x64x256xf32>
    %1 = vector.shape_cast %0 : vector<1x64x256xf32> to vector<64x256xf32>
    %c17_i32 = arith.constant 17 : i32
    %2 = tpu.dynamic_rotate %1 by %c17_i32 dim 1 : vector<64x256xf32>, i32 -> vector<64x256xf32>
    %c0_2 = arith.constant 0 : index
    %c0_3 = arith.constant 0 : index
    %3 = vector.load %arg5[%c0_2, %c0_3] : memref<9x256xf32, #tpu.memory_space<vmem>>, vector<1x256xf32>
    %4 = vector.broadcast %3 : vector<1x256xf32> to vector<64x256xf32>
    %5 = arith.mulf %2, %4 : vector<64x256xf32>
    %c0_4 = arith.constant 0 : index
    %c0_5 = arith.constant 0 : index
    %6 = vector.load %arg7[%c0_4, %c0_5] : memref<576x256xf32, #tpu.memory_space<vmem>>, vector<64x256xf32>
    tpu.vector_store %arg7[%c0_4, %c0_5], %5 {strides = array<i32>} : memref<576x256xf32, #tpu.memory_space<vmem>>, vector<64x256xf32>,
    %c16_i32 = arith.constant 16 : i32
    %7 = tpu.dynamic_rotate %1 by %c16_i32 dim 1 : vector<64x256xf32>, i32 -> vector<64x256xf32>
    %c1 = arith.constant 1 : index
    %c0_6 = arith.constant 0 : index
    %8 = vector.load %arg5[%c1, %c0_6] : memref<9x256xf32, #tpu.memory_space<vmem>>, vector<1x256xf32>
    %9 = vector.broadcast %8 : vector<1x256xf32> to vector<64x256xf32>
    %10 = arith.mulf %7, %9 : vector<64x256xf32>
    %c64 = arith.constant 64 : index
    %c0_7 = arith.constant 0 : index
    %11 = vector.load %arg7[%c64, %c0_7] : memref<576x256xf32, #tpu.memory_space<vmem>>, vector<64x256xf32>
    tpu.vector_store %arg7[%c64, %c0_7], %10 {strides = array<i32>} : memref<576x256xf32, #tpu.memory_space<vmem>>, vector<64x256xf32>,
    %c15_i32 = arith.constant 15 : i32
    %12 = tpu.dynamic_rotate %1 by %c15_i32 dim 1 : vector<64x256xf32>, i32 -> vector<64x256xf32>
    %c2 = arith.constant 2 : index
    %c0_8 = arith.constant 0 : index
    %13 = vector.load %arg5[%c2, %c0_8] : memref<9x256xf32, #tpu.memory_space<vmem>>, vector<1x256xf32>
    %14 = vector.broadcast %13 : vector<1x256xf32> to vector<64x256xf32>
    %15 = arith.mulf %12, %14 : vector<64x256xf32>
    %c128 = arith.constant 128 : index
    %c0_9 = arith.constant 0 : index
    %16 = vector.load %arg7[%c128, %c0_9] : memref<576x256xf32, #tpu.memory_space<vmem>>, vector<64x256xf32>
    tpu.vector_store %arg7[%c128, %c0_9], %15 {strides = array<i32>} : memref<576x256xf32, #tpu.memory_space<vmem>>, vector<64x256xf32>,
    %c1_i32 = arith.constant 1 : i32
    %17 = tpu.dynamic_rotate %1 by %c1_i32 dim 1 : vector<64x256xf32>, i32 -> vector<64x256xf32>
    %c3 = arith.constant 3 : index
    %c0_10 = arith.constant 0 : index
    %18 = vector.load %arg5[%c3, %c0_10] : memref<9x256xf32, #tpu.memory_space<vmem>>, vector<1x256xf32>
    %19 = vector.broadcast %18 : vector<1x256xf32> to vector<64x256xf32>
    %20 = arith.mulf %17, %19 : vector<64x256xf32>
    %c192 = arith.constant 192 : index
    %c0_11 = arith.constant 0 : index
    %21 = vector.load %arg7[%c192, %c0_11] : memref<576x256xf32, #tpu.memory_space<vmem>>, vector<64x256xf32>
    tpu.vector_store %arg7[%c192, %c0_11], %20 {strides = array<i32>} : memref<576x256xf32, #tpu.memory_space<vmem>>, vector<64x256xf32>,
    %c256 = arith.constant 256 : index
    %c0_12 = arith.constant 0 : index
    %22 = vector.load %arg7[%c256, %c0_12] : memref<576x256xf32, #tpu.memory_space<vmem>>, vector<64x256xf32>
    tpu.vector_store %arg7[%c256, %c0_12], %1 {strides = array<i32>} : memref<576x256xf32, #tpu.memory_space<vmem>>, vector<64x256xf32>,
    %c255_i32 = arith.constant 255 : i32
    %23 = tpu.dynamic_rotate %1 by %c255_i32 dim 1 : vector<64x256xf32>, i32 -> vector<64x256xf32>
    %c5 = arith.constant 5 : index
    %c0_13 = arith.constant 0 : index
    %24 = vector.load %arg5[%c5, %c0_13] : memref<9x256xf32, #tpu.memory_space<vmem>>, vector<1x256xf32>
    %25 = vector.broadcast %24 : vector<1x256xf32> to vector<64x256xf32>
    %26 = arith.mulf %23, %25 : vector<64x256xf32>
    %c320 = arith.constant 320 : index
    %c0_14 = arith.constant 0 : index
    %27 = vector.load %arg7[%c320, %c0_14] : memref<576x256xf32, #tpu.memory_space<vmem>>, vector<64x256xf32>
    tpu.vector_store %arg7[%c320, %c0_14], %26 {strides = array<i32>} : memref<576x256xf32, #tpu.memory_space<vmem>>, vector<64x256xf32>,
    %c241_i32 = arith.constant 241 : i32
    %28 = tpu.dynamic_rotate %1 by %c241_i32 dim 1 : vector<64x256xf32>, i32 -> vector<64x256xf32>
    %c6 = arith.constant 6 : index
    %c0_15 = arith.constant 0 : index
    %29 = vector.load %arg5[%c6, %c0_15] : memref<9x256xf32, #tpu.memory_space<vmem>>, vector<1x256xf32>
    %30 = vector.broadcast %29 : vector<1x256xf32> to vector<64x256xf32>
    %31 = arith.mulf %28, %30 : vector<64x256xf32>
    %c384 = arith.constant 384 : index
    %c0_16 = arith.constant 0 : index
    %32 = vector.load %arg7[%c384, %c0_16] : memref<576x256xf32, #tpu.memory_space<vmem>>, vector<64x256xf32>
    tpu.vector_store %arg7[%c384, %c0_16], %31 {strides = array<i32>} : memref<576x256xf32, #tpu.memory_space<vmem>>, vector<64x256xf32>,
    %c240_i32 = arith.constant 240 : i32
    %33 = tpu.dynamic_rotate %1 by %c240_i32 dim 1 : vector<64x256xf32>, i32 -> vector<64x256xf32>
    %c7 = arith.constant 7 : index
    %c0_17 = arith.constant 0 : index
    %34 = vector.load %arg5[%c7, %c0_17] : memref<9x256xf32, #tpu.memory_space<vmem>>, vector<1x256xf32>
    %35 = vector.broadcast %34 : vector<1x256xf32> to vector<64x256xf32>
    %36 = arith.mulf %33, %35 : vector<64x256xf32>
    %c448 = arith.constant 448 : index
    %c0_18 = arith.constant 0 : index
    %37 = vector.load %arg7[%c448, %c0_18] : memref<576x256xf32, #tpu.memory_space<vmem>>, vector<64x256xf32>
    tpu.vector_store %arg7[%c448, %c0_18], %36 {strides = array<i32>} : memref<576x256xf32, #tpu.memory_space<vmem>>, vector<64x256xf32>,
    %c239_i32 = arith.constant 239 : i32
    %38 = tpu.dynamic_rotate %1 by %c239_i32 dim 1 : vector<64x256xf32>, i32 -> vector<64x256xf32>
    %c8 = arith.constant 8 : index
    %c0_19 = arith.constant 0 : index
    %39 = vector.load %arg5[%c8, %c0_19] : memref<9x256xf32, #tpu.memory_space<vmem>>, vector<1x256xf32>
    %40 = vector.broadcast %39 : vector<1x256xf32> to vector<64x256xf32>
    %41 = arith.mulf %38, %40 : vector<64x256xf32>
    %c512 = arith.constant 512 : index
    %c0_20 = arith.constant 0 : index
    %42 = vector.load %arg7[%c512, %c0_20] : memref<576x256xf32, #tpu.memory_space<vmem>>, vector<64x256xf32>
    tpu.vector_store %arg7[%c512, %c0_20], %41 {strides = array<i32>} : memref<576x256xf32, #tpu.memory_space<vmem>>, vector<64x256xf32>,
    %c0_21 = arith.constant 0 : index
    %c0_22 = arith.constant 0 : index
    %43 = vector.load %arg2[%c0_21, %c0_22] : memref<64x576xf32, #tpu.memory_space<vmem>>, vector<64x576xf32>
    %c0_23 = arith.constant 0 : index
    %c0_24 = arith.constant 0 : index
    %44 = vector.load %arg7[%c0_23, %c0_24] : memref<576x256xf32, #tpu.memory_space<vmem>>, vector<576x256xf32>
    %cst = arith.constant dense<0.000000e+00> : vector<64x256xf32>
    %45 = tpu.matmul %43, %44, %cst {dimension_numbers = #tpu.dot_dimension_numbers<[1], [0], [0], [1], [0, 0, 1, 1], [], []>} : vector<64x576xf32>, vector<576x256xf32>, vector<64x256xf32> -> vector<64x256xf32>
    %c0_25 = arith.constant 0 : index
    %c0_26 = arith.constant 0 : index
    %c0_27 = arith.constant 0 : index
    %46 = vector.load %arg4[%c0_25, %c0_26, %c0_27] : memref<4x64x1xf32, #tpu.memory_space<vmem>>, vector<1x64x1xf32>
    %47 = vector.shape_cast %46 : vector<1x64x1xf32> to vector<64x1xf32>
    %c1_28 = arith.constant 1 : index
    %c0_29 = arith.constant 0 : index
    %c0_30 = arith.constant 0 : index
    %48 = vector.load %arg4[%c1_28, %c0_29, %c0_30] : memref<4x64x1xf32, #tpu.memory_space<vmem>>, vector<1x64x1xf32>
    %49 = vector.shape_cast %48 : vector<1x64x1xf32> to vector<64x1xf32>
    %cst_31 = arith.constant dense<0.000000e+00> : vector<64xf32>
    %50 = vector.multi_reduction <add>, %45, %cst_31 [1] : vector<64x256xf32> to vector<64xf32>
    %51 = vector.shape_cast %50 : vector<64xf32> to vector<64x1xf32>
    %cst_32 = arith.constant 2.560000e+02 : f32
    %52 = vector.broadcast %cst_32 : f32 to vector<64x1xf32>
    %53 = arith.divf %51, %52 : vector<64x1xf32>
    %54 = vector.broadcast %53 : vector<64x1xf32> to vector<64x256xf32>
    %55 = arith.subf %45, %54 : vector<64x256xf32>
    %56 = arith.mulf %55, %55 : vector<64x256xf32>
    %cst_33 = arith.constant dense<0.000000e+00> : vector<64xf32>
    %57 = vector.multi_reduction <add>, %56, %cst_33 [1] : vector<64x256xf32> to vector<64xf32>
    %58 = vector.shape_cast %57 : vector<64xf32> to vector<64x1xf32>
    %cst_34 = arith.constant 2.560000e+02 : f32
    %59 = vector.broadcast %cst_34 : f32 to vector<64x1xf32>
    %60 = arith.divf %58, %59 : vector<64x1xf32>
    %61 = vector.broadcast %53 : vector<64x1xf32> to vector<64x256xf32>
    %62 = arith.subf %45, %61 : vector<64x256xf32>
    %cst_35 = arith.constant 9.99999974E-6 : f32
    %63 = vector.broadcast %cst_35 : f32 to vector<64x1xf32>
    %64 = arith.addf %60, %63 : vector<64x1xf32>
    %65 = math.rsqrt %64 : vector<64x1xf32>
    %66 = vector.broadcast %65 : vector<64x1xf32> to vector<64x256xf32>
    %67 = arith.mulf %62, %66 : vector<64x256xf32>
    %68 = vector.broadcast %47 : vector<64x1xf32> to vector<64x256xf32>
    %69 = arith.mulf %67, %68 : vector<64x256xf32>
    %70 = vector.broadcast %49 : vector<64x1xf32> to vector<64x256xf32>
    %71 = arith.addf %69, %70 : vector<64x256xf32>
    %cst_36 = arith.constant 0.000000e+00 : f32
    %72 = vector.broadcast %cst_36 : f32 to vector<64x256xf32>
    %73 = arith.maximumf %71, %72 : vector<64x256xf32>
    %c17_i32_37 = arith.constant 17 : i32
    %74 = tpu.dynamic_rotate %73 by %c17_i32_37 dim 1 : vector<64x256xf32>, i32 -> vector<64x256xf32>
    %c0_38 = arith.constant 0 : index
    %c0_39 = arith.constant 0 : index
    %75 = vector.load %arg5[%c0_38, %c0_39] : memref<9x256xf32, #tpu.memory_space<vmem>>, vector<1x256xf32>
    %76 = vector.broadcast %75 : vector<1x256xf32> to vector<64x256xf32>
    %77 = arith.mulf %74, %76 : vector<64x256xf32>
    %c0_40 = arith.constant 0 : index
    %c0_41 = arith.constant 0 : index
    %78 = vector.load %arg7[%c0_40, %c0_41] : memref<576x256xf32, #tpu.memory_space<vmem>>, vector<64x256xf32>
    tpu.vector_store %arg7[%c0_40, %c0_41], %77 {strides = array<i32>} : memref<576x256xf32, #tpu.memory_space<vmem>>, vector<64x256xf32>,
    %c16_i32_42 = arith.constant 16 : i32
    %79 = tpu.dynamic_rotate %73 by %c16_i32_42 dim 1 : vector<64x256xf32>, i32 -> vector<64x256xf32>
    %c1_43 = arith.constant 1 : index
    %c0_44 = arith.constant 0 : index
    %80 = vector.load %arg5[%c1_43, %c0_44] : memref<9x256xf32, #tpu.memory_space<vmem>>, vector<1x256xf32>
    %81 = vector.broadcast %80 : vector<1x256xf32> to vector<64x256xf32>
    %82 = arith.mulf %79, %81 : vector<64x256xf32>
    %c64_45 = arith.constant 64 : index
    %c0_46 = arith.constant 0 : index
    %83 = vector.load %arg7[%c64_45, %c0_46] : memref<576x256xf32, #tpu.memory_space<vmem>>, vector<64x256xf32>
    tpu.vector_store %arg7[%c64_45, %c0_46], %82 {strides = array<i32>} : memref<576x256xf32, #tpu.memory_space<vmem>>, vector<64x256xf32>,
    %c15_i32_47 = arith.constant 15 : i32
    %84 = tpu.dynamic_rotate %73 by %c15_i32_47 dim 1 : vector<64x256xf32>, i32 -> vector<64x256xf32>
    %c2_48 = arith.constant 2 : index
    %c0_49 = arith.constant 0 : index
    %85 = vector.load %arg5[%c2_48, %c0_49] : memref<9x256xf32, #tpu.memory_space<vmem>>, vector<1x256xf32>
    %86 = vector.broadcast %85 : vector<1x256xf32> to vector<64x256xf32>
    %87 = arith.mulf %84, %86 : vector<64x256xf32>
    %c128_50 = arith.constant 128 : index
    %c0_51 = arith.constant 0 : index
    %88 = vector.load %arg7[%c128_50, %c0_51] : memref<576x256xf32, #tpu.memory_space<vmem>>, vector<64x256xf32>
    tpu.vector_store %arg7[%c128_50, %c0_51], %87 {strides = array<i32>} : memref<576x256xf32, #tpu.memory_space<vmem>>, vector<64x256xf32>,
    %c1_i32_52 = arith.constant 1 : i32
    %89 = tpu.dynamic_rotate %73 by %c1_i32_52 dim 1 : vector<64x256xf32>, i32 -> vector<64x256xf32>
    %c3_53 = arith.constant 3 : index
    %c0_54 = arith.constant 0 : index
    %90 = vector.load %arg5[%c3_53, %c0_54] : memref<9x256xf32, #tpu.memory_space<vmem>>, vector<1x256xf32>
    %91 = vector.broadcast %90 : vector<1x256xf32> to vector<64x256xf32>
    %92 = arith.mulf %89, %91 : vector<64x256xf32>
    %c192_55 = arith.constant 192 : index
    %c0_56 = arith.constant 0 : index
    %93 = vector.load %arg7[%c192_55, %c0_56] : memref<576x256xf32, #tpu.memory_space<vmem>>, vector<64x256xf32>
    tpu.vector_store %arg7[%c192_55, %c0_56], %92 {strides = array<i32>} : memref<576x256xf32, #tpu.memory_space<vmem>>, vector<64x256xf32>,
    %c256_57 = arith.constant 256 : index
    %c0_58 = arith.constant 0 : index
    %94 = vector.load %arg7[%c256_57, %c0_58] : memref<576x256xf32, #tpu.memory_space<vmem>>, vector<64x256xf32>
    tpu.vector_store %arg7[%c256_57, %c0_58], %73 {strides = array<i32>} : memref<576x256xf32, #tpu.memory_space<vmem>>, vector<64x256xf32>,
    %c255_i32_59 = arith.constant 255 : i32
    %95 = tpu.dynamic_rotate %73 by %c255_i32_59 dim 1 : vector<64x256xf32>, i32 -> vector<64x256xf32>
    %c5_60 = arith.constant 5 : index
    %c0_61 = arith.constant 0 : index
    %96 = vector.load %arg5[%c5_60, %c0_61] : memref<9x256xf32, #tpu.memory_space<vmem>>, vector<1x256xf32>
    %97 = vector.broadcast %96 : vector<1x256xf32> to vector<64x256xf32>
    %98 = arith.mulf %95, %97 : vector<64x256xf32>
    %c320_62 = arith.constant 320 : index
    %c0_63 = arith.constant 0 : index
    %99 = vector.load %arg7[%c320_62, %c0_63] : memref<576x256xf32, #tpu.memory_space<vmem>>, vector<64x256xf32>
    tpu.vector_store %arg7[%c320_62, %c0_63], %98 {strides = array<i32>} : memref<576x256xf32, #tpu.memory_space<vmem>>, vector<64x256xf32>,
    %c241_i32_64 = arith.constant 241 : i32
    %100 = tpu.dynamic_rotate %73 by %c241_i32_64 dim 1 : vector<64x256xf32>, i32 -> vector<64x256xf32>
    %c6_65 = arith.constant 6 : index
    %c0_66 = arith.constant 0 : index
    %101 = vector.load %arg5[%c6_65, %c0_66] : memref<9x256xf32, #tpu.memory_space<vmem>>, vector<1x256xf32>
    %102 = vector.broadcast %101 : vector<1x256xf32> to vector<64x256xf32>
    %103 = arith.mulf %100, %102 : vector<64x256xf32>
    %c384_67 = arith.constant 384 : index
    %c0_68 = arith.constant 0 : index
    %104 = vector.load %arg7[%c384_67, %c0_68] : memref<576x256xf32, #tpu.memory_space<vmem>>, vector<64x256xf32>
    tpu.vector_store %arg7[%c384_67, %c0_68], %103 {strides = array<i32>} : memref<576x256xf32, #tpu.memory_space<vmem>>, vector<64x256xf32>,
    %c240_i32_69 = arith.constant 240 : i32
    %105 = tpu.dynamic_rotate %73 by %c240_i32_69 dim 1 : vector<64x256xf32>, i32 -> vector<64x256xf32>
    %c7_70 = arith.constant 7 : index
    %c0_71 = arith.constant 0 : index
    %106 = vector.load %arg5[%c7_70, %c0_71] : memref<9x256xf32, #tpu.memory_space<vmem>>, vector<1x256xf32>
    %107 = vector.broadcast %106 : vector<1x256xf32> to vector<64x256xf32>
    %108 = arith.mulf %105, %107 : vector<64x256xf32>
    %c448_72 = arith.constant 448 : index
    %c0_73 = arith.constant 0 : index
    %109 = vector.load %arg7[%c448_72, %c0_73] : memref<576x256xf32, #tpu.memory_space<vmem>>, vector<64x256xf32>
    tpu.vector_store %arg7[%c448_72, %c0_73], %108 {strides = array<i32>} : memref<576x256xf32, #tpu.memory_space<vmem>>, vector<64x256xf32>,
    %c239_i32_74 = arith.constant 239 : i32
    %110 = tpu.dynamic_rotate %73 by %c239_i32_74 dim 1 : vector<64x256xf32>, i32 -> vector<64x256xf32>
    %c8_75 = arith.constant 8 : index
    %c0_76 = arith.constant 0 : index
    %111 = vector.load %arg5[%c8_75, %c0_76] : memref<9x256xf32, #tpu.memory_space<vmem>>, vector<1x256xf32>
    %112 = vector.broadcast %111 : vector<1x256xf32> to vector<64x256xf32>
    %113 = arith.mulf %110, %112 : vector<64x256xf32>
    %c512_77 = arith.constant 512 : index
    %c0_78 = arith.constant 0 : index
    %114 = vector.load %arg7[%c512_77, %c0_78] : memref<576x256xf32, #tpu.memory_space<vmem>>, vector<64x256xf32>
    tpu.vector_store %arg7[%c512_77, %c0_78], %113 {strides = array<i32>} : memref<576x256xf32, #tpu.memory_space<vmem>>, vector<64x256xf32>,
    %c0_79 = arith.constant 0 : index
    %c0_80 = arith.constant 0 : index
    %115 = vector.load %arg3[%c0_79, %c0_80] : memref<64x576xf32, #tpu.memory_space<vmem>>, vector<64x576xf32>
    %c0_81 = arith.constant 0 : index
    %c0_82 = arith.constant 0 : index
    %116 = vector.load %arg7[%c0_81, %c0_82] : memref<576x256xf32, #tpu.memory_space<vmem>>, vector<576x256xf32>
    %cst_83 = arith.constant dense<0.000000e+00> : vector<64x256xf32>
    %117 = tpu.matmul %115, %116, %cst_83 {dimension_numbers = #tpu.dot_dimension_numbers<[1], [0], [0], [1], [0, 0, 1, 1], [], []>} : vector<64x576xf32>, vector<576x256xf32>, vector<64x256xf32> -> vector<64x256xf32>
    %c2_84 = arith.constant 2 : index
    %c0_85 = arith.constant 0 : index
    %c0_86 = arith.constant 0 : index
    %118 = vector.load %arg4[%c2_84, %c0_85, %c0_86] : memref<4x64x1xf32, #tpu.memory_space<vmem>>, vector<1x64x1xf32>
    %119 = vector.shape_cast %118 : vector<1x64x1xf32> to vector<64x1xf32>
    %c3_87 = arith.constant 3 : index
    %c0_88 = arith.constant 0 : index
    %c0_89 = arith.constant 0 : index
    %120 = vector.load %arg4[%c3_87, %c0_88, %c0_89] : memref<4x64x1xf32, #tpu.memory_space<vmem>>, vector<1x64x1xf32>
    %121 = vector.shape_cast %120 : vector<1x64x1xf32> to vector<64x1xf32>
    %cst_90 = arith.constant dense<0.000000e+00> : vector<64xf32>
    %122 = vector.multi_reduction <add>, %117, %cst_90 [1] : vector<64x256xf32> to vector<64xf32>
    %123 = vector.shape_cast %122 : vector<64xf32> to vector<64x1xf32>
    %cst_91 = arith.constant 2.560000e+02 : f32
    %124 = vector.broadcast %cst_91 : f32 to vector<64x1xf32>
    %125 = arith.divf %123, %124 : vector<64x1xf32>
    %126 = vector.broadcast %125 : vector<64x1xf32> to vector<64x256xf32>
    %127 = arith.subf %117, %126 : vector<64x256xf32>
    %128 = arith.mulf %127, %127 : vector<64x256xf32>
    %cst_92 = arith.constant dense<0.000000e+00> : vector<64xf32>
    %129 = vector.multi_reduction <add>, %128, %cst_92 [1] : vector<64x256xf32> to vector<64xf32>
    %130 = vector.shape_cast %129 : vector<64xf32> to vector<64x1xf32>
    %cst_93 = arith.constant 2.560000e+02 : f32
    %131 = vector.broadcast %cst_93 : f32 to vector<64x1xf32>
    %132 = arith.divf %130, %131 : vector<64x1xf32>
    %133 = vector.broadcast %125 : vector<64x1xf32> to vector<64x256xf32>
    %134 = arith.subf %117, %133 : vector<64x256xf32>
    %cst_94 = arith.constant 9.99999974E-6 : f32
    %135 = vector.broadcast %cst_94 : f32 to vector<64x1xf32>
    %136 = arith.addf %132, %135 : vector<64x1xf32>
    %137 = math.rsqrt %136 : vector<64x1xf32>
    %138 = vector.broadcast %137 : vector<64x1xf32> to vector<64x256xf32>
    %139 = arith.mulf %134, %138 : vector<64x256xf32>
    %140 = vector.broadcast %119 : vector<64x1xf32> to vector<64x256xf32>
    %141 = arith.mulf %139, %140 : vector<64x256xf32>
    %142 = vector.broadcast %121 : vector<64x1xf32> to vector<64x256xf32>
    %143 = arith.addf %141, %142 : vector<64x256xf32>
    %144 = arith.addf %1, %143 : vector<64x256xf32>
    %c0_95 = arith.constant 0 : index
    %c0_96 = arith.constant 0 : index
    %c0_97 = arith.constant 0 : index
    %145 = vector.load %arg6[%c0_95, %c0_96, %c0_97] : memref<1x64x256xf32, #tpu.memory_space<vmem>>, vector<1x64x256xf32>
    %146 = vector.shape_cast %145 : vector<1x64x256xf32> to vector<64x256xf32>
    %147 = vector.shape_cast %144 : vector<64x256xf32> to vector<1x64x256xf32>
    tpu.vector_store %arg6[%c0_95, %c0_96, %c0_97], %147 {strides = array<i32>} : memref<1x64x256xf32, #tpu.memory_space<vmem>>, vector<1x64x256xf32>,
    return
  }
  func.func @transform_0(%arg0: i32) -> (i32, i32, i32) {
    %c0_i32 = arith.constant 0 : i32
    %c0_i32_0 = arith.constant 0 : i32
    %c0_i32_1 = arith.constant 0 : i32
    return %arg0, %c0_i32, %c0_i32_0 : i32, i32, i32
  }
  func.func @transform_1(%arg0: i32) -> (i32, i32) {
    %c0_i32 = arith.constant 0 : i32
    %c0_i32_0 = arith.constant 0 : i32
    %c0_i32_1 = arith.constant 0 : i32
    return %c0_i32, %c0_i32_0 : i32, i32
  }
  func.func @transform_2(%arg0: i32) -> (i32, i32) {
    %c0_i32 = arith.constant 0 : i32
    %c0_i32_0 = arith.constant 0 : i32
    %c0_i32_1 = arith.constant 0 : i32
    return %c0_i32, %c0_i32_0 : i32, i32
  }
  func.func @transform_3(%arg0: i32) -> (i32, i32, i32) {
    %c0_i32 = arith.constant 0 : i32
    %c0_i32_0 = arith.constant 0 : i32
    %c0_i32_1 = arith.constant 0 : i32
    %c0_i32_2 = arith.constant 0 : i32
    return %c0_i32, %c0_i32_0, %c0_i32_1 : i32, i32, i32
  }
  func.func @transform_4(%arg0: i32) -> (i32, i32) {
    %c0_i32 = arith.constant 0 : i32
    %c0_i32_0 = arith.constant 0 : i32
    %c0_i32_1 = arith.constant 0 : i32
    return %c0_i32, %c0_i32_0 : i32, i32
  }
  func.func @transform_5(%arg0: i32) -> (i32, i32, i32) {
    %c0_i32 = arith.constant 0 : i32
    %c0_i32_0 = arith.constant 0 : i32
    %c0_i32_1 = arith.constant 0 : i32
    return %arg0, %c0_i32, %c0_i32_0 : i32, i32, i32
  }
}

</mosaic_0001>

<llo_original>
// kernel: residual_block.1
$region0: #{residual_block.1}
  #allocation0 [shape = 'u32[]', space=smem, size = 0x4, offset = 0x4, fixed_abs, tag = 'smem constant byte address 0x4 - core index']
  #allocation1 [shape = 'u32[144,128]{1,0:T(1,128)}', space=vmem, size = 0x12000, scoped, tag = 'internal scratch']
  #allocation2 [shape = 'f32[576,256]{1,0:T(8,128)}', space=vmem, size = 0x90000, scoped, tag = 'scratch operand']
  %s0 = inlined_call_operand.vmem [shape: f32[2,64,256], index: 0, kind: input, shape index: {}]
  %s1 = inlined_call_operand.vmem [shape: f32[64,576], index: 1, kind: input, shape index: {}]
  %s2 = inlined_call_operand.vmem [shape: f32[64,576], index: 2, kind: input, shape index: {}]
  %s3 = inlined_call_operand.vmem [shape: f32[4,64,1], index: 3, kind: input, shape index: {}]
  %s4 = inlined_call_operand.vmem [shape: f32[9,256], index: 4, kind: input, shape index: {}]
  %s5 = inlined_call_operand.vmem [shape: f32[2,64,256], index: 5, kind: output, shape index: {}]
  %s6 = sld [smem:[#allocation0]]
  $region53: #{residual_block.1} parent=0
    _
  %s8 = ssub.s32 1, %s6
  %s9 = scalar_select 0, %s8, %s6
  loop: start=0, step=1, limit=4
  $region2: #{residual_block.1} parent=0 // loop_pre_header
    _
  $region3: #{residual_block.1} parent=0 // loop_header
    %s11 = sphi 0, %s15
    %p12 = scmp.ge.s32.totalorder %s11, 4
    %s21 = sphi 0, %s23
    %s24 = sphi 0, %s21
    %s25 = sphi 0, %s24
    %s41 = sphi 0, %s25
    %s45 = sphi 0, %s45
    %s47 = sphi 0, %s45
    %s48 = sphi 0, %s47
    %s62 = sphi 0, %s48
    %s66 = sphi 0, %s66
    %s68 = sphi 0, %s66
    %s69 = sphi 0, %s68
    %s83 = sphi 0, %s69
    %s87 = sphi 0, %s87
    %s89 = sphi 0, %s87
    %s90 = sphi 0, %s89
    %s104 = sphi 0, %s90
    %s108 = sphi 0, %s108
    %s110 = sphi 0, %s108
    %s111 = sphi 0, %s110
    %s125 = sphi 0, %s111
    %s131 = sphi 0, %s133
    %s134 = sphi 0, %s131
    %s135 = sphi 0, %s134
    %s151 = sphi 0, %s135
  $region4: #{residual_block.1} parent=0 // loop_header_branch
    %14 = sbr.rel (%p12) target = $region8
  $region5: #{residual_block.1} parent=0 // loop_body
    %s16 = ssub.s32 %s11, 1
    %s17 = ssub.s32 %s11, 2
    %s18 = sadd.s32 %s11, 1
    %s19 = ssub.s32 %s11, %s18
    %p20 = scmp.eq.s32.totalorder %s19, 0
    %s22 = sadd.s32 %s21, 1
    %s23 = scalar_select %p20, %s21, %s22
    %p26 = pneg %p20
    %p27 = scmp.eq.s32.totalorder %s11, 1
    %p28 = por %p26, %p27
    %p29 = scmp.ne.s32.totalorder %s21, %s24
    %p30 = scmp.eq.s32.totalorder %s11, 0
    %p31 = por %p29, %p30
    %p32 = scmp.ne.s32.totalorder %s21, %s24
    %p33 = scmp.eq.s32.totalorder %s16, 1
    %p34 = por %p32, %p33
    %p35 = scmp.ne.s32.totalorder %s24, %s25
    %p36 = scmp.eq.s32.totalorder %s16, 0
    %p37 = por %p35, %p36
    %p38 = scmp.ne.s32.totalorder %s24, %s25
    %p39 = scmp.eq.s32.totalorder %s17, 1
    %p40 = por %p38, %p39
    %p42 = scmp.ne.s32.totalorder %s25, %s41
    %p43 = scmp.eq.s32.totalorder %s17, 0
    %p44 = por %p42, %p43
    %s46 = sadd.s32 %s45, 1
    %p49 = scmp.eq.s32.totalorder %s11, 1
    %p50 = scmp.ne.s32.totalorder %s45, %s47
    %p51 = scmp.eq.s32.totalorder %s11, 0
    %p52 = por %p50, %p51
    %p53 = scmp.ne.s32.totalorder %s45, %s47
    %p54 = scmp.eq.s32.totalorder %s16, 1
    %p55 = por %p53, %p54
    %p56 = scmp.ne.s32.totalorder %s47, %s48
    %p57 = scmp.eq.s32.totalorder %s16, 0
    %p58 = por %p56, %p57
    %p59 = scmp.ne.s32.totalorder %s47, %s48
    %p60 = scmp.eq.s32.totalorder %s17, 1
    %p61 = por %p59, %p60
    %p63 = scmp.ne.s32.totalorder %s48, %s62
    %p64 = scmp.eq.s32.totalorder %s17, 0
    %p65 = por %p63, %p64
    %s67 = sadd.s32 %s66, 1
    %p70 = scmp.eq.s32.totalorder %s11, 1
    %p71 = scmp.ne.s32.totalorder %s66, %s68
    %p72 = scmp.eq.s32.totalorder %s11, 0
    %p73 = por %p71, %p72
    %p74 = scmp.ne.s32.totalorder %s66, %s68
    %p75 = scmp.eq.s32.totalorder %s16, 1
    %p76 = por %p74, %p75
    %p77 = scmp.ne.s32.totalorder %s68, %s69
    %p78 = scmp.eq.s32.totalorder %s16, 0
    %p79 = por %p77, %p78
    %p80 = scmp.ne.s32.totalorder %s68, %s69
    %p81 = scmp.eq.s32.totalorder %s17, 1
    %p82 = por %p80, %p81
    %p84 = scmp.ne.s32.totalorder %s69, %s83
    %p85 = scmp.eq.s32.totalorder %s17, 0
    %p86 = por %p84, %p85
    %s88 = sadd.s32 %s87, 1
    %p91 = scmp.eq.s32.totalorder %s11, 1
    %p92 = scmp.ne.s32.totalorder %s87, %s89
    %p93 = scmp.eq.s32.totalorder %s11, 0
    %p94 = por %p92, %p93
    %p95 = scmp.ne.s32.totalorder %s87, %s89
    %p96 = scmp.eq.s32.totalorder %s16, 1
    %p97 = por %p95, %p96
    %p98 = scmp.ne.s32.totalorder %s89, %s90
    %p99 = scmp.eq.s32.totalorder %s16, 0
    %p100 = por %p98, %p99
    %p101 = scmp.ne.s32.totalorder %s89, %s90
    %p102 = scmp.eq.s32.totalorder %s17, 1
    %p103 = por %p101, %p102
    %p105 = scmp.ne.s32.totalorder %s90, %s104
    %p106 = scmp.eq.s32.totalorder %s17, 0
    %p107 = por %p105, %p106
    %s109 = sadd.s32 %s108, 1
    %p112 = scmp.eq.s32.totalorder %s11, 1
    %p113 = scmp.ne.s32.totalorder %s108, %s110
    %p114 = scmp.eq.s32.totalorder %s11, 0
    %p115 = por %p113, %p114
    %p116 = scmp.ne.s32.totalorder %s108, %s110
    %p117 = scmp.eq.s32.totalorder %s16, 1
    %p118 = por %p116, %p117
    %p119 = scmp.ne.s32.totalorder %s110, %s111
    %p120 = scmp.eq.s32.totalorder %s16, 0
    %p121 = por %p119, %p120
    %p122 = scmp.ne.s32.totalorder %s110, %s111
    %p123 = scmp.eq.s32.totalorder %s17, 1
    %p124 = por %p122, %p123
    %p126 = scmp.ne.s32.totalorder %s111, %s125
    %p127 = scmp.eq.s32.totalorder %s17, 0
    %p128 = por %p126, %p127
    %s129 = ssub.s32 %s11, %s18
    %p130 = scmp.eq.s32.totalorder %s129, 0
    %s132 = sadd.s32 %s131, 1
    %s133 = scalar_select %p130, %s131, %s132
    %p136 = pneg %p130
    %p137 = scmp.eq.s32.totalorder %s11, 1
    %p138 = por %p136, %p137
    %p139 = scmp.ne.s32.totalorder %s131, %s134
    %p140 = scmp.eq.s32.totalorder %s11, 0
    %p141 = por %p139, %p140
    %p142 = scmp.ne.s32.totalorder %s131, %s134
    %p143 = scmp.eq.s32.totalorder %s16, 1
    %p144 = por %p142, %p143
    %p145 = scmp.ne.s32.totalorder %s134, %s135
    %p146 = scmp.eq.s32.totalorder %s16, 0
    %p147 = por %p145, %p146
    %p148 = scmp.ne.s32.totalorder %s134, %s135
    %p149 = scmp.eq.s32.totalorder %s17, 1
    %p150 = por %p148, %p149
    %p152 = scmp.ne.s32.totalorder %s135, %s151
    %p153 = scmp.eq.s32.totalorder %s17, 0
    %p154 = por %p152, %p153
    %p155 = scmp.le.s32.totalorder 1, %s11
    %p156 = scmp.lt.s32.totalorder %s11, 3
    %p157 = pnand %p155, %p156
    %p158 = pneg %p157
    // Predicated region
    $region9: #{residual_block.1} parent=5 // pred_check
      _
    $region10: #{residual_block.1} parent=5 // pred_check_branch
      %160 = sbr.rel (%p157) target = $region12
    $region11: #{residual_block.1} parent=5 // pred_region
      %s161 = ssub.s32 %s11, 1
      // Predicated region
      $region13: #{residual_block.1} parent=11 // pred_check
        %p162 = pneg %p58
      $region14: #{residual_block.1} parent=11 // pred_check_branch
        %164 = sbr.rel (%p162) target = $region16
      $region15: #{residual_block.1} parent=11 // pred_region
        _
      $region16: #{residual_block.1} parent=11 // pred_fallthru
        _
      // Predicated region
      $region17: #{residual_block.1} parent=11 // pred_check
        %p165 = pneg %p79
      $region18: #{residual_block.1} parent=11 // pred_check_branch
        %167 = sbr.rel (%p165) target = $region20
      $region19: #{residual_block.1} parent=11 // pred_region
        _
      $region20: #{residual_block.1} parent=11 // pred_fallthru
        _
      // Predicated region
      $region21: #{residual_block.1} parent=11 // pred_check
        %p168 = pneg %p100
      $region22: #{residual_block.1} parent=11 // pred_check_branch
        %170 = sbr.rel (%p168) target = $region24
      $region23: #{residual_block.1} parent=11 // pred_region
        _
      $region24: #{residual_block.1} parent=11 // pred_fallthru
        _
      // Predicated region
      $region25: #{residual_block.1} parent=11 // pred_check
        %p171 = pneg %p121
      $region26: #{residual_block.1} parent=11 // pred_check_branch
        %173 = sbr.rel (%p171) target = $region28
      $region27: #{residual_block.1} parent=11 // pred_region
        _
      $region28: #{residual_block.1} parent=11 // pred_fallthru
        _
    $region12: #{residual_block.1} parent=5 // pred_fallthru
      _
    %p174 = scmp.lt.s32.totalorder %s11, 2
    // Predicated region
    $region29: #{residual_block.1} parent=5 // pred_check
      %p175 = pneg %p174
    $region30: #{residual_block.1} parent=5 // pred_check_branch
      %177 = sbr.rel (%p175) target = $region32
    $region31: #{residual_block.1} parent=5 // pred_region
      // Predicated region
      $region33: #{residual_block.1} parent=31 // pred_check
        %p178 = pneg %p31
      $region34: #{residual_block.1} parent=31 // pred_check_branch
        %180 = sbr.rel (%p178) target = $region36
      $region35: #{residual_block.1} parent=31 // pred_region
        %p181 = scmp.lt.s32.totalorder %s11, 1
        %s182 = scalar_select %p181, %s11, 1
        %s183 = smul.addr %s182, 16
        %s184 = smul.addr %s183, 8
        %s185 = scalar_lea.vmem %s0, %s184
      $region36: #{residual_block.1} parent=31 // pred_fallthru
        _
    $region32: #{residual_block.1} parent=5 // pred_fallthru
      _
    %p186 = scmp.le.s32.totalorder 1, %s11
    %p187 = scmp.lt.s32.totalorder %s11, 3
    %p188 = pnand %p186, %p187
    %p189 = pneg %p188
    // Predicated region
    $region37: #{residual_block.1} parent=5 // pred_check
      _
    $region38: #{residual_block.1} parent=5 // pred_check_branch
      %191 = sbr.rel (%p188) target = $region40
    $region39: #{residual_block.1} parent=5 // pred_region
      %s192 = ssub.s32 %s11, 1
      %p193 = scmp.lt.s32.totalorder %s16, 1
      %s194 = scalar_select %p193, %s16, 1
      %s195 = smul.addr %s194, 16
      %s196 = smul.addr %s195, 8
      %s197 = scalar_lea.vmem %s0, %s196
      %p198 = pneg %p37
      %p199 = pneg %p34
      %p200 = pneg %p58
      %p201 = pneg %p55
      %p202 = pneg %p79
      %p203 = pneg %p76
      %p204 = pneg %p100
      %p205 = pneg %p97
      %p206 = pneg %p121
      %p207 = pneg %p118
      %p208 = pneg %p147
      %p209 = pneg %p144
      %p210 = scmp.lt.s32.totalorder %s16, 1
      %s211 = scalar_select %p210, %s16, 1
      %s212 = smul.addr %s211, 16
      %s213 = smul.addr %s212, 8
      %s214 = scalar_lea.vmem %s5, %s213
      %p215 = scmp.lt.s32.totalorder %s16, 1
      %s216 = scalar_select %p215, %s16, 1
      %s217 = smul.addr %s216, 16
      %s218 = smul.addr %s217, 8
      %s219 = scalar_lea.vmem %s0, %s218
      %p220 = scmp.lt.s32.totalorder %s16, 1
      %s221 = scalar_select %p220, %s16, 1
      %s222 = smul.addr %s221, 16
      %s223 = smul.addr %s222, 8
      %s224 = scalar_lea.vmem %s5, %s223
      %v225 = vld [vmem:[%s219] sm:$0xff]
      %v226 = vld [vmem:[%s219 + $0x8] sm:$0xff]
      %v227 = vld [vmem:[%s219 + $0x10] sm:$0xff]
      %v228 = vld [vmem:[%s219 + $0x18] sm:$0xff]
      %v229 = vld [vmem:[%s219 + $0x20] sm:$0xff]
      %v230 = vld [vmem:[%s219 + $0x28] sm:$0xff]
      %v231 = vld [vmem:[%s219 + $0x30] sm:$0xff]
      %v232 = vld [vmem:[%s219 + $0x38] sm:$0xff]
      %v233 = vld [vmem:[%s219 + $0x40] sm:$0xff]
      %v234 = vld [vmem:[%s219 + $0x48] sm:$0xff]
      %v235 = vld [vmem:[%s219 + $0x50] sm:$0xff]
      %v236 = vld [vmem:[%s219 + $0x58] sm:$0xff]
      %v237 = vld [vmem:[%s219 + $0x60] sm:$0xff]
      %v238 = vld [vmem:[%s219 + $0x68] sm:$0xff]
      %v239 = vld [vmem:[%s219 + $0x70] sm:$0xff]
      %v240 = vld [vmem:[%s219 + $0x78] sm:$0xff]
      %241 = vrot.lane.b32.xlu0 %v225, 17
      %v242 = vpop.permute.xlu0 %241
      %243 = vrot.lane.b32.xlu0 %v227, 17
      %v244 = vpop.permute.xlu0 %243
      %245 = vrot.lane.b32.xlu0 %v229, 17
      %v246 = vpop.permute.xlu0 %245
      %247 = vrot.lane.b32.xlu0 %v231, 17
      %v248 = vpop.permute.xlu0 %247
      %249 = vrot.lane.b32.xlu0 %v233, 17
      %v250 = vpop.permute.xlu0 %249
      %251 = vrot.lane.b32.xlu0 %v235, 17
      %v252 = vpop.permute.xlu0 %251
      %253 = vrot.lane.b32.xlu0 %v237, 17
      %v254 = vpop.permute.xlu0 %253
      %255 = vrot.lane.b32.xlu0 %v239, 17
      %v256 = vpop.permute.xlu0 %255
      %257 = vrot.lane.b32.xlu0 %v226, 17
      %v258 = vpop.permute.xlu0 %257
      %259 = vrot.lane.b32.xlu0 %v228, 17
      %v260 = vpop.permute.xlu0 %259
      %261 = vrot.lane.b32.xlu0 %v230, 17
      %v262 = vpop.permute.xlu0 %261
      %263 = vrot.lane.b32.xlu0 %v232, 17
      %v264 = vpop.permute.xlu0 %263
      %265 = vrot.lane.b32.xlu0 %v234, 17
      %v266 = vpop.permute.xlu0 %265
      %267 = vrot.lane.b32.xlu0 %v236, 17
      %v268 = vpop.permute.xlu0 %267
      %269 = vrot.lane.b32.xlu0 %v238, 17
      %v270 = vpop.permute.xlu0 %269
      %271 = vrot.lane.b32.xlu0 %v240, 17
      %v272 = vpop.permute.xlu0 %271
      %v273 = vlaneseq
      %v274 = vand.u32 %v273, 127
      %vm275 = vcmp.lt.s32.totalorder %v274, 17
      %v276 = vsel %vm275, %v242, %v258
      %v277 = vsel %vm275, %v244, %v260
      %v278 = vsel %vm275, %v246, %v262
      %v279 = vsel %vm275, %v248, %v264
      %v280 = vsel %vm275, %v250, %v266
      %v281 = vsel %vm275, %v252, %v268
      %v282 = vsel %vm275, %v254, %v270
      %v283 = vsel %vm275, %v256, %v272
      %v284 = vsel %vm275, %v258, %v242
      %v285 = vsel %vm275, %v260, %v244
      %v286 = vsel %vm275, %v262, %v246
      %v287 = vsel %vm275, %v264, %v248
      %v288 = vsel %vm275, %v266, %v250
      %v289 = vsel %vm275, %v268, %v252
      %v290 = vsel %vm275, %v270, %v254
      %v291 = vsel %vm275, %v272, %v256
      %v292 = vld [vmem:[%s4] ss:$8 sm:$0x3]
      %v294 = vlaneseq
      %v295 = vshrl.u32 %v294, 7
      %v296 = vsub.s32 0, %v295
      %v297 = vrot.slane %v292, %v296
      %v298 = vlaneseq
      %v299 = vshrl.u32 %v298, 7
      %v300 = vsub.s32 1, %v299
      %v301 = vrot.slane %v292, %v300
      %v304 = vmul.f32 %v284, %v297
      %v305 = vmul.f32 %v276, %v301
      %v306 = vmul.f32 %v285, %v297
      %v307 = vmul.f32 %v277, %v301
      %v308 = vmul.f32 %v286, %v297
      %v309 = vmul.f32 %v278, %v301
      %v310 = vmul.f32 %v287, %v297
      %v311 = vmul.f32 %v279, %v301
      %v312 = vmul.f32 %v288, %v297
      %v313 = vmul.f32 %v280, %v301
      %v314 = vmul.f32 %v289, %v297
      %v315 = vmul.f32 %v281, %v301
      %v316 = vmul.f32 %v290, %v297
      %v317 = vmul.f32 %v282, %v301
      %v318 = vmul.f32 %v291, %v297
      %v319 = vmul.f32 %v283, %v301
      %320 = vst [vmem:[#allocation2] sm:$0xff] %v304
      %321 = vst [vmem:[#allocation2 + $0x8] sm:$0xff] %v305
      %322 = vst [vmem:[#allocation2 + $0x10] sm:$0xff] %v306
      %323 = vst [vmem:[#allocation2 + $0x18] sm:$0xff] %v307
      %324 = vst [vmem:[#allocation2 + $0x20] sm:$0xff] %v308
      %325 = vst [vmem:[#allocation2 + $0x28] sm:$0xff] %v309
      %326 = vst [vmem:[#allocation2 + $0x30] sm:$0xff] %v310
      %327 = vst [vmem:[#allocation2 + $0x38] sm:$0xff] %v311
      %328 = vst [vmem:[#allocation2 + $0x40] sm:$0xff] %v312
      %329 = vst [vmem:[#allocation2 + $0x48] sm:$0xff] %v313
      %330 = vst [vmem:[#allocation2 + $0x50] sm:$0xff] %v314
      %331 = vst [vmem:[#allocation2 + $0x58] sm:$0xff] %v315
      %332 = vst [vmem:[#allocation2 + $0x60] sm:$0xff] %v316
      %333 = vst [vmem:[#allocation2 + $0x68] sm:$0xff] %v317
      %334 = vst [vmem:[#allocation2 + $0x70] sm:$0xff] %v318
      %335 = vst [vmem:[#allocation2 + $0x78] sm:$0xff] %v319
      %336 = vrot.lane.b32.xlu0 %v225, 16
      %v337 = vpop.permute.xlu0 %336
      %338 = vrot.lane.b32.xlu0 %v227, 16
      %v339 = vpop.permute.xlu0 %338
      %340 = vrot.lane.b32.xlu0 %v229, 16
      %v341 = vpop.permute.xlu0 %340
      %342 = vrot.lane.b32.xlu0 %v231, 16
      %v343 = vpop.permute.xlu0 %342
      %344 = vrot.lane.b32.xlu0 %v233, 16
      %v345 = vpop.permute.xlu0 %344
      %346 = vrot.lane.b32.xlu0 %v235, 16
      %v347 = vpop.permute.xlu0 %346
      %348 = vrot.lane.b32.xlu0 %v237, 16
      %v349 = vpop.permute.xlu0 %348
      %350 = vrot.lane.b32.xlu0 %v239, 16
      %v351 = vpop.permute.xlu0 %350
      %352 = vrot.lane.b32.xlu0 %v226, 16
      %v353 = vpop.permute.xlu0 %352
      %354 = vrot.lane.b32.xlu0 %v228, 16
      %v355 = vpop.permute.xlu0 %354
      %356 = vrot.lane.b32.xlu0 %v230, 16
      %v357 = vpop.permute.xlu0 %356
      %358 = vrot.lane.b32.xlu0 %v232, 16
      %v359 = vpop.permute.xlu0 %358
      %360 = vrot.lane.b32.xlu0 %v234, 16
      %v361 = vpop.permute.xlu0 %360
      %362 = vrot.lane.b32.xlu0 %v236, 16
      %v363 = vpop.permute.xlu0 %362
      %364 = vrot.lane.b32.xlu0 %v238, 16
      %v365 = vpop.permute.xlu0 %364
      %366 = vrot.lane.b32.xlu0 %v240, 16
      %v367 = vpop.permute.xlu0 %366
      %vm368 = vcmp.lt.s32.totalorder %v274, 16
      %v369 = vsel %vm368, %v337, %v353
      %v370 = vsel %vm368, %v339, %v355
      %v371 = vsel %vm368, %v341, %v357
      %v372 = vsel %vm368, %v343, %v359
      %v373 = vsel %vm368, %v345, %v361
      %v374 = vsel %vm368, %v347, %v363
      %v375 = vsel %vm368, %v349, %v365
      %v376 = vsel %vm368, %v351, %v367
      %v377 = vsel %vm368, %v353, %v337
      %v378 = vsel %vm368, %v355, %v339
      %v379 = vsel %vm368, %v357, %v341
      %v380 = vsel %vm368, %v359, %v343
      %v381 = vsel %vm368, %v361, %v345
      %v382 = vsel %vm368, %v363, %v347
      %v383 = vsel %vm368, %v365, %v349
      %v384 = vsel %vm368, %v367, %v351
      %s385 = scalar_lea.vmem %s4, 1
      %v386 = vld [vmem:[%s385] ss:$8 sm:$0x3]
      %v388 = vlaneseq
      %v389 = vshrl.u32 %v388, 7
      %v390 = vsub.s32 0, %v389
      %v391 = vrot.slane %v386, %v390
      %v392 = vlaneseq
      %v393 = vshrl.u32 %v392, 7
      %v394 = vsub.s32 1, %v393
      %v395 = vrot.slane %v386, %v394
      %v398 = vmul.f32 %v377, %v391
      %v399 = vmul.f32 %v369, %v395
      %v400 = vmul.f32 %v378, %v391
      %v401 = vmul.f32 %v370, %v395
      %v402 = vmul.f32 %v379, %v391
      %v403 = vmul.f32 %v371, %v395
      %v404 = vmul.f32 %v380, %v391
      %v405 = vmul.f32 %v372, %v395
      %v406 = vmul.f32 %v381, %v391
      %v407 = vmul.f32 %v373, %v395
      %v408 = vmul.f32 %v382, %v391
      %v409 = vmul.f32 %v374, %v395
      %v410 = vmul.f32 %v383, %v391
      %v411 = vmul.f32 %v375, %v395
      %v412 = vmul.f32 %v384, %v391
      %v413 = vmul.f32 %v376, %v395
      %414 = vst [vmem:[#allocation2 + $0x80] sm:$0xff] %v398
      %415 = vst [vmem:[#allocation2 + $0x88] sm:$0xff] %v399
      %416 = vst [vmem:[#allocation2 + $0x90] sm:$0xff] %v400
      %417 = vst [vmem:[#allocation2 + $0x98] sm:$0xff] %v401
      %418 = vst [vmem:[#allocation2 + $0xa0] sm:$0xff] %v402
      %419 = vst [vmem:[#allocation2 + $0xa8] sm:$0xff] %v403
      %420 = vst [vmem:[#allocation2 + $0xb0] sm:$0xff] %v404
      %421 = vst [vmem:[#allocation2 + $0xb8] sm:$0xff] %v405
      %422 = vst [vmem:[#allocation2 + $0xc0] sm:$0xff] %v406
      %423 = vst [vmem:[#allocation2 + $0xc8] sm:$0xff] %v407
      %424 = vst [vmem:[#allocation2 + $0xd0] sm:$0xff] %v408
      %425 = vst [vmem:[#allocation2 + $0xd8] sm:$0xff] %v409
      %426 = vst [vmem:[#allocation2 + $0xe0] sm:$0xff] %v410
      %427 = vst [vmem:[#allocation2 + $0xe8] sm:$0xff] %v411
      %428 = vst [vmem:[#allocation2 + $0xf0] sm:$0xff] %v412
      %429 = vst [vmem:[#allocation2 + $0xf8] sm:$0xff] %v413
      %430 = vrot.lane.b32.xlu0 %v225, 15
      %v431 = vpop.permute.xlu0 %430
      %432 = vrot.lane.b32.xlu0 %v227, 15
      %v433 = vpop.permute.xlu0 %432
      %434 = vrot.lane.b32.xlu0 %v229, 15
      %v435 = vpop.permute.xlu0 %434
      %436 = vrot.lane.b32.xlu0 %v231, 15
      %v437 = vpop.permute.xlu0 %436
      %438 = vrot.lane.b32.xlu0 %v233, 15
      %v439 = vpop.permute.xlu0 %438
      %440 = vrot.lane.b32.xlu0 %v235, 15
      %v441 = vpop.permute.xlu0 %440
      %442 = vrot.lane.b32.xlu0 %v237, 15
      %v443 = vpop.permute.xlu0 %442
      %444 = vrot.lane.b32.xlu0 %v239, 15
      %v445 = vpop.permute.xlu0 %444
      %446 = vrot.lane.b32.xlu0 %v226, 15
      %v447 = vpop.permute.xlu0 %446
      %448 = vrot.lane.b32.xlu0 %v228, 15
      %v449 = vpop.permute.xlu0 %448
      %450 = vrot.lane.b32.xlu0 %v230, 15
      %v451 = vpop.permute.xlu0 %450
      %452 = vrot.lane.b32.xlu0 %v232, 15
      %v453 = vpop.permute.xlu0 %452
      %454 = vrot.lane.b32.xlu0 %v234, 15
      %v455 = vpop.permute.xlu0 %454
      %456 = vrot.lane.b32.xlu0 %v236, 15
      %v457 = vpop.permute.xlu0 %456
      %458 = vrot.lane.b32.xlu0 %v238, 15
      %v459 = vpop.permute.xlu0 %458
      %460 = vrot.lane.b32.xlu0 %v240, 15
      %v461 = vpop.permute.xlu0 %460
      %vm462 = vcmp.lt.s32.totalorder %v274, 15
      %v463 = vsel %vm462, %v431, %v447
      %v464 = vsel %vm462, %v433, %v449
      %v465 = vsel %vm462, %v435, %v451
      %v466 = vsel %vm462, %v437, %v453
      %v467 = vsel %vm462, %v439, %v455
      %v468 = vsel %vm462, %v441, %v457
      %v469 = vsel %vm462, %v443, %v459
      %v470 = vsel %vm462, %v445, %v461
      %v471 = vsel %vm462, %v447, %v431
      %v472 = vsel %vm462, %v449, %v433
      %v473 = vsel %vm462, %v451, %v435
      %v474 = vsel %vm462, %v453, %v437
      %v475 = vsel %vm462, %v455, %v439
      %v476 = vsel %vm462, %v457, %v441
      %v477 = vsel %vm462, %v459, %v443
      %v478 = vsel %vm462, %v461, %v445
      %s479 = scalar_lea.vmem %s4, 2
      %v480 = vld [vmem:[%s479] ss:$8 sm:$0x3]
      %v482 = vlaneseq
      %v483 = vshrl.u32 %v482, 7
      %v484 = vsub.s32 0, %v483
      %v485 = vrot.slane %v480, %v484
      %v486 = vlaneseq
      %v487 = vshrl.u32 %v486, 7
      %v488 = vsub.s32 1, %v487
      %v489 = vrot.slane %v480, %v488
      %v492 = vmul.f32 %v471, %v485
      %v493 = vmul.f32 %v463, %v489
      %v494 = vmul.f32 %v472, %v485
      %v495 = vmul.f32 %v464, %v489
      %v496 = vmul.f32 %v473, %v485
      %v497 = vmul.f32 %v465, %v489
      %v498 = vmul.f32 %v474, %v485
      %v499 = vmul.f32 %v466, %v489
      %v500 = vmul.f32 %v475, %v485
      %v501 = vmul.f32 %v467, %v489
      %v502 = vmul.f32 %v476, %v485
      %v503 = vmul.f32 %v468, %v489
      %v504 = vmul.f32 %v477, %v485
      %v505 = vmul.f32 %v469, %v489
      %v506 = vmul.f32 %v478, %v485
      %v507 = vmul.f32 %v470, %v489
      %508 = vst [vmem:[#allocation2 + $0x100] sm:$0xff] %v492
      %509 = vst [vmem:[#allocation2 + $0x108] sm:$0xff] %v493
      %510 = vst [vmem:[#allocation2 + $0x110] sm:$0xff] %v494
      %511 = vst [vmem:[#allocation2 + $0x118] sm:$0xff] %v495
      %512 = vst [vmem:[#allocation2 + $0x120] sm:$0xff] %v496
      %513 = vst [vmem:[#allocation2 + $0x128] sm:$0xff] %v497
      %514 = vst [vmem:[#allocation2 + $0x130] sm:$0xff] %v498
      %515 = vst [vmem:[#allocation2 + $0x138] sm:$0xff] %v499
      %516 = vst [vmem:[#allocation2 + $0x140] sm:$0xff] %v500
      %517 = vst [vmem:[#allocation2 + $0x148] sm:$0xff] %v501
      %518 = vst [vmem:[#allocation2 + $0x150] sm:$0xff] %v502
      %519 = vst [vmem:[#allocation2 + $0x158] sm:$0xff] %v503
      %520 = vst [vmem:[#allocation2 + $0x160] sm:$0xff] %v504
      %521 = vst [vmem:[#allocation2 + $0x168] sm:$0xff] %v505
      %522 = vst [vmem:[#allocation2 + $0x170] sm:$0xff] %v506
      %523 = vst [vmem:[#allocation2 + $0x178] sm:$0xff] %v507
      %524 = vrot.lane.b32.xlu0 %v225, 1
      %v525 = vpop.permute.xlu0 %524
      %526 = vrot.lane.b32.xlu0 %v227, 1
      %v527 = vpop.permute.xlu0 %526
      %528 = vrot.lane.b32.xlu0 %v229, 1
      %v529 = vpop.permute.xlu0 %528
      %530 = vrot.lane.b32.xlu0 %v231, 1
      %v531 = vpop.permute.xlu0 %530
      %532 = vrot.lane.b32.xlu0 %v233, 1
      %v533 = vpop.permute.xlu0 %532
      %534 = vrot.lane.b32.xlu0 %v235, 1
      %v535 = vpop.permute.xlu0 %534
      %536 = vrot.lane.b32.xlu0 %v237, 1
      %v537 = vpop.permute.xlu0 %536
      %538 = vrot.lane.b32.xlu0 %v239, 1
      %v539 = vpop.permute.xlu0 %538
      %540 = vrot.lane.b32.xlu0 %v226, 1
      %v541 = vpop.permute.xlu0 %540
      %542 = vrot.lane.b32.xlu0 %v228, 1
      %v543 = vpop.permute.xlu0 %542
      %544 = vrot.lane.b32.xlu0 %v230, 1
      %v545 = vpop.permute.xlu0 %544
      %546 = vrot.lane.b32.xlu0 %v232, 1
      %v547 = vpop.permute.xlu0 %546
      %548 = vrot.lane.b32.xlu0 %v234, 1
      %v549 = vpop.permute.xlu0 %548
      %550 = vrot.lane.b32.xlu0 %v236, 1
      %v551 = vpop.permute.xlu0 %550
      %552 = vrot.lane.b32.xlu0 %v238, 1
      %v553 = vpop.permute.xlu0 %552
      %554 = vrot.lane.b32.xlu0 %v240, 1
      %v555 = vpop.permute.xlu0 %554
      %vm556 = vcmp.lt.s32.totalorder %v274, 1
      %v557 = vsel %vm556, %v525, %v541
      %v558 = vsel %vm556, %v527, %v543
      %v559 = vsel %vm556, %v529, %v545
      %v560 = vsel %vm556, %v531, %v547
      %v561 = vsel %vm556, %v533, %v549
      %v562 = vsel %vm556, %v535, %v551
      %v563 = vsel %vm556, %v537, %v553
      %v564 = vsel %vm556, %v539, %v555
      %v565 = vsel %vm556, %v541, %v525
      %v566 = vsel %vm556, %v543, %v527
      %v567 = vsel %vm556, %v545, %v529
      %v568 = vsel %vm556, %v547, %v531
      %v569 = vsel %vm556, %v549, %v533
      %v570 = vsel %vm556, %v551, %v535
      %v571 = vsel %vm556, %v553, %v537
      %v572 = vsel %vm556, %v555, %v539
      %s573 = scalar_lea.vmem %s4, 3
      %v574 = vld [vmem:[%s573] ss:$8 sm:$0x3]
      %v576 = vlaneseq
      %v577 = vshrl.u32 %v576, 7
      %v578 = vsub.s32 0, %v577
      %v579 = vrot.slane %v574, %v578
      %v580 = vlaneseq
      %v581 = vshrl.u32 %v580, 7
      %v582 = vsub.s32 1, %v581
      %v583 = vrot.slane %v574, %v582
      %v586 = vmul.f32 %v565, %v579
      %v587 = vmul.f32 %v557, %v583
      %v588 = vmul.f32 %v566, %v579
      %v589 = vmul.f32 %v558, %v583
      %v590 = vmul.f32 %v567, %v579
      %v591 = vmul.f32 %v559, %v583
      %v592 = vmul.f32 %v568, %v579
      %v593 = vmul.f32 %v560, %v583
      %v594 = vmul.f32 %v569, %v579
      %v595 = vmul.f32 %v561, %v583
      %v596 = vmul.f32 %v570, %v579
      %v597 = vmul.f32 %v562, %v583
      %v598 = vmul.f32 %v571, %v579
      %v599 = vmul.f32 %v563, %v583
      %v600 = vmul.f32 %v572, %v579
      %v601 = vmul.f32 %v564, %v583
      %602 = vst [vmem:[#allocation2 + $0x180] sm:$0xff] %v586
      %603 = vst [vmem:[#allocation2 + $0x188] sm:$0xff] %v587
      %604 = vst [vmem:[#allocation2 + $0x190] sm:$0xff] %v588
      %605 = vst [vmem:[#allocation2 + $0x198] sm:$0xff] %v589
      %606 = vst [vmem:[#allocation2 + $0x1a0] sm:$0xff] %v590
      %607 = vst [vmem:[#allocation2 + $0x1a8] sm:$0xff] %v591
      %608 = vst [vmem:[#allocation2 + $0x1b0] sm:$0xff] %v592
      %609 = vst [vmem:[#allocation2 + $0x1b8] sm:$0xff] %v593
      %610 = vst [vmem:[#allocation2 + $0x1c0] sm:$0xff] %v594
      %611 = vst [vmem:[#allocation2 + $0x1c8] sm:$0xff] %v595
      %612 = vst [vmem:[#allocation2 + $0x1d0] sm:$0xff] %v596
      %613 = vst [vmem:[#allocation2 + $0x1d8] sm:$0xff] %v597
      %614 = vst [vmem:[#allocation2 + $0x1e0] sm:$0xff] %v598
      %615 = vst [vmem:[#allocation2 + $0x1e8] sm:$0xff] %v599
      %616 = vst [vmem:[#allocation2 + $0x1f0] sm:$0xff] %v600
      %617 = vst [vmem:[#allocation2 + $0x1f8] sm:$0xff] %v601
      %618 = vst [vmem:[#allocation2 + $0x200] sm:$0xff] %v225
      %619 = vst [vmem:[#allocation2 + $0x208] sm:$0xff] %v226
      %620 = vst [vmem:[#allocation2 + $0x210] sm:$0xff] %v227
      %621 = vst [vmem:[#allocation2 + $0x218] sm:$0xff] %v228
      %622 = vst [vmem:[#allocation2 + $0x220] sm:$0xff] %v229
      %623 = vst [vmem:[#allocation2 + $0x228] sm:$0xff] %v230
      %624 = vst [vmem:[#allocation2 + $0x230] sm:$0xff] %v231
      %625 = vst [vmem:[#allocation2 + $0x238] sm:$0xff] %v232
      %626 = vst [vmem:[#allocation2 + $0x240] sm:$0xff] %v233
      %627 = vst [vmem:[#allocation2 + $0x248] sm:$0xff] %v234
      %628 = vst [vmem:[#allocation2 + $0x250] sm:$0xff] %v235
      %629 = vst [vmem:[#allocation2 + $0x258] sm:$0xff] %v236
      %630 = vst [vmem:[#allocation2 + $0x260] sm:$0xff] %v237
      %631 = vst [vmem:[#allocation2 + $0x268] sm:$0xff] %v238
      %632 = vst [vmem:[#allocation2 + $0x270] sm:$0xff] %v239
      %633 = vst [vmem:[#allocation2 + $0x278] sm:$0xff] %v240
      %634 = vrot.lane.b32.xlu0 %v225, 127
      %v635 = vpop.permute.xlu0 %634
      %636 = vrot.lane.b32.xlu0 %v227, 127
      %v637 = vpop.permute.xlu0 %636
      %638 = vrot.lane.b32.xlu0 %v229, 127
      %v639 = vpop.permute.xlu0 %638
      %640 = vrot.lane.b32.xlu0 %v231, 127
      %v641 = vpop.permute.xlu0 %640
      %642 = vrot.lane.b32.xlu0 %v233, 127
      %v643 = vpop.permute.xlu0 %642
      %644 = vrot.lane.b32.xlu0 %v235, 127
      %v645 = vpop.permute.xlu0 %644
      %646 = vrot.lane.b32.xlu0 %v237, 127
      %v647 = vpop.permute.xlu0 %646
      %648 = vrot.lane.b32.xlu0 %v239, 127
      %v649 = vpop.permute.xlu0 %648
      %650 = vrot.lane.b32.xlu0 %v226, 127
      %v651 = vpop.permute.xlu0 %650
      %652 = vrot.lane.b32.xlu0 %v228, 127
      %v653 = vpop.permute.xlu0 %652
      %654 = vrot.lane.b32.xlu0 %v230, 127
      %v655 = vpop.permute.xlu0 %654
      %656 = vrot.lane.b32.xlu0 %v232, 127
      %v657 = vpop.permute.xlu0 %656
      %658 = vrot.lane.b32.xlu0 %v234, 127
      %v659 = vpop.permute.xlu0 %658
      %660 = vrot.lane.b32.xlu0 %v236, 127
      %v661 = vpop.permute.xlu0 %660
      %662 = vrot.lane.b32.xlu0 %v238, 127
      %v663 = vpop.permute.xlu0 %662
      %664 = vrot.lane.b32.xlu0 %v240, 127
      %v665 = vpop.permute.xlu0 %664
      %vm666 = vcmp.lt.s32.totalorder %v274, 127
      %v667 = vsel %vm666, %v635, %v651
      %v668 = vsel %vm666, %v637, %v653
      %v669 = vsel %vm666, %v639, %v655
      %v670 = vsel %vm666, %v641, %v657
      %v671 = vsel %vm666, %v643, %v659
      %v672 = vsel %vm666, %v645, %v661
      %v673 = vsel %vm666, %v647, %v663
      %v674 = vsel %vm666, %v649, %v665
      %v675 = vsel %vm666, %v651, %v635
      %v676 = vsel %vm666, %v653, %v637
      %v677 = vsel %vm666, %v655, %v639
      %v678 = vsel %vm666, %v657, %v641
      %v679 = vsel %vm666, %v659, %v643
      %v680 = vsel %vm666, %v661, %v645
      %v681 = vsel %vm666, %v663, %v647
      %v682 = vsel %vm666, %v665, %v649
      %s683 = scalar_lea.vmem %s4, 5
      %v684 = vld [vmem:[%s683] ss:$8 sm:$0x3]
      %v686 = vlaneseq
      %v687 = vshrl.u32 %v686, 7
      %v688 = vsub.s32 0, %v687
      %v689 = vrot.slane %v684, %v688
      %v690 = vlaneseq
      %v691 = vshrl.u32 %v690, 7
      %v692 = vsub.s32 1, %v691
      %v693 = vrot.slane %v684, %v692
      %v696 = vmul.f32 %v667, %v689
      %v697 = vmul.f32 %v675, %v693
      %v698 = vmul.f32 %v668, %v689
      %v699 = vmul.f32 %v676, %v693
      %v700 = vmul.f32 %v669, %v689
      %v701 = vmul.f32 %v677, %v693
      %v702 = vmul.f32 %v670, %v689
      %v703 = vmul.f32 %v678, %v693
      %v704 = vmul.f32 %v671, %v689
      %v705 = vmul.f32 %v679, %v693
      %v706 = vmul.f32 %v672, %v689
      %v707 = vmul.f32 %v680, %v693
      %v708 = vmul.f32 %v673, %v689
      %v709 = vmul.f32 %v681, %v693
      %v710 = vmul.f32 %v674, %v689
      %v711 = vmul.f32 %v682, %v693
      %712 = vst [vmem:[#allocation2 + $0x280] sm:$0xff] %v696
      %713 = vst [vmem:[#allocation2 + $0x288] sm:$0xff] %v697
      %714 = vst [vmem:[#allocation2 + $0x290] sm:$0xff] %v698
      %715 = vst [vmem:[#allocation2 + $0x298] sm:$0xff] %v699
      %716 = vst [vmem:[#allocation2 + $0x2a0] sm:$0xff] %v700
      %717 = vst [vmem:[#allocation2 + $0x2a8] sm:$0xff] %v701
      %718 = vst [vmem:[#allocation2 + $0x2b0] sm:$0xff] %v702
      %719 = vst [vmem:[#allocation2 + $0x2b8] sm:$0xff] %v703
      %720 = vst [vmem:[#allocation2 + $0x2c0] sm:$0xff] %v704
      %721 = vst [vmem:[#allocation2 + $0x2c8] sm:$0xff] %v705
      %722 = vst [vmem:[#allocation2 + $0x2d0] sm:$0xff] %v706
      %723 = vst [vmem:[#allocation2 + $0x2d8] sm:$0xff] %v707
      %724 = vst [vmem:[#allocation2 + $0x2e0] sm:$0xff] %v708
      %725 = vst [vmem:[#allocation2 + $0x2e8] sm:$0xff] %v709
      %726 = vst [vmem:[#allocation2 + $0x2f0] sm:$0xff] %v710
      %727 = vst [vmem:[#allocation2 + $0x2f8] sm:$0xff] %v711
      %728 = vrot.lane.b32.xlu0 %v225, 113
      %v729 = vpop.permute.xlu0 %728
      %730 = vrot.lane.b32.xlu0 %v227, 113
      %v731 = vpop.permute.xlu0 %730
      %732 = vrot.lane.b32.xlu0 %v229, 113
      %v733 = vpop.permute.xlu0 %732
      %734 = vrot.lane.b32.xlu0 %v231, 113
      %v735 = vpop.permute.xlu0 %734
      %736 = vrot.lane.b32.xlu0 %v233, 113
      %v737 = vpop.permute.xlu0 %736
      %738 = vrot.lane.b32.xlu0 %v235, 113
      %v739 = vpop.permute.xlu0 %738
      %740 = vrot.lane.b32.xlu0 %v237, 113
      %v741 = vpop.permute.xlu0 %740
      %742 = vrot.lane.b32.xlu0 %v239, 113
      %v743 = vpop.permute.xlu0 %742
      %744 = vrot.lane.b32.xlu0 %v226, 113
      %v745 = vpop.permute.xlu0 %744
      %746 = vrot.lane.b32.xlu0 %v228, 113
      %v747 = vpop.permute.xlu0 %746
      %748 = vrot.lane.b32.xlu0 %v230, 113
      %v749 = vpop.permute.xlu0 %748
      %750 = vrot.lane.b32.xlu0 %v232, 113
      %v751 = vpop.permute.xlu0 %750
      %752 = vrot.lane.b32.xlu0 %v234, 113
      %v753 = vpop.permute.xlu0 %752
      %754 = vrot.lane.b32.xlu0 %v236, 113
      %v755 = vpop.permute.xlu0 %754
      %756 = vrot.lane.b32.xlu0 %v238, 113
      %v757 = vpop.permute.xlu0 %756
      %758 = vrot.lane.b32.xlu0 %v240, 113
      %v759 = vpop.permute.xlu0 %758
      %vm760 = vcmp.lt.s32.totalorder %v274, 113
      %v761 = vsel %vm760, %v729, %v745
      %v762 = vsel %vm760, %v731, %v747
      %v763 = vsel %vm760, %v733, %v749
      %v764 = vsel %vm760, %v735, %v751
      %v765 = vsel %vm760, %v737, %v753
      %v766 = vsel %vm760, %v739, %v755
      %v767 = vsel %vm760, %v741, %v757
      %v768 = vsel %vm760, %v743, %v759
      %v769 = vsel %vm760, %v745, %v729
      %v770 = vsel %vm760, %v747, %v731
      %v771 = vsel %vm760, %v749, %v733
      %v772 = vsel %vm760, %v751, %v735
      %v773 = vsel %vm760, %v753, %v737
      %v774 = vsel %vm760, %v755, %v739
      %v775 = vsel %vm760, %v757, %v741
      %v776 = vsel %vm760, %v759, %v743
      %s777 = scalar_lea.vmem %s4, 6
      %v778 = vld [vmem:[%s777] ss:$8 sm:$0x3]
      %v780 = vlaneseq
      %v781 = vshrl.u32 %v780, 7
      %v782 = vsub.s32 0, %v781
      %v783 = vrot.slane %v778, %v782
      %v784 = vlaneseq
      %v785 = vshrl.u32 %v784, 7
      %v786 = vsub.s32 1, %v785
      %v787 = vrot.slane %v778, %v786
      %v790 = vmul.f32 %v761, %v783
      %v791 = vmul.f32 %v769, %v787
      %v792 = vmul.f32 %v762, %v783
      %v793 = vmul.f32 %v770, %v787
      %v794 = vmul.f32 %v763, %v783
      %v795 = vmul.f32 %v771, %v787
      %v796 = vmul.f32 %v764, %v783
      %v797 = vmul.f32 %v772, %v787
      %v798 = vmul.f32 %v765, %v783
      %v799 = vmul.f32 %v773, %v787
      %v800 = vmul.f32 %v766, %v783
      %v801 = vmul.f32 %v774, %v787
      %v802 = vmul.f32 %v767, %v783
      %v803 = vmul.f32 %v775, %v787
      %v804 = vmul.f32 %v768, %v783
      %v805 = vmul.f32 %v776, %v787
      %806 = vst [vmem:[#allocation2 + $0x300] sm:$0xff] %v790
      %807 = vst [vmem:[#allocation2 + $0x308] sm:$0xff] %v791
      %808 = vst [vmem:[#allocation2 + $0x310] sm:$0xff] %v792
      %809 = vst [vmem:[#allocation2 + $0x318] sm:$0xff] %v793
      %810 = vst [vmem:[#allocation2 + $0x320] sm:$0xff] %v794
      %811 = vst [vmem:[#allocation2 + $0x328] sm:$0xff] %v795
      %812 = vst [vmem:[#allocation2 + $0x330] sm:$0xff] %v796
      %813 = vst [vmem:[#allocation2 + $0x338] sm:$0xff] %v797
      %814 = vst [vmem:[#allocation2 + $0x340] sm:$0xff] %v798
      %815 = vst [vmem:[#allocation2 + $0x348] sm:$0xff] %v799
      %816 = vst [vmem:[#allocation2 + $0x350] sm:$0xff] %v800
      %817 = vst [vmem:[#allocation2 + $0x358] sm:$0xff] %v801
      %818 = vst [vmem:[#allocation2 + $0x360] sm:$0xff] %v802
      %819 = vst [vmem:[#allocation2 + $0x368] sm:$0xff] %v803
      %820 = vst [vmem:[#allocation2 + $0x370] sm:$0xff] %v804
      %821 = vst [vmem:[#allocation2 + $0x378] sm:$0xff] %v805
      %822 = vrot.lane.b32.xlu0 %v225, 112
      %v823 = vpop.permute.xlu0 %822
      %824 = vrot.lane.b32.xlu0 %v227, 112
      %v825 = vpop.permute.xlu0 %824
      %826 = vrot.lane.b32.xlu0 %v229, 112
      %v827 = vpop.permute.xlu0 %826
      %828 = vrot.lane.b32.xlu0 %v231, 112
      %v829 = vpop.permute.xlu0 %828
      %830 = vrot.lane.b32.xlu0 %v233, 112
      %v831 = vpop.permute.xlu0 %830
      %832 = vrot.lane.b32.xlu0 %v235, 112
      %v833 = vpop.permute.xlu0 %832
      %834 = vrot.lane.b32.xlu0 %v237, 112
      %v835 = vpop.permute.xlu0 %834
      %836 = vrot.lane.b32.xlu0 %v239, 112
      %v837 = vpop.permute.xlu0 %836
      %838 = vrot.lane.b32.xlu0 %v226, 112
      %v839 = vpop.permute.xlu0 %838
      %840 = vrot.lane.b32.xlu0 %v228, 112
      %v841 = vpop.permute.xlu0 %840
      %842 = vrot.lane.b32.xlu0 %v230, 112
      %v843 = vpop.permute.xlu0 %842
      %844 = vrot.lane.b32.xlu0 %v232, 112
      %v845 = vpop.permute.xlu0 %844
      %846 = vrot.lane.b32.xlu0 %v234, 112
      %v847 = vpop.permute.xlu0 %846
      %848 = vrot.lane.b32.xlu0 %v236, 112
      %v849 = vpop.permute.xlu0 %848
      %850 = vrot.lane.b32.xlu0 %v238, 112
      %v851 = vpop.permute.xlu0 %850
      %852 = vrot.lane.b32.xlu0 %v240, 112
      %v853 = vpop.permute.xlu0 %852
      %vm854 = vcmp.lt.s32.totalorder %v274, 112
      %v855 = vsel %vm854, %v823, %v839
      %v856 = vsel %vm854, %v825, %v841
      %v857 = vsel %vm854, %v827, %v843
      %v858 = vsel %vm854, %v829, %v845
      %v859 = vsel %vm854, %v831, %v847
      %v860 = vsel %vm854, %v833, %v849
      %v861 = vsel %vm854, %v835, %v851
      %v862 = vsel %vm854, %v837, %v853
      %v863 = vsel %vm854, %v839, %v823
      %v864 = vsel %vm854, %v841, %v825
      %v865 = vsel %vm854, %v843, %v827
      %v866 = vsel %vm854, %v845, %v829
      %v867 = vsel %vm854, %v847, %v831
      %v868 = vsel %vm854, %v849, %v833
      %v869 = vsel %vm854, %v851, %v835
      %v870 = vsel %vm854, %v853, %v837
      %s871 = scalar_lea.vmem %s4, 7
      %v872 = vld [vmem:[%s871] ss:$8 sm:$0x3]
      %v874 = vlaneseq
      %v875 = vshrl.u32 %v874, 7
      %v876 = vsub.s32 0, %v875
      %v877 = vrot.slane %v872, %v876
      %v878 = vlaneseq
      %v879 = vshrl.u32 %v878, 7
      %v880 = vsub.s32 1, %v879
      %v881 = vrot.slane %v872, %v880
      %v884 = vmul.f32 %v855, %v877
      %v885 = vmul.f32 %v863, %v881
      %v886 = vmul.f32 %v856, %v877
      %v887 = vmul.f32 %v864, %v881
      %v888 = vmul.f32 %v857, %v877
      %v889 = vmul.f32 %v865, %v881
      %v890 = vmul.f32 %v858, %v877
      %v891 = vmul.f32 %v866, %v881
      %v892 = vmul.f32 %v859, %v877
      %v893 = vmul.f32 %v867, %v881
      %v894 = vmul.f32 %v860, %v877
      %v895 = vmul.f32 %v868, %v881
      %v896 = vmul.f32 %v861, %v877
      %v897 = vmul.f32 %v869, %v881
      %v898 = vmul.f32 %v862, %v877
      %v899 = vmul.f32 %v870, %v881
      %900 = vst [vmem:[#allocation2 + $0x380] sm:$0xff] %v884
      %901 = vst [vmem:[#allocation2 + $0x388] sm:$0xff] %v885
      %902 = vst [vmem:[#allocation2 + $0x390] sm:$0xff] %v886
      %903 = vst [vmem:[#allocation2 + $0x398] sm:$0xff] %v887
      %904 = vst [vmem:[#allocation2 + $0x3a0] sm:$0xff] %v888
      %905 = vst [vmem:[#allocation2 + $0x3a8] sm:$0xff] %v889
      %906 = vst [vmem:[#allocation2 + $0x3b0] sm:$0xff] %v890
      %907 = vst [vmem:[#allocation2 + $0x3b8] sm:$0xff] %v891
      %908 = vst [vmem:[#allocation2 + $0x3c0] sm:$0xff] %v892
      %909 = vst [vmem:[#allocation2 + $0x3c8] sm:$0xff] %v893
      %910 = vst [vmem:[#allocation2 + $0x3d0] sm:$0xff] %v894
      %911 = vst [vmem:[#allocation2 + $0x3d8] sm:$0xff] %v895
      %912 = vst [vmem:[#allocation2 + $0x3e0] sm:$0xff] %v896
      %913 = vst [vmem:[#allocation2 + $0x3e8] sm:$0xff] %v897
      %914 = vst [vmem:[#allocation2 + $0x3f0] sm:$0xff] %v898
      %915 = vst [vmem:[#allocation2 + $0x3f8] sm:$0xff] %v899
      %916 = vrot.lane.b32.xlu0 %v225, 111
      %v917 = vpop.permute.xlu0 %916
      %918 = vrot.lane.b32.xlu0 %v227, 111
      %v919 = vpop.permute.xlu0 %918
      %920 = vrot.lane.b32.xlu0 %v229, 111
      %v921 = vpop.permute.xlu0 %920
      %922 = vrot.lane.b32.xlu0 %v231, 111
      %v923 = vpop.permute.xlu0 %922
      %924 = vrot.lane.b32.xlu0 %v233, 111
      %v925 = vpop.permute.xlu0 %924
      %926 = vrot.lane.b32.xlu0 %v235, 111
      %v927 = vpop.permute.xlu0 %926
      %928 = vrot.lane.b32.xlu0 %v237, 111
      %v929 = vpop.permute.xlu0 %928
      %930 = vrot.lane.b32.xlu0 %v239, 111
      %v931 = vpop.permute.xlu0 %930
      %932 = vrot.lane.b32.xlu0 %v226, 111
      %v933 = vpop.permute.xlu0 %932
      %934 = vrot.lane.b32.xlu0 %v228, 111
      %v935 = vpop.permute.xlu0 %934
      %936 = vrot.lane.b32.xlu0 %v230, 111
      %v937 = vpop.permute.xlu0 %936
      %938 = vrot.lane.b32.xlu0 %v232, 111
      %v939 = vpop.permute.xlu0 %938
      %940 = vrot.lane.b32.xlu0 %v234, 111
      %v941 = vpop.permute.xlu0 %940
      %942 = vrot.lane.b32.xlu0 %v236, 111
      %v943 = vpop.permute.xlu0 %942
      %944 = vrot.lane.b32.xlu0 %v238, 111
      %v945 = vpop.permute.xlu0 %944
      %946 = vrot.lane.b32.xlu0 %v240, 111
      %v947 = vpop.permute.xlu0 %946
      %vm948 = vcmp.lt.s32.totalorder %v274, 111
      %v949 = vsel %vm948, %v917, %v933
      %v950 = vsel %vm948, %v919, %v935
      %v951 = vsel %vm948, %v921, %v937
      %v952 = vsel %vm948, %v923, %v939
      %v953 = vsel %vm948, %v925, %v941
      %v954 = vsel %vm948, %v927, %v943
      %v955 = vsel %vm948, %v929, %v945
      %v956 = vsel %vm948, %v931, %v947
      %v957 = vsel %vm948, %v933, %v917
      %v958 = vsel %vm948, %v935, %v919
      %v959 = vsel %vm948, %v937, %v921
      %v960 = vsel %vm948, %v939, %v923
      %v961 = vsel %vm948, %v941, %v925
      %v962 = vsel %vm948, %v943, %v927
      %v963 = vsel %vm948, %v945, %v929
      %v964 = vsel %vm948, %v947, %v931
      %s965 = scalar_lea.vmem %s4, 16
      %v966 = vld [vmem:[%s965] ss:$8 sm:$0x3]
      %v968 = vlaneseq
      %v969 = vshrl.u32 %v968, 7
      %v970 = vsub.s32 0, %v969
      %v971 = vrot.slane %v966, %v970
      %v972 = vlaneseq
      %v973 = vshrl.u32 %v972, 7
      %v974 = vsub.s32 1, %v973
      %v975 = vrot.slane %v966, %v974
      %v978 = vmul.f32 %v949, %v971
      %v979 = vmul.f32 %v957, %v975
      %v980 = vmul.f32 %v950, %v971
      %v981 = vmul.f32 %v958, %v975
      %v982 = vmul.f32 %v951, %v971
      %v983 = vmul.f32 %v959, %v975
      %v984 = vmul.f32 %v952, %v971
      %v985 = vmul.f32 %v960, %v975
      %v986 = vmul.f32 %v953, %v971
      %v987 = vmul.f32 %v961, %v975
      %v988 = vmul.f32 %v954, %v971
      %v989 = vmul.f32 %v962, %v975
      %v990 = vmul.f32 %v955, %v971
      %v991 = vmul.f32 %v963, %v975
      %v992 = vmul.f32 %v956, %v971
      %v993 = vmul.f32 %v964, %v975
      %994 = vst [vmem:[#allocation2 + $0x400] sm:$0xff] %v978
      %995 = vst [vmem:[#allocation2 + $0x408] sm:$0xff] %v979
      %996 = vst [vmem:[#allocation2 + $0x410] sm:$0xff] %v980
      %997 = vst [vmem:[#allocation2 + $0x418] sm:$0xff] %v981
      %998 = vst [vmem:[#allocation2 + $0x420] sm:$0xff] %v982
      %999 = vst [vmem:[#allocation2 + $0x428] sm:$0xff] %v983
      %1000 = vst [vmem:[#allocation2 + $0x430] sm:$0xff] %v984
      %1001 = vst [vmem:[#allocation2 + $0x438] sm:$0xff] %v985
      %1002 = vst [vmem:[#allocation2 + $0x440] sm:$0xff] %v986
      %1003 = vst [vmem:[#allocation2 + $0x448] sm:$0xff] %v987
      %1004 = vst [vmem:[#allocation2 + $0x450] sm:$0xff] %v988
      %1005 = vst [vmem:[#allocation2 + $0x458] sm:$0xff] %v989
      %1006 = vst [vmem:[#allocation2 + $0x460] sm:$0xff] %v990
      %1007 = vst [vmem:[#allocation2 + $0x468] sm:$0xff] %v991
      %1008 = vst [vmem:[#allocation2 + $0x470] sm:$0xff] %v992
      %1009 = vst [vmem:[#allocation2 + $0x478] sm:$0xff] %v993
      %v1010 = vld [vmem:[%s1] sm:$0xff]
      %v1011 = vld [vmem:[%s1 + $0x8] sm:$0xff]
      %v1012 = vld [vmem:[%s1 + $0x10] sm:$0xff]
      %v1013 = vld [vmem:[%s1 + $0x18] sm:$0xff]
      %v1014 = vld [vmem:[%s1 + $0x20] sm:$0xff]
      %v1015 = vld [vmem:[%s1 + $0x28] sm:$0xff]
      %v1016 = vld [vmem:[%s1 + $0x30] sm:$0xff]
      %v1017 = vld [vmem:[%s1 + $0x38] sm:$0xff]
      %v1018 = vld [vmem:[%s1 + $0x40] sm:$0xff]
      %v1019 = vld [vmem:[%s1 + $0x48] sm:$0xff]
      %v1020 = vld [vmem:[%s1 + $0x50] sm:$0xff]
      %v1021 = vld [vmem:[%s1 + $0x58] sm:$0xff]
      %v1022 = vld [vmem:[%s1 + $0x60] sm:$0xff]
      %v1023 = vld [vmem:[%s1 + $0x68] sm:$0xff]
      %v1024 = vld [vmem:[%s1 + $0x70] sm:$0xff]
      %v1025 = vld [vmem:[%s1 + $0x78] sm:$0xff]
      %v1026 = vld [vmem:[%s1 + $0x80] sm:$0xff]
      %v1027 = vld [vmem:[%s1 + $0x88] sm:$0xff]
      %v1028 = vld [vmem:[%s1 + $0x90] sm:$0xff]
      %v1029 = vld [vmem:[%s1 + $0x98] sm:$0xff]
      %v1030 = vld [vmem:[%s1 + $0xa0] sm:$0xff]
      %v1031 = vld [vmem:[%s1 + $0xa8] sm:$0xff]
      %v1032 = vld [vmem:[%s1 + $0xb0] sm:$0xff]
      %v1033 = vld [vmem:[%s1 + $0xb8] sm:$0xff]
      %v1034 = vld [vmem:[%s1 + $0xc0] sm:$0xff]
      %v1035 = vld [vmem:[%s1 + $0xc8] sm:$0xff]
      %v1036 = vld [vmem:[%s1 + $0xd0] sm:$0xff]
      %v1037 = vld [vmem:[%s1 + $0xd8] sm:$0xff]
      %v1038 = vld [vmem:[%s1 + $0xe0] sm:$0xff]
      %v1039 = vld [vmem:[%s1 + $0xe8] sm:$0xff]
      %v1040 = vld [vmem:[%s1 + $0xf0] sm:$0xff]
      %v1041 = vld [vmem:[%s1 + $0xf8] sm:$0xff]
      %v1042 = vld [vmem:[%s1 + $0x100] sm:$0xff]
      %v1043 = vld [vmem:[%s1 + $0x108] sm:$0xff]
      %v1044 = vld [vmem:[%s1 + $0x110] sm:$0xff]
      %v1045 = vld [vmem:[%s1 + $0x118] sm:$0xff]
      %v1046 = vld [vmem:[%s1 + $0x120] sm:$0xff]
      %v1047 = vld [vmem:[%s1 + $0x128] sm:$0xff]
      %v1048 = vld [vmem:[%s1 + $0x130] sm:$0xff]
      %v1049 = vld [vmem:[%s1 + $0x138] sm:$0xff]
      %v1050 = vld [vmem:[#allocation2] sm:$0xff]
      %v1051 = vld [vmem:[#allocation2 + $0x8] sm:$0xff]
      %v1052 = vld [vmem:[#allocation2 + $0x10] sm:$0xff]
      %v1053 = vld [vmem:[#allocation2 + $0x18] sm:$0xff]
      %v1054 = vld [vmem:[#allocation2 + $0x20] sm:$0xff]
      %v1055 = vld [vmem:[#allocation2 + $0x28] sm:$0xff]
      %v1056 = vld [vmem:[#allocation2 + $0x30] sm:$0xff]
      %v1057 = vld [vmem:[#allocation2 + $0x38] sm:$0xff]
      %v1058 = vld [vmem:[#allocation2 + $0x40] sm:$0xff]
      %v1059 = vld [vmem:[#allocation2 + $0x48] sm:$0xff]
      %v1060 = vld [vmem:[#allocation2 + $0x50] sm:$0xff]
      %v1061 = vld [vmem:[#allocation2 + $0x58] sm:$0xff]
      %v1062 = vld [vmem:[#allocation2 + $0x60] sm:$0xff]
      %v1063 = vld [vmem:[#allocation2 + $0x68] sm:$0xff]
      %v1064 = vld [vmem:[#allocation2 + $0x70] sm:$0xff]
      %v1065 = vld [vmem:[#allocation2 + $0x78] sm:$0xff]
      %v1066 = vld [vmem:[#allocation2 + $0x80] sm:$0xff]
      %v1067 = vld [vmem:[#allocation2 + $0x88] sm:$0xff]
      %v1068 = vld [vmem:[#allocation2 + $0x90] sm:$0xff]
      %v1069 = vld [vmem:[#allocation2 + $0x98] sm:$0xff]
      %v1070 = vld [vmem:[#allocation2 + $0xa0] sm:$0xff]
      %v1071 = vld [vmem:[#allocation2 + $0xa8] sm:$0xff]
      %v1072 = vld [vmem:[#allocation2 + $0xb0] sm:$0xff]
      %v1073 = vld [vmem:[#allocation2 + $0xb8] sm:$0xff]
      %v1074 = vld [vmem:[#allocation2 + $0xc0] sm:$0xff]
      %v1075 = vld [vmem:[#allocation2 + $0xc8] sm:$0xff]
      %v1076 = vld [vmem:[#allocation2 + $0xd0] sm:$0xff]
      %v1077 = vld [vmem:[#allocation2 + $0xd8] sm:$0xff]
      %v1078 = vld [vmem:[#allocation2 + $0xe0] sm:$0xff]
      %v1079 = vld [vmem:[#allocation2 + $0xe8] sm:$0xff]
      %v1080 = vld [vmem:[#allocation2 + $0xf0] sm:$0xff]
      %v1081 = vld [vmem:[#allocation2 + $0xf8] sm:$0xff]
      %v1082 = vld [vmem:[#allocation2 + $0x100] sm:$0xff]
      %v1083 = vld [vmem:[#allocation2 + $0x108] sm:$0xff]
      %v1084 = vld [vmem:[#allocation2 + $0x110] sm:$0xff]
      %v1085 = vld [vmem:[#allocation2 + $0x118] sm:$0xff]
      %v1086 = vld [vmem:[#allocation2 + $0x120] sm:$0xff]
      %v1087 = vld [vmem:[#allocation2 + $0x128] sm:$0xff]
      %v1088 = vld [vmem:[#allocation2 + $0x130] sm:$0xff]
      %v1089 = vld [vmem:[#allocation2 + $0x138] sm:$0xff]
      %v1090 = vld [vmem:[#allocation2 + $0x140] sm:$0xff]
      %v1091 = vld [vmem:[#allocation2 + $0x148] sm:$0xff]
      %v1092 = vld [vmem:[#allocation2 + $0x150] sm:$0xff]
      %v1093 = vld [vmem:[#allocation2 + $0x158] sm:$0xff]
      %v1094 = vld [vmem:[#allocation2 + $0x160] sm:$0xff]
      %v1095 = vld [vmem:[#allocation2 + $0x168] sm:$0xff]
      %v1096 = vld [vmem:[#allocation2 + $0x170] sm:$0xff]
      %v1097 = vld [vmem:[#allocation2 + $0x178] sm:$0xff]
      %v1098 = vld [vmem:[#allocation2 + $0x180] sm:$0xff]
      %v1099 = vld [vmem:[#allocation2 + $0x188] sm:$0xff]
      %v1100 = vld [vmem:[#allocation2 + $0x190] sm:$0xff]
      %v1101 = vld [vmem:[#allocation2 + $0x198] sm:$0xff]
      %v1102 = vld [vmem:[#allocation2 + $0x1a0] sm:$0xff]
      %v1103 = vld [vmem:[#allocation2 + $0x1a8] sm:$0xff]
      %v1104 = vld [vmem:[#allocation2 + $0x1b0] sm:$0xff]
      %v1105 = vld [vmem:[#allocation2 + $0x1b8] sm:$0xff]
      %v1106 = vld [vmem:[#allocation2 + $0x1c0] sm:$0xff]
      %v1107 = vld [vmem:[#allocation2 + $0x1c8] sm:$0xff]
      %v1108 = vld [vmem:[#allocation2 + $0x1d0] sm:$0xff]
      %v1109 = vld [vmem:[#allocation2 + $0x1d8] sm:$0xff]
      %v1110 = vld [vmem:[#allocation2 + $0x1e0] sm:$0xff]
      %v1111 = vld [vmem:[#allocation2 + $0x1e8] sm:$0xff]
      %v1112 = vld [vmem:[#allocation2 + $0x1f0] sm:$0xff]
      %v1113 = vld [vmem:[#allocation2 + $0x1f8] sm:$0xff]
      %v1114 = vld [vmem:[#allocation2 + $0x200] sm:$0xff]
      %v1115 = vld [vmem:[#allocation2 + $0x208] sm:$0xff]
      %v1116 = vld [vmem:[#allocation2 + $0x210] sm:$0xff]
      %v1117 = vld [vmem:[#allocation2 + $0x218] sm:$0xff]
      %v1118 = vld [vmem:[#allocation2 + $0x220] sm:$0xff]
      %v1119 = vld [vmem:[#allocation2 + $0x228] sm:$0xff]
      %v1120 = vld [vmem:[#allocation2 + $0x230] sm:$0xff]
      %v1121 = vld [vmem:[#allocation2 + $0x238] sm:$0xff]
      %v1122 = vld [vmem:[#allocation2 + $0x240] sm:$0xff]
      %v1123 = vld [vmem:[#allocation2 + $0x248] sm:$0xff]
      %v1124 = vld [vmem:[#allocation2 + $0x250] sm:$0xff]
      %v1125 = vld [vmem:[#allocation2 + $0x258] sm:$0xff]
      %v1126 = vld [vmem:[#allocation2 + $0x260] sm:$0xff]
      %v1127 = vld [vmem:[#allocation2 + $0x268] sm:$0xff]
      %v1128 = vld [vmem:[#allocation2 + $0x270] sm:$0xff]
      %v1129 = vld [vmem:[#allocation2 + $0x278] sm:$0xff]
      %v1130 = vld [vmem:[#allocation2 + $0x280] sm:$0xff]
      %v1131 = vld [vmem:[#allocation2 + $0x288] sm:$0xff]
      %v1132 = vld [vmem:[#allocation2 + $0x290] sm:$0xff]
      %v1133 = vld [vmem:[#allocation2 + $0x298] sm:$0xff]
      %v1134 = vld [vmem:[#allocation2 + $0x2a0] sm:$0xff]
      %v1135 = vld [vmem:[#allocation2 + $0x2a8] sm:$0xff]
      %v1136 = vld [vmem:[#allocation2 + $0x2b0] sm:$0xff]
      %v1137 = vld [vmem:[#allocation2 + $0x2b8] sm:$0xff]
      %v1138 = vld [vmem:[#allocation2 + $0x2c0] sm:$0xff]
      %v1139 = vld [vmem:[#allocation2 + $0x2c8] sm:$0xff]
      %v1140 = vld [vmem:[#allocation2 + $0x2d0] sm:$0xff]
      %v1141 = vld [vmem:[#allocation2 + $0x2d8] sm:$0xff]
      %v1142 = vld [vmem:[#allocation2 + $0x2e0] sm:$0xff]
      %v1143 = vld [vmem:[#allocation2 + $0x2e8] sm:$0xff]
      %v1144 = vld [vmem:[#allocation2 + $0x2f0] sm:$0xff]
      %v1145 = vld [vmem:[#allocation2 + $0x2f8] sm:$0xff]
      %v1146 = vld [vmem:[#allocation2 + $0x300] sm:$0xff]
      %v1147 = vld [vmem:[#allocation2 + $0x308] sm:$0xff]
      %v1148 = vld [vmem:[#allocation2 + $0x310] sm:$0xff]
      %v1149 = vld [vmem:[#allocation2 + $0x318] sm:$0xff]
      %v1150 = vld [vmem:[#allocation2 + $0x320] sm:$0xff]
      %v1151 = vld [vmem:[#allocation2 + $0x328] sm:$0xff]
      %v1152 = vld [vmem:[#allocation2 + $0x330] sm:$0xff]
      %v1153 = vld [vmem:[#allocation2 + $0x338] sm:$0xff]
      %v1154 = vld [vmem:[#allocation2 + $0x340] sm:$0xff]
      %v1155 = vld [vmem:[#allocation2 + $0x348] sm:$0xff]
      %v1156 = vld [vmem:[#allocation2 + $0x350] sm:$0xff]
      %v1157 = vld [vmem:[#allocation2 + $0x358] sm:$0xff]
      %v1158 = vld [vmem:[#allocation2 + $0x360] sm:$0xff]
      %v1159 = vld [vmem:[#allocation2 + $0x368] sm:$0xff]
      %v1160 = vld [vmem:[#allocation2 + $0x370] sm:$0xff]
      %v1161 = vld [vmem:[#allocation2 + $0x378] sm:$0xff]
      %v1162 = vld [vmem:[#allocation2 + $0x380] sm:$0xff]
      %v1163 = vld [vmem:[#allocation2 + $0x388] sm:$0xff]
      %v1164 = vld [vmem:[#allocation2 + $0x390] sm:$0xff]
      %v1165 = vld [vmem:[#allocation2 + $0x398] sm:$0xff]
      %v1166 = vld [vmem:[#allocation2 + $0x3a0] sm:$0xff]
      %v1167 = vld [vmem:[#allocation2 + $0x3a8] sm:$0xff]
      %v1168 = vld [vmem:[#allocation2 + $0x3b0] sm:$0xff]
      %v1169 = vld [vmem:[#allocation2 + $0x3b8] sm:$0xff]
      %v1170 = vld [vmem:[#allocation2 + $0x3c0] sm:$0xff]
      %v1171 = vld [vmem:[#allocation2 + $0x3c8] sm:$0xff]
      %v1172 = vld [vmem:[#allocation2 + $0x3d0] sm:$0xff]
      %v1173 = vld [vmem:[#allocation2 + $0x3d8] sm:$0xff]
      %v1174 = vld [vmem:[#allocation2 + $0x3e0] sm:$0xff]
      %v1175 = vld [vmem:[#allocation2 + $0x3e8] sm:$0xff]
      %v1176 = vld [vmem:[#allocation2 + $0x3f0] sm:$0xff]
      %v1177 = vld [vmem:[#allocation2 + $0x3f8] sm:$0xff]
      %v1178 = vld [vmem:[#allocation2 + $0x400] sm:$0xff]
      %v1179 = vld [vmem:[#allocation2 + $0x408] sm:$0xff]
      %v1180 = vld [vmem:[#allocation2 + $0x410] sm:$0xff]
      %v1181 = vld [vmem:[#allocation2 + $0x418] sm:$0xff]
      %v1182 = vld [vmem:[#allocation2 + $0x420] sm:$0xff]
      %v1183 = vld [vmem:[#allocation2 + $0x428] sm:$0xff]
      %v1184 = vld [vmem:[#allocation2 + $0x430] sm:$0xff]
      %v1185 = vld [vmem:[#allocation2 + $0x438] sm:$0xff]
      %v1186 = vld [vmem:[#allocation2 + $0x440] sm:$0xff]
      %v1187 = vld [vmem:[#allocation2 + $0x448] sm:$0xff]
      %v1188 = vld [vmem:[#allocation2 + $0x450] sm:$0xff]
      %v1189 = vld [vmem:[#allocation2 + $0x458] sm:$0xff]
      %v1190 = vld [vmem:[#allocation2 + $0x460] sm:$0xff]
      %v1191 = vld [vmem:[#allocation2 + $0x468] sm:$0xff]
      %v1192 = vld [vmem:[#allocation2 + $0x470] sm:$0xff]
      %v1193 = vld [vmem:[#allocation2 + $0x478] sm:$0xff]
      %vm1194 = vcmask 523264
      %v1196 = vsel %vm1194, %v1014, 0
      %v1199 = vsel %vm1194, %v1019, 0
      %v1202 = vsel %vm1194, %v1024, 0
      %v1205 = vsel %vm1194, %v1029, 0
      %v1208 = vsel %vm1194, %v1034, 0
      %v1211 = vsel %vm1194, %v1039, 0
      %v1214 = vsel %vm1194, %v1044, 0
      %v1217 = vsel %vm1194, %v1049, 0
      %1219 = vmatprep.subr.mxu0 %v1051
      %1220 = vmatpush1.msra.mxu0 %v1050
      %1221 = vmatprep.subr.mxu0 %v1053
      %1222 = vmatpush1.msra.mxu0 %v1052
      %1223 = vmatprep.subr.mxu0 %v1055
      %1224 = vmatpush1.msra.mxu0 %v1054
      %1225 = vmatprep.subr.mxu0 %v1057
      %1226 = vmatpush1.msra.mxu0 %v1056
      %1227 = vmatprep.subr.mxu0 %v1059
      %1228 = vmatpush1.msra.mxu0 %v1058
      %1229 = vmatprep.subr.mxu0 %v1061
      %1230 = vmatpush1.msra.mxu0 %v1060
      %1231 = vmatprep.subr.mxu0 %v1063
      %1232 = vmatpush1.msra.mxu0 %v1062
      %1233 = vmatprep.subr.mxu0 %v1065
      %1234 = vmatpush1.msra.mxu0 %v1064
      %1235 = vmatprep.subr.mxu0 %v1067
      %1236 = vmatpush1.msra.mxu0 %v1066
      %1237 = vmatprep.subr.mxu0 %v1069
      %1238 = vmatpush1.msra.mxu0 %v1068
      %1239 = vmatprep.subr.mxu0 %v1071
      %1240 = vmatpush1.msra.mxu0 %v1070
      %1241 = vmatprep.subr.mxu0 %v1073
      %1242 = vmatpush1.msra.mxu0 %v1072
      %1243 = vmatprep.subr.mxu0 %v1075
      %1244 = vmatpush1.msra.mxu0 %v1074
      %1245 = vmatprep.subr.mxu0 %v1077
      %1246 = vmatpush1.msra.mxu0 %v1076
      %1247 = vmatprep.subr.mxu0 %v1079
      %1248 = vmatpush1.msra.mxu0 %v1078
      %1249 = vmatprep.subr.mxu0 %v1081
      %1250 = vmatpush1.msra.mxu0 %v1080
      %1251 = vmatprep.subr.mxu0 %v1083
      %1252 = vmatpush1.msra.mxu0 %v1082
      %1253 = vmatprep.subr.mxu0 %v1085
      %1254 = vmatpush1.msra.mxu0 %v1084
      %1255 = vmatprep.subr.mxu0 %v1087
      %1256 = vmatpush1.msra.mxu0 %v1086
      %1257 = vmatprep.subr.mxu0 %v1089
      %1258 = vmatpush1.msra.mxu0 %v1088
      %1259 = vmatprep.subr.mxu0 %v1091
      %1260 = vmatpush1.msra.mxu0 %v1090
      %1261 = vmatprep.subr.mxu0 %v1093
      %1262 = vmatpush1.msra.mxu0 %v1092
      %1263 = vmatprep.subr.mxu0 %v1095
      %1264 = vmatpush1.msra.mxu0 %v1094
      %1265 = vmatprep.subr.mxu0 %v1097
      %1266 = vmatpush1.msra.mxu0 %v1096
      %1267 = vmatprep.subr.mxu0 %v1099
      %1268 = vmatpush1.msra.mxu0 %v1098
      %1269 = vmatprep.subr.mxu0 %v1101
      %1270 = vmatpush1.msra.mxu0 %v1100
      %1271 = vmatprep.subr.mxu0 %v1103
      %1272 = vmatpush1.msra.mxu0 %v1102
      %1273 = vmatprep.subr.mxu0 %v1105
      %1274 = vmatpush1.msra.mxu0 %v1104
      %1275 = vmatprep.subr.mxu0 %v1107
      %1276 = vmatpush1.msra.mxu0 %v1106
      %1277 = vmatprep.subr.mxu0 %v1109
      %1278 = vmatpush1.msra.mxu0 %v1108
      %1279 = vmatprep.subr.mxu0 %v1111
      %1280 = vmatpush1.msra.mxu0 %v1110
      %1281 = vmatprep.subr.mxu0 %v1113
      %1282 = vmatpush1.msra.mxu0 %v1112
      %1283 = vmatprep.mubr.f32.mxu0 %v1011
      %1284 = vmatmul.mubr.f32.gmra.mrb[0].mxu0 %v1010
      %v1285 = vpop.f32.mrb[0].mxu0
      %v1286 = vadd.f32 0.0, %v1285
      %v1287 = vpop.f32.mrb[0].mxu0
      %v1288 = vadd.f32 0.0, %v1287
      %1289 = vmatprep.mubr.f32.mxu0 %v1016
      %1290 = vmatmul.mubr.f32.gmra.mrb[0].mxu0 %v1015
      %v1291 = vpop.f32.mrb[0].mxu0
      %v1292 = vadd.f32 0.0, %v1291
      %v1293 = vpop.f32.mrb[0].mxu0
      %v1294 = vadd.f32 0.0, %v1293
      %1295 = vmatprep.mubr.f32.mxu0 %v1021
      %1296 = vmatmul.mubr.f32.gmra.mrb[0].mxu0 %v1020
      %v1297 = vpop.f32.mrb[0].mxu0
      %v1298 = vadd.f32 0.0, %v1297
      %v1299 = vpop.f32.mrb[0].mxu0
      %v1300 = vadd.f32 0.0, %v1299
      %1301 = vmatprep.mubr.f32.mxu0 %v1026
      %1302 = vmatmul.mubr.f32.gmra.mrb[0].mxu0 %v1025
      %v1303 = vpop.f32.mrb[0].mxu0
      %v1304 = vadd.f32 0.0, %v1303
      %v1305 = vpop.f32.mrb[0].mxu0
      %v1306 = vadd.f32 0.0, %v1305
      %1307 = vmatprep.mubr.f32.mxu0 %v1031
      %1308 = vmatmul.mubr.f32.gmra.mrb[0].mxu0 %v1030
      %v1309 = vpop.f32.mrb[0].mxu0
      %v1310 = vadd.f32 0.0, %v1309
      %v1311 = vpop.f32.mrb[0].mxu0
      %v1312 = vadd.f32 0.0, %v1311
      %1313 = vmatprep.mubr.f32.mxu0 %v1036
      %1314 = vmatmul.mubr.f32.gmra.mrb[0].mxu0 %v1035
      %v1315 = vpop.f32.mrb[0].mxu0
      %v1316 = vadd.f32 0.0, %v1315
      %v1317 = vpop.f32.mrb[0].mxu0
      %v1318 = vadd.f32 0.0, %v1317
      %1319 = vmatprep.mubr.f32.mxu0 %v1041
      %1320 = vmatmul.mubr.f32.gmra.mrb[0].mxu0 %v1040
      %v1321 = vpop.f32.mrb[0].mxu0
      %v1322 = vadd.f32 0.0, %v1321
      %v1323 = vpop.f32.mrb[0].mxu0
      %v1324 = vadd.f32 0.0, %v1323
      %1325 = vmatprep.mubr.f32.mxu0 %v1046
      %1326 = vmatmul.mubr.f32.gmra.mrb[0].mxu0 %v1045
      %v1327 = vpop.f32.mrb[0].mxu0
      %v1328 = vadd.f32 0.0, %v1327
      %v1329 = vpop.f32.mrb[0].mxu0
      %v1330 = vadd.f32 0.0, %v1329
      %1331 = vdwg.mxu0
      %1332 = vmatprep.subr.mxu0 %v1115
      %1333 = vmatpush1.msra.mxu0 %v1114
      %1334 = vmatprep.subr.mxu0 %v1117
      %1335 = vmatpush1.msra.mxu0 %v1116
      %1336 = vmatprep.subr.mxu0 %v1119
      %1337 = vmatpush1.msra.mxu0 %v1118
      %1338 = vmatprep.subr.mxu0 %v1121
      %1339 = vmatpush1.msra.mxu0 %v1120
      %1340 = vmatprep.subr.mxu0 %v1123
      %1341 = vmatpush1.msra.mxu0 %v1122
      %1342 = vmatprep.subr.mxu0 %v1125
      %1343 = vmatpush1.msra.mxu0 %v1124
      %1344 = vmatprep.subr.mxu0 %v1127
      %1345 = vmatpush1.msra.mxu0 %v1126
      %1346 = vmatprep.subr.mxu0 %v1129
      %1347 = vmatpush1.msra.mxu0 %v1128
      %1348 = vmatprep.subr.mxu0 %v1131
      %1349 = vmatpush1.msra.mxu0 %v1130
      %1350 = vmatprep.subr.mxu0 %v1133
      %1351 = vmatpush1.msra.mxu0 %v1132
      %1352 = vmatprep.subr.mxu0 %v1135
      %1353 = vmatpush1.msra.mxu0 %v1134
      %1354 = vmatprep.subr.mxu0 %v1137
      %1355 = vmatpush1.msra.mxu0 %v1136
      %1356 = vmatprep.subr.mxu0 %v1139
      %1357 = vmatpush1.msra.mxu0 %v1138
      %1358 = vmatprep.subr.mxu0 %v1141
      %1359 = vmatpush1.msra.mxu0 %v1140
      %1360 = vmatprep.subr.mxu0 %v1143
      %1361 = vmatpush1.msra.mxu0 %v1142
      %1362 = vmatprep.subr.mxu0 %v1145
      %1363 = vmatpush1.msra.mxu0 %v1144
      %1364 = vmatprep.subr.mxu0 %v1147
      %1365 = vmatpush1.msra.mxu0 %v1146
      %1366 = vmatprep.subr.mxu0 %v1149
      %1367 = vmatpush1.msra.mxu0 %v1148
      %1368 = vmatprep.subr.mxu0 %v1151
      %1369 = vmatpush1.msra.mxu0 %v1150
      %1370 = vmatprep.subr.mxu0 %v1153
      %1371 = vmatpush1.msra.mxu0 %v1152
      %1372 = vmatprep.subr.mxu0 %v1155
      %1373 = vmatpush1.msra.mxu0 %v1154
      %1374 = vmatprep.subr.mxu0 %v1157
      %1375 = vmatpush1.msra.mxu0 %v1156
      %1376 = vmatprep.subr.mxu0 %v1159
      %1377 = vmatpush1.msra.mxu0 %v1158
      %1378 = vmatprep.subr.mxu0 %v1161
      %1379 = vmatpush1.msra.mxu0 %v1160
      %1380 = vmatprep.subr.mxu0 %v1163
      %1381 = vmatpush1.msra.mxu0 %v1162
      %1382 = vmatprep.subr.mxu0 %v1165
      %1383 = vmatpush1.msra.mxu0 %v1164
      %1384 = vmatprep.subr.mxu0 %v1167
      %1385 = vmatpush1.msra.mxu0 %v1166
      %1386 = vmatprep.subr.mxu0 %v1169
      %1387 = vmatpush1.msra.mxu0 %v1168
      %1388 = vmatprep.subr.mxu0 %v1171
      %1389 = vmatpush1.msra.mxu0 %v1170
      %1390 = vmatprep.subr.mxu0 %v1173
      %1391 = vmatpush1.msra.mxu0 %v1172
      %1392 = vmatprep.subr.mxu0 %v1175
      %1393 = vmatpush1.msra.mxu0 %v1174
      %1394 = vmatprep.subr.mxu0 %v1177
      %1395 = vmatpush1.msra.mxu0 %v1176
      %1396 = vmatprep.mubr.f32.mxu0 %v1013
      %1397 = vmatmul.mubr.f32.gmra.mrb[0].mxu0 %v1012
      %v1398 = vpop.f32.mrb[0].mxu0
      %v1399 = vadd.f32 %v1286, %v1398
      %v1400 = vpop.f32.mrb[0].mxu0
      %v1401 = vadd.f32 %v1288, %v1400
      %1402 = vmatprep.mubr.f32.mxu0 %v1018
      %1403 = vmatmul.mubr.f32.gmra.mrb[0].mxu0 %v1017
      %v1404 = vpop.f32.mrb[0].mxu0
      %v1405 = vadd.f32 %v1292, %v1404
      %v1406 = vpop.f32.mrb[0].mxu0
      %v1407 = vadd.f32 %v1294, %v1406
      %1408 = vmatprep.mubr.f32.mxu0 %v1023
      %1409 = vmatmul.mubr.f32.gmra.mrb[0].mxu0 %v1022
      %v1410 = vpop.f32.mrb[0].mxu0
      %v1411 = vadd.f32 %v1298, %v1410
      %v1412 = vpop.f32.mrb[0].mxu0
      %v1413 = vadd.f32 %v1300, %v1412
      %1414 = vmatprep.mubr.f32.mxu0 %v1028
      %1415 = vmatmul.mubr.f32.gmra.mrb[0].mxu0 %v1027
      %v1416 = vpop.f32.mrb[0].mxu0
      %v1417 = vadd.f32 %v1304, %v1416
      %v1418 = vpop.f32.mrb[0].mxu0
      %v1419 = vadd.f32 %v1306, %v1418
      %1420 = vmatprep.mubr.f32.mxu0 %v1033
      %1421 = vmatmul.mubr.f32.gmra.mrb[0].mxu0 %v1032
      %v1422 = vpop.f32.mrb[0].mxu0
      %v1423 = vadd.f32 %v1310, %v1422
      %v1424 = vpop.f32.mrb[0].mxu0
      %v1425 = vadd.f32 %v1312, %v1424
      %1426 = vmatprep.mubr.f32.mxu0 %v1038
      %1427 = vmatmul.mubr.f32.gmra.mrb[0].mxu0 %v1037
      %v1428 = vpop.f32.mrb[0].mxu0
      %v1429 = vadd.f32 %v1316, %v1428
      %v1430 = vpop.f32.mrb[0].mxu0
      %v1431 = vadd.f32 %v1318, %v1430
      %1432 = vmatprep.mubr.f32.mxu0 %v1043
      %1433 = vmatmul.mubr.f32.gmra.mrb[0].mxu0 %v1042
      %v1434 = vpop.f32.mrb[0].mxu0
      %v1435 = vadd.f32 %v1322, %v1434
      %v1436 = vpop.f32.mrb[0].mxu0
      %v1437 = vadd.f32 %v1324, %v1436
      %1438 = vmatprep.mubr.f32.mxu0 %v1048
      %1439 = vmatmul.mubr.f32.gmra.mrb[0].mxu0 %v1047
      %v1440 = vpop.f32.mrb[0].mxu0
      %v1441 = vadd.f32 %v1328, %v1440
      %v1442 = vpop.f32.mrb[0].mxu0
      %v1443 = vadd.f32 %v1330, %v1442
      %1444 = vdwg.mxu0
      %1445 = vmatprep.subr.mxu0 %v1179
      %1446 = vmatpush1.msra.mxu0 %v1178
      %1447 = vmatprep.subr.mxu0 %v1181
      %1448 = vmatpush1.msra.mxu0 %v1180
      %1449 = vmatprep.subr.mxu0 %v1183
      %1450 = vmatpush1.msra.mxu0 %v1182
      %1451 = vmatprep.subr.mxu0 %v1185
      %1452 = vmatpush1.msra.mxu0 %v1184
      %1453 = vmatprep.subr.mxu0 %v1187
      %1454 = vmatpush1.msra.mxu0 %v1186
      %1455 = vmatprep.subr.mxu0 %v1189
      %1456 = vmatpush1.msra.mxu0 %v1188
      %1457 = vmatprep.subr.mxu0 %v1191
      %1458 = vmatpush1.msra.mxu0 %v1190
      %1459 = vmatprep.subr.mxu0 %v1193
      %1460 = vmatpush1.msra.mxu0 %v1192
      %1461 = vmatprep.subr.mxu0 0.0
      %1462 = vmatpush1.msra.mxu0 0.0
      %1463 = vmatprep.subr.mxu0 0.0
      %1464 = vmatpush1.msra.mxu0 0.0
      %1465 = vmatprep.subr.mxu0 0.0
      %1466 = vmatpush1.msra.mxu0 0.0
      %1467 = vmatprep.subr.mxu0 0.0
      %1468 = vmatpush1.msra.mxu0 0.0
      %1469 = vmatprep.subr.mxu0 0.0
      %1470 = vmatpush1.msra.mxu0 0.0
      %1471 = vmatprep.subr.mxu0 0.0
      %1472 = vmatpush1.msra.mxu0 0.0
      %1473 = vmatprep.subr.mxu0 0.0
      %1474 = vmatpush1.msra.mxu0 0.0
      %1475 = vmatprep.subr.mxu0 0.0
      %1476 = vmatpush1.msra.mxu0 0.0
      %1477 = vmatprep.subr.mxu0 0.0
      %1478 = vmatpush1.msra.mxu0 0.0
      %1479 = vmatprep.subr.mxu0 0.0
      %1480 = vmatpush1.msra.mxu0 0.0
      %1481 = vmatprep.subr.mxu0 0.0
      %1482 = vmatpush1.msra.mxu0 0.0
      %1483 = vmatprep.subr.mxu0 0.0
      %1484 = vmatpush1.msra.mxu0 0.0
      %1485 = vmatprep.subr.mxu0 0.0
      %1486 = vmatpush1.msra.mxu0 0.0
      %1487 = vmatprep.subr.mxu0 0.0
      %1488 = vmatpush1.msra.mxu0 0.0
      %1489 = vmatprep.subr.mxu0 0.0
      %1490 = vmatpush1.msra.mxu0 0.0
      %1491 = vmatprep.subr.mxu0 0.0
      %1492 = vmatpush1.msra.mxu0 0.0
      %1493 = vmatprep.subr.mxu0 0.0
      %1494 = vmatpush1.msra.mxu0 0.0
      %1495 = vmatprep.subr.mxu0 0.0
      %1496 = vmatpush1.msra.mxu0 0.0
      %1497 = vmatprep.subr.mxu0 0.0
      %1498 = vmatpush1.msra.mxu0 0.0
      %1499 = vmatprep.subr.mxu0 0.0
      %1500 = vmatpush1.msra.mxu0 0.0
      %1501 = vmatprep.subr.mxu0 0.0
      %1502 = vmatpush1.msra.mxu0 0.0
      %1503 = vmatprep.subr.mxu0 0.0
      %1504 = vmatpush1.msra.mxu0 0.0
      %1505 = vmatprep.subr.mxu0 0.0
      %1506 = vmatpush1.msra.mxu0 0.0
      %1507 = vmatprep.subr.mxu0 0.0
      %1508 = vmatpush1.msra.mxu0 0.0
      %1509 = vmatprep.mubr.f32.mxu0 0.0
      %1510 = vmatmul.mubr.f32.gmra.mrb[0].mxu0 %v1196
      %v1511 = vpop.f32.mrb[0].mxu0
      %v1512 = vadd.f32 %v1399, %v1511
      %v1513 = vpop.f32.mrb[0].mxu0
      %v1514 = vadd.f32 %v1401, %v1513
      %1515 = vmatprep.mubr.f32.mxu0 0.0
      %1516 = vmatmul.mubr.f32.gmra.mrb[0].mxu0 %v1199
      %v1517 = vpop.f32.mrb[0].mxu0
      %v1518 = vadd.f32 %v1405, %v1517
      %v1519 = vpop.f32.mrb[0].mxu0
      %v1520 = vadd.f32 %v1407, %v1519
      %1521 = vmatprep.mubr.f32.mxu0 0.0
      %1522 = vmatmul.mubr.f32.gmra.mrb[0].mxu0 %v1202
      %v1523 = vpop.f32.mrb[0].mxu0
      %v1524 = vadd.f32 %v1411, %v1523
      %v1525 = vpop.f32.mrb[0].mxu0
      %v1526 = vadd.f32 %v1413, %v1525
      %1527 = vmatprep.mubr.f32.mxu0 0.0
      %1528 = vmatmul.mubr.f32.gmra.mrb[0].mxu0 %v1205
      %v1529 = vpop.f32.mrb[0].mxu0
      %v1530 = vadd.f32 %v1417, %v1529
      %v1531 = vpop.f32.mrb[0].mxu0
      %v1532 = vadd.f32 %v1419, %v1531
      %1533 = vmatprep.mubr.f32.mxu0 0.0
      %1534 = vmatmul.mubr.f32.gmra.mrb[0].mxu0 %v1208
      %v1535 = vpop.f32.mrb[0].mxu0
      %v1536 = vadd.f32 %v1423, %v1535
      %v1537 = vpop.f32.mrb[0].mxu0
      %v1538 = vadd.f32 %v1425, %v1537
      %1539 = vmatprep.mubr.f32.mxu0 0.0
      %1540 = vmatmul.mubr.f32.gmra.mrb[0].mxu0 %v1211
      %v1541 = vpop.f32.mrb[0].mxu0
      %v1542 = vadd.f32 %v1429, %v1541
      %v1543 = vpop.f32.mrb[0].mxu0
      %v1544 = vadd.f32 %v1431, %v1543
      %1545 = vmatprep.mubr.f32.mxu0 0.0
      %1546 = vmatmul.mubr.f32.gmra.mrb[0].mxu0 %v1214
      %v1547 = vpop.f32.mrb[0].mxu0
      %v1548 = vadd.f32 %v1435, %v1547
      %v1549 = vpop.f32.mrb[0].mxu0
      %v1550 = vadd.f32 %v1437, %v1549
      %1551 = vmatprep.mubr.f32.mxu0 0.0
      %1552 = vmatmul.mubr.f32.gmra.mrb[0].mxu0 %v1217
      %v1553 = vpop.f32.mrb[0].mxu0
      %v1554 = vadd.f32 %v1441, %v1553
      %v1555 = vpop.f32.mrb[0].mxu0
      %v1556 = vadd.f32 %v1443, %v1555
      %1557 = vdwg.mxu0
      %v1558 = vld [vmem:[%s3] sm:$0xff]
      %v1559 = vld [vmem:[%s3 + $0x8] sm:$0xff]
      %v1560 = vld [vmem:[%s3 + $0x10] sm:$0xff]
      %v1561 = vld [vmem:[%s3 + $0x18] sm:$0xff]
      %v1562 = vld [vmem:[%s3 + $0x20] sm:$0xff]
      %v1563 = vld [vmem:[%s3 + $0x28] sm:$0xff]
      %v1564 = vld [vmem:[%s3 + $0x30] sm:$0xff]
      %v1565 = vld [vmem:[%s3 + $0x38] sm:$0xff]
      %s1566 = scalar_lea.vmem %s3, 64
      %v1567 = vld [vmem:[%s1566] sm:$0xff]
      %v1568 = vld [vmem:[%s1566 + $0x8] sm:$0xff]
      %v1569 = vld [vmem:[%s1566 + $0x10] sm:$0xff]
      %v1570 = vld [vmem:[%s1566 + $0x18] sm:$0xff]
      %v1571 = vld [vmem:[%s1566 + $0x20] sm:$0xff]
      %v1572 = vld [vmem:[%s1566 + $0x28] sm:$0xff]
      %v1573 = vld [vmem:[%s1566 + $0x30] sm:$0xff]
      %v1574 = vld [vmem:[%s1566 + $0x38] sm:$0xff]
      %v1575 = vadd.f32 %v1512, %v1514
      %1576 = vadd.xlane.f32.xlu0 %v1575
      %v1577 = vpop.xlane.xlu0 %1576
      %v1578 = vadd.f32 %v1518, %v1520
      %1579 = vadd.xlane.f32.xlu0 %v1578
      %v1580 = vpop.xlane.xlu0 %1579
      %v1581 = vadd.f32 %v1524, %v1526
      %1582 = vadd.xlane.f32.xlu0 %v1581
      %v1583 = vpop.xlane.xlu0 %1582
      %v1584 = vadd.f32 %v1530, %v1532
      %1585 = vadd.xlane.f32.xlu0 %v1584
      %v1586 = vpop.xlane.xlu0 %1585
      %v1587 = vadd.f32 %v1536, %v1538
      %1588 = vadd.xlane.f32.xlu0 %v1587
      %v1589 = vpop.xlane.xlu0 %1588
      %v1590 = vadd.f32 %v1542, %v1544
      %1591 = vadd.xlane.f32.xlu0 %v1590
      %v1592 = vpop.xlane.xlu0 %1591
      %v1593 = vadd.f32 %v1548, %v1550
      %1594 = vadd.xlane.f32.xlu0 %v1593
      %v1595 = vpop.xlane.xlu0 %1594
      %v1596 = vadd.f32 %v1554, %v1556
      %1597 = vadd.xlane.f32.xlu0 %v1596
      %v1598 = vpop.xlane.xlu0 %1597
      %v1599 = vrcp.pop 256.0
      %v1600 = vmul.f32 %v1577, %v1599
      %v1601 = vmul.f32 %v1580, %v1599
      %v1602 = vmul.f32 %v1583, %v1599
      %v1603 = vmul.f32 %v1586, %v1599
      %v1604 = vmul.f32 %v1589, %v1599
      %v1605 = vmul.f32 %v1592, %v1599
      %v1606 = vmul.f32 %v1595, %v1599
      %v1607 = vmul.f32 %v1598, %v1599
      %v1608 = vsub.f32 %v1512, %v1600
      %v1609 = vsub.f32 %v1514, %v1600
      %v1610 = vsub.f32 %v1518, %v1601
      %v1611 = vsub.f32 %v1520, %v1601
      %v1612 = vsub.f32 %v1524, %v1602
      %v1613 = vsub.f32 %v1526, %v1602
      %v1614 = vsub.f32 %v1530, %v1603
      %v1615 = vsub.f32 %v1532, %v1603
      %v1616 = vsub.f32 %v1536, %v1604
      %v1617 = vsub.f32 %v1538, %v1604
      %v1618 = vsub.f32 %v1542, %v1605
      %v1619 = vsub.f32 %v1544, %v1605
      %v1620 = vsub.f32 %v1548, %v1606
      %v1621 = vsub.f32 %v1550, %v1606
      %v1622 = vsub.f32 %v1554, %v1607
      %v1623 = vsub.f32 %v1556, %v1607
      %v1624 = vmul.f32 %v1608, %v1608
      %v1625 = vmul.f32 %v1609, %v1609
      %v1626 = vmul.f32 %v1610, %v1610
      %v1627 = vmul.f32 %v1611, %v1611
      %v1628 = vmul.f32 %v1612, %v1612
      %v1629 = vmul.f32 %v1613, %v1613
      %v1630 = vmul.f32 %v1614, %v1614
      %v1631 = vmul.f32 %v1615, %v1615
      %v1632 = vmul.f32 %v1616, %v1616
      %v1633 = vmul.f32 %v1617, %v1617
      %v1634 = vmul.f32 %v1618, %v1618
      %v1635 = vmul.f32 %v1619, %v1619
      %v1636 = vmul.f32 %v1620, %v1620
      %v1637 = vmul.f32 %v1621, %v1621
      %v1638 = vmul.f32 %v1622, %v1622
      %v1639 = vmul.f32 %v1623, %v1623
      %v1640 = vadd.f32 %v1624, %v1625
      %1641 = vadd.xlane.f32.xlu0 %v1640
      %v1642 = vpop.xlane.xlu0 %1641
      %v1643 = vadd.f32 %v1626, %v1627
      %1644 = vadd.xlane.f32.xlu0 %v1643
      %v1645 = vpop.xlane.xlu0 %1644
      %v1646 = vadd.f32 %v1628, %v1629
      %1647 = vadd.xlane.f32.xlu0 %v1646
      %v1648 = vpop.xlane.xlu0 %1647
      %v1649 = vadd.f32 %v1630, %v1631
      %1650 = vadd.xlane.f32.xlu0 %v1649
      %v1651 = vpop.xlane.xlu0 %1650
      %v1652 = vadd.f32 %v1632, %v1633
      %1653 = vadd.xlane.f32.xlu0 %v1652
      %v1654 = vpop.xlane.xlu0 %1653
      %v1655 = vadd.f32 %v1634, %v1635
      %1656 = vadd.xlane.f32.xlu0 %v1655
      %v1657 = vpop.xlane.xlu0 %1656
      %v1658 = vadd.f32 %v1636, %v1637
      %1659 = vadd.xlane.f32.xlu0 %v1658
      %v1660 = vpop.xlane.xlu0 %1659
      %v1661 = vadd.f32 %v1638, %v1639
      %1662 = vadd.xlane.f32.xlu0 %v1661
      %v1663 = vpop.xlane.xlu0 %1662
      %v1664 = vmul.f32 %v1642, %v1599
      %v1665 = vmul.f32 %v1645, %v1599
      %v1666 = vmul.f32 %v1648, %v1599
      %v1667 = vmul.f32 %v1651, %v1599
      %v1668 = vmul.f32 %v1654, %v1599
      %v1669 = vmul.f32 %v1657, %v1599
      %v1670 = vmul.f32 %v1660, %v1599
      %v1671 = vmul.f32 %v1663, %v1599
      %v1672 = vadd.f32 %v1664, 1e-05
      %v1673 = vadd.f32 %v1665, 1e-05
      %v1674 = vadd.f32 %v1666, 1e-05
      %v1675 = vadd.f32 %v1667, 1e-05
      %v1676 = vadd.f32 %v1668, 1e-05
      %v1677 = vadd.f32 %v1669, 1e-05
      %v1678 = vadd.f32 %v1670, 1e-05
      %v1679 = vadd.f32 %v1671, 1e-05
      %v1680 = vrsqrt.pop %v1672
      %v1681 = vrsqrt.pop %v1673
      %v1682 = vrsqrt.pop %v1674
      %v1683 = vrsqrt.pop %v1675
      %v1684 = vrsqrt.pop %v1676
      %v1685 = vrsqrt.pop %v1677
      %v1686 = vrsqrt.pop %v1678
      %v1687 = vrsqrt.pop %v1679
      %v1688 = vmul.f32 %v1608, %v1680
      %v1689 = vmul.f32 %v1609, %v1680
      %v1690 = vmul.f32 %v1610, %v1681
      %v1691 = vmul.f32 %v1611, %v1681
      %v1692 = vmul.f32 %v1612, %v1682
      %v1693 = vmul.f32 %v1613, %v1682
      %v1694 = vmul.f32 %v1614, %v1683
      %v1695 = vmul.f32 %v1615, %v1683
      %v1696 = vmul.f32 %v1616, %v1684
      %v1697 = vmul.f32 %v1617, %v1684
      %v1698 = vmul.f32 %v1618, %v1685
      %v1699 = vmul.f32 %v1619, %v1685
      %v1700 = vmul.f32 %v1620, %v1686
      %v1701 = vmul.f32 %v1621, %v1686
      %v1702 = vmul.f32 %v1622, %v1687
      %v1703 = vmul.f32 %v1623, %v1687
      %1705 = vset.pattern.permute.xlu0 0
      %1706 = vperm.xlu0 %1705, %v1558
      %v1707 = vpop.permute.xlu0 %1706
      %1710 = vset.pattern.permute.xlu0 0
      %1711 = vperm.xlu0 %1710, %v1559
      %v1712 = vpop.permute.xlu0 %1711
      %1715 = vset.pattern.permute.xlu0 0
      %1716 = vperm.xlu0 %1715, %v1560
      %v1717 = vpop.permute.xlu0 %1716
      %1720 = vset.pattern.permute.xlu0 0
      %1721 = vperm.xlu0 %1720, %v1561
      %v1722 = vpop.permute.xlu0 %1721
      %1725 = vset.pattern.permute.xlu0 0
      %1726 = vperm.xlu0 %1725, %v1562
      %v1727 = vpop.permute.xlu0 %1726
      %1730 = vset.pattern.permute.xlu0 0
      %1731 = vperm.xlu0 %1730, %v1563
      %v1732 = vpop.permute.xlu0 %1731
      %1735 = vset.pattern.permute.xlu0 0
      %1736 = vperm.xlu0 %1735, %v1564
      %v1737 = vpop.permute.xlu0 %1736
      %1740 = vset.pattern.permute.xlu0 0
      %1741 = vperm.xlu0 %1740, %v1565
      %v1742 = vpop.permute.xlu0 %1741
      %v1744 = vmul.f32 %v1688, %v1707
      %v1745 = vmul.f32 %v1689, %v1707
      %v1746 = vmul.f32 %v1690, %v1712
      %v1747 = vmul.f32 %v1691, %v1712
      %v1748 = vmul.f32 %v1692, %v1717
      %v1749 = vmul.f32 %v1693, %v1717
      %v1750 = vmul.f32 %v1694, %v1722
      %v1751 = vmul.f32 %v1695, %v1722
      %v1752 = vmul.f32 %v1696, %v1727
      %v1753 = vmul.f32 %v1697, %v1727
      %v1754 = vmul.f32 %v1698, %v1732
      %v1755 = vmul.f32 %v1699, %v1732
      %v1756 = vmul.f32 %v1700, %v1737
      %v1757 = vmul.f32 %v1701, %v1737
      %v1758 = vmul.f32 %v1702, %v1742
      %v1759 = vmul.f32 %v1703, %v1742
      %1761 = vset.pattern.permute.xlu0 0
      %1762 = vperm.xlu0 %1761, %v1567
      %v1763 = vpop.permute.xlu0 %1762
      %1766 = vset.pattern.permute.xlu0 0
      %1767 = vperm.xlu0 %1766, %v1568
      %v1768 = vpop.permute.xlu0 %1767
      %1771 = vset.pattern.permute.xlu0 0
      %1772 = vperm.xlu0 %1771, %v1569
      %v1773 = vpop.permute.xlu0 %1772
      %1776 = vset.pattern.permute.xlu0 0
      %1777 = vperm.xlu0 %1776, %v1570
      %v1778 = vpop.permute.xlu0 %1777
      %1781 = vset.pattern.permute.xlu0 0
      %1782 = vperm.xlu0 %1781, %v1571
      %v1783 = vpop.permute.xlu0 %1782
      %1786 = vset.pattern.permute.xlu0 0
      %1787 = vperm.xlu0 %1786, %v1572
      %v1788 = vpop.permute.xlu0 %1787
      %1791 = vset.pattern.permute.xlu0 0
      %1792 = vperm.xlu0 %1791, %v1573
      %v1793 = vpop.permute.xlu0 %1792
      %1796 = vset.pattern.permute.xlu0 0
      %1797 = vperm.xlu0 %1796, %v1574
      %v1798 = vpop.permute.xlu0 %1797
      %v1800 = vadd.f32 %v1744, %v1763
      %v1801 = vadd.f32 %v1745, %v1763
      %v1802 = vadd.f32 %v1746, %v1768
      %v1803 = vadd.f32 %v1747, %v1768
      %v1804 = vadd.f32 %v1748, %v1773
      %v1805 = vadd.f32 %v1749, %v1773
      %v1806 = vadd.f32 %v1750, %v1778
      %v1807 = vadd.f32 %v1751, %v1778
      %v1808 = vadd.f32 %v1752, %v1783
      %v1809 = vadd.f32 %v1753, %v1783
      %v1810 = vadd.f32 %v1754, %v1788
      %v1811 = vadd.f32 %v1755, %v1788
      %v1812 = vadd.f32 %v1756, %v1793
      %v1813 = vadd.f32 %v1757, %v1793
      %v1814 = vadd.f32 %v1758, %v1798
      %v1815 = vadd.f32 %v1759, %v1798
      %v1816 = vmax.f32 %v1800, 0.0
      %v1817 = vmax.f32 %v1801, 0.0
      %v1818 = vmax.f32 %v1802, 0.0
      %v1819 = vmax.f32 %v1803, 0.0
      %v1820 = vmax.f32 %v1804, 0.0
      %v1821 = vmax.f32 %v1805, 0.0
      %v1822 = vmax.f32 %v1806, 0.0
      %v1823 = vmax.f32 %v1807, 0.0
      %v1824 = vmax.f32 %v1808, 0.0
      %v1825 = vmax.f32 %v1809, 0.0
      %v1826 = vmax.f32 %v1810, 0.0
      %v1827 = vmax.f32 %v1811, 0.0
      %v1828 = vmax.f32 %v1812, 0.0
      %v1829 = vmax.f32 %v1813, 0.0
      %v1830 = vmax.f32 %v1814, 0.0
      %v1831 = vmax.f32 %v1815, 0.0
      %1832 = vrot.lane.b32.xlu0 %v1816, 17
      %v1833 = vpop.permute.xlu0 %1832
      %1834 = vrot.lane.b32.xlu0 %v1818, 17
      %v1835 = vpop.permute.xlu0 %1834
      %1836 = vrot.lane.b32.xlu0 %v1820, 17
      %v1837 = vpop.permute.xlu0 %1836
      %1838 = vrot.lane.b32.xlu0 %v1822, 17
      %v1839 = vpop.permute.xlu0 %1838
      %1840 = vrot.lane.b32.xlu0 %v1824, 17
      %v1841 = vpop.permute.xlu0 %1840
      %1842 = vrot.lane.b32.xlu0 %v1826, 17
      %v1843 = vpop.permute.xlu0 %1842
      %1844 = vrot.lane.b32.xlu0 %v1828, 17
      %v1845 = vpop.permute.xlu0 %1844
      %1846 = vrot.lane.b32.xlu0 %v1830, 17
      %v1847 = vpop.permute.xlu0 %1846
      %1848 = vrot.lane.b32.xlu0 %v1817, 17
      %v1849 = vpop.permute.xlu0 %1848
      %1850 = vrot.lane.b32.xlu0 %v1819, 17
      %v1851 = vpop.permute.xlu0 %1850
      %1852 = vrot.lane.b32.xlu0 %v1821, 17
      %v1853 = vpop.permute.xlu0 %1852
      %1854 = vrot.lane.b32.xlu0 %v1823, 17
      %v1855 = vpop.permute.xlu0 %1854
      %1856 = vrot.lane.b32.xlu0 %v1825, 17
      %v1857 = vpop.permute.xlu0 %1856
      %1858 = vrot.lane.b32.xlu0 %v1827, 17
      %v1859 = vpop.permute.xlu0 %1858
      %1860 = vrot.lane.b32.xlu0 %v1829, 17
      %v1861 = vpop.permute.xlu0 %1860
      %1862 = vrot.lane.b32.xlu0 %v1831, 17
      %v1863 = vpop.permute.xlu0 %1862
      %v1864 = vsel %vm275, %v1833, %v1849
      %v1865 = vsel %vm275, %v1835, %v1851
      %v1866 = vsel %vm275, %v1837, %v1853
      %v1867 = vsel %vm275, %v1839, %v1855
      %v1868 = vsel %vm275, %v1841, %v1857
      %v1869 = vsel %vm275, %v1843, %v1859
      %v1870 = vsel %vm275, %v1845, %v1861
      %v1871 = vsel %vm275, %v1847, %v1863
      %v1872 = vsel %vm275, %v1849, %v1833
      %v1873 = vsel %vm275, %v1851, %v1835
      %v1874 = vsel %vm275, %v1853, %v1837
      %v1875 = vsel %vm275, %v1855, %v1839
      %v1876 = vsel %vm275, %v1857, %v1841
      %v1877 = vsel %vm275, %v1859, %v1843
      %v1878 = vsel %vm275, %v1861, %v1845
      %v1879 = vsel %vm275, %v1863, %v1847
      %v1880 = vld [vmem:[%s4] ss:$8 sm:$0x3]
      %v1882 = vlaneseq
      %v1883 = vshrl.u32 %v1882, 7
      %v1884 = vsub.s32 0, %v1883
      %v1885 = vrot.slane %v1880, %v1884
      %v1886 = vlaneseq
      %v1887 = vshrl.u32 %v1886, 7
      %v1888 = vsub.s32 1, %v1887
      %v1889 = vrot.slane %v1880, %v1888
      %v1892 = vmul.f32 %v1872, %v1885
      %v1893 = vmul.f32 %v1864, %v1889
      %v1894 = vmul.f32 %v1873, %v1885
      %v1895 = vmul.f32 %v1865, %v1889
      %v1896 = vmul.f32 %v1874, %v1885
      %v1897 = vmul.f32 %v1866, %v1889
      %v1898 = vmul.f32 %v1875, %v1885
      %v1899 = vmul.f32 %v1867, %v1889
      %v1900 = vmul.f32 %v1876, %v1885
      %v1901 = vmul.f32 %v1868, %v1889
      %v1902 = vmul.f32 %v1877, %v1885
      %v1903 = vmul.f32 %v1869, %v1889
      %v1904 = vmul.f32 %v1878, %v1885
      %v1905 = vmul.f32 %v1870, %v1889
      %v1906 = vmul.f32 %v1879, %v1885
      %v1907 = vmul.f32 %v1871, %v1889
      %1908 = vst [vmem:[#allocation2] sm:$0xff] %v1892
      %1909 = vst [vmem:[#allocation2 + $0x8] sm:$0xff] %v1893
      %1910 = vst [vmem:[#allocation2 + $0x10] sm:$0xff] %v1894
      %1911 = vst [vmem:[#allocation2 + $0x18] sm:$0xff] %v1895
      %1912 = vst [vmem:[#allocation2 + $0x20] sm:$0xff] %v1896
      %1913 = vst [vmem:[#allocation2 + $0x28] sm:$0xff] %v1897
      %1914 = vst [vmem:[#allocation2 + $0x30] sm:$0xff] %v1898
      %1915 = vst [vmem:[#allocation2 + $0x38] sm:$0xff] %v1899
      %1916 = vst [vmem:[#allocation2 + $0x40] sm:$0xff] %v1900
      %1917 = vst [vmem:[#allocation2 + $0x48] sm:$0xff] %v1901
      %1918 = vst [vmem:[#allocation2 + $0x50] sm:$0xff] %v1902
      %1919 = vst [vmem:[#allocation2 + $0x58] sm:$0xff] %v1903
      %1920 = vst [vmem:[#allocation2 + $0x60] sm:$0xff] %v1904
      %1921 = vst [vmem:[#allocation2 + $0x68] sm:$0xff] %v1905
      %1922 = vst [vmem:[#allocation2 + $0x70] sm:$0xff] %v1906
      %1923 = vst [vmem:[#allocation2 + $0x78] sm:$0xff] %v1907
      %1924 = vrot.lane.b32.xlu0 %v1816, 16
      %v1925 = vpop.permute.xlu0 %1924
      %1926 = vrot.lane.b32.xlu0 %v1818, 16
      %v1927 = vpop.permute.xlu0 %1926
      %1928 = vrot.lane.b32.xlu0 %v1820, 16
      %v1929 = vpop.permute.xlu0 %1928
      %1930 = vrot.lane.b32.xlu0 %v1822, 16
      %v1931 = vpop.permute.xlu0 %1930
      %1932 = vrot.lane.b32.xlu0 %v1824, 16
      %v1933 = vpop.permute.xlu0 %1932
      %1934 = vrot.lane.b32.xlu0 %v1826, 16
      %v1935 = vpop.permute.xlu0 %1934
      %1936 = vrot.lane.b32.xlu0 %v1828, 16
      %v1937 = vpop.permute.xlu0 %1936
      %1938 = vrot.lane.b32.xlu0 %v1830, 16
      %v1939 = vpop.permute.xlu0 %1938
      %1940 = vrot.lane.b32.xlu0 %v1817, 16
      %v1941 = vpop.permute.xlu0 %1940
      %1942 = vrot.lane.b32.xlu0 %v1819, 16
      %v1943 = vpop.permute.xlu0 %1942
      %1944 = vrot.lane.b32.xlu0 %v1821, 16
      %v1945 = vpop.permute.xlu0 %1944
      %1946 = vrot.lane.b32.xlu0 %v1823, 16
      %v1947 = vpop.permute.xlu0 %1946
      %1948 = vrot.lane.b32.xlu0 %v1825, 16
      %v1949 = vpop.permute.xlu0 %1948
      %1950 = vrot.lane.b32.xlu0 %v1827, 16
      %v1951 = vpop.permute.xlu0 %1950
      %1952 = vrot.lane.b32.xlu0 %v1829, 16
      %v1953 = vpop.permute.xlu0 %1952
      %1954 = vrot.lane.b32.xlu0 %v1831, 16
      %v1955 = vpop.permute.xlu0 %1954
      %v1956 = vsel %vm368, %v1925, %v1941
      %v1957 = vsel %vm368, %v1927, %v1943
      %v1958 = vsel %vm368, %v1929, %v1945
      %v1959 = vsel %vm368, %v1931, %v1947
      %v1960 = vsel %vm368, %v1933, %v1949
      %v1961 = vsel %vm368, %v1935, %v1951
      %v1962 = vsel %vm368, %v1937, %v1953
      %v1963 = vsel %vm368, %v1939, %v1955
      %v1964 = vsel %vm368, %v1941, %v1925
      %v1965 = vsel %vm368, %v1943, %v1927
      %v1966 = vsel %vm368, %v1945, %v1929
      %v1967 = vsel %vm368, %v1947, %v1931
      %v1968 = vsel %vm368, %v1949, %v1933
      %v1969 = vsel %vm368, %v1951, %v1935
      %v1970 = vsel %vm368, %v1953, %v1937
      %v1971 = vsel %vm368, %v1955, %v1939
      %v1972 = vld [vmem:[%s385] ss:$8 sm:$0x3]
      %v1974 = vlaneseq
      %v1975 = vshrl.u32 %v1974, 7
      %v1976 = vsub.s32 0, %v1975
      %v1977 = vrot.slane %v1972, %v1976
      %v1978 = vlaneseq
      %v1979 = vshrl.u32 %v1978, 7
      %v1980 = vsub.s32 1, %v1979
      %v1981 = vrot.slane %v1972, %v1980
      %v1984 = vmul.f32 %v1964, %v1977
      %v1985 = vmul.f32 %v1956, %v1981
      %v1986 = vmul.f32 %v1965, %v1977
      %v1987 = vmul.f32 %v1957, %v1981
      %v1988 = vmul.f32 %v1966, %v1977
      %v1989 = vmul.f32 %v1958, %v1981
      %v1990 = vmul.f32 %v1967, %v1977
      %v1991 = vmul.f32 %v1959, %v1981
      %v1992 = vmul.f32 %v1968, %v1977
      %v1993 = vmul.f32 %v1960, %v1981
      %v1994 = vmul.f32 %v1969, %v1977
      %v1995 = vmul.f32 %v1961, %v1981
      %v1996 = vmul.f32 %v1970, %v1977
      %v1997 = vmul.f32 %v1962, %v1981
      %v1998 = vmul.f32 %v1971, %v1977
      %v1999 = vmul.f32 %v1963, %v1981
      %2000 = vst [vmem:[#allocation2 + $0x80] sm:$0xff] %v1984
      %2001 = vst [vmem:[#allocation2 + $0x88] sm:$0xff] %v1985
      %2002 = vst [vmem:[#allocation2 + $0x90] sm:$0xff] %v1986
      %2003 = vst [vmem:[#allocation2 + $0x98] sm:$0xff] %v1987
      %2004 = vst [vmem:[#allocation2 + $0xa0] sm:$0xff] %v1988
      %2005 = vst [vmem:[#allocation2 + $0xa8] sm:$0xff] %v1989
      %2006 = vst [vmem:[#allocation2 + $0xb0] sm:$0xff] %v1990
      %2007 = vst [vmem:[#allocation2 + $0xb8] sm:$0xff] %v1991
      %2008 = vst [vmem:[#allocation2 + $0xc0] sm:$0xff] %v1992
      %2009 = vst [vmem:[#allocation2 + $0xc8] sm:$0xff] %v1993
      %2010 = vst [vmem:[#allocation2 + $0xd0] sm:$0xff] %v1994
      %2011 = vst [vmem:[#allocation2 + $0xd8] sm:$0xff] %v1995
      %2012 = vst [vmem:[#allocation2 + $0xe0] sm:$0xff] %v1996
      %2013 = vst [vmem:[#allocation2 + $0xe8] sm:$0xff] %v1997
      %2014 = vst [vmem:[#allocation2 + $0xf0] sm:$0xff] %v1998
      %2015 = vst [vmem:[#allocation2 + $0xf8] sm:$0xff] %v1999
      %2016 = vrot.lane.b32.xlu0 %v1816, 15
      %v2017 = vpop.permute.xlu0 %2016
      %2018 = vrot.lane.b32.xlu0 %v1818, 15
      %v2019 = vpop.permute.xlu0 %2018
      %2020 = vrot.lane.b32.xlu0 %v1820, 15
      %v2021 = vpop.permute.xlu0 %2020
      %2022 = vrot.lane.b32.xlu0 %v1822, 15
      %v2023 = vpop.permute.xlu0 %2022
      %2024 = vrot.lane.b32.xlu0 %v1824, 15
      %v2025 = vpop.permute.xlu0 %2024
      %2026 = vrot.lane.b32.xlu0 %v1826, 15
      %v2027 = vpop.permute.xlu0 %2026
      %2028 = vrot.lane.b32.xlu0 %v1828, 15
      %v2029 = vpop.permute.xlu0 %2028
      %2030 = vrot.lane.b32.xlu0 %v1830, 15
      %v2031 = vpop.permute.xlu0 %2030
      %2032 = vrot.lane.b32.xlu0 %v1817, 15
      %v2033 = vpop.permute.xlu0 %2032
      %2034 = vrot.lane.b32.xlu0 %v1819, 15
      %v2035 = vpop.permute.xlu0 %2034
      %2036 = vrot.lane.b32.xlu0 %v1821, 15
      %v2037 = vpop.permute.xlu0 %2036
      %2038 = vrot.lane.b32.xlu0 %v1823, 15
      %v2039 = vpop.permute.xlu0 %2038
      %2040 = vrot.lane.b32.xlu0 %v1825, 15
      %v2041 = vpop.permute.xlu0 %2040
      %2042 = vrot.lane.b32.xlu0 %v1827, 15
      %v2043 = vpop.permute.xlu0 %2042
      %2044 = vrot.lane.b32.xlu0 %v1829, 15
      %v2045 = vpop.permute.xlu0 %2044
      %2046 = vrot.lane.b32.xlu0 %v1831, 15
      %v2047 = vpop.permute.xlu0 %2046
      %v2048 = vsel %vm462, %v2017, %v2033
      %v2049 = vsel %vm462, %v2019, %v2035
      %v2050 = vsel %vm462, %v2021, %v2037
      %v2051 = vsel %vm462, %v2023, %v2039
      %v2052 = vsel %vm462, %v2025, %v2041
      %v2053 = vsel %vm462, %v2027, %v2043
      %v2054 = vsel %vm462, %v2029, %v2045
      %v2055 = vsel %vm462, %v2031, %v2047
      %v2056 = vsel %vm462, %v2033, %v2017
      %v2057 = vsel %vm462, %v2035, %v2019
      %v2058 = vsel %vm462, %v2037, %v2021
      %v2059 = vsel %vm462, %v2039, %v2023
      %v2060 = vsel %vm462, %v2041, %v2025
      %v2061 = vsel %vm462, %v2043, %v2027
      %v2062 = vsel %vm462, %v2045, %v2029
      %v2063 = vsel %vm462, %v2047, %v2031
      %v2064 = vld [vmem:[%s479] ss:$8 sm:$0x3]
      %v2066 = vlaneseq
      %v2067 = vshrl.u32 %v2066, 7
      %v2068 = vsub.s32 0, %v2067
      %v2069 = vrot.slane %v2064, %v2068
      %v2070 = vlaneseq
      %v2071 = vshrl.u32 %v2070, 7
      %v2072 = vsub.s32 1, %v2071
      %v2073 = vrot.slane %v2064, %v2072
      %v2076 = vmul.f32 %v2056, %v2069
      %v2077 = vmul.f32 %v2048, %v2073
      %v2078 = vmul.f32 %v2057, %v2069
      %v2079 = vmul.f32 %v2049, %v2073
      %v2080 = vmul.f32 %v2058, %v2069
      %v2081 = vmul.f32 %v2050, %v2073
      %v2082 = vmul.f32 %v2059, %v2069
      %v2083 = vmul.f32 %v2051, %v2073
      %v2084 = vmul.f32 %v2060, %v2069
      %v2085 = vmul.f32 %v2052, %v2073
      %v2086 = vmul.f32 %v2061, %v2069
      %v2087 = vmul.f32 %v2053, %v2073
      %v2088 = vmul.f32 %v2062, %v2069
      %v2089 = vmul.f32 %v2054, %v2073
      %v2090 = vmul.f32 %v2063, %v2069
      %v2091 = vmul.f32 %v2055, %v2073
      %2092 = vst [vmem:[#allocation2 + $0x100] sm:$0xff] %v2076
      %2093 = vst [vmem:[#allocation2 + $0x108] sm:$0xff] %v2077
      %2094 = vst [vmem:[#allocation2 + $0x110] sm:$0xff] %v2078
      %2095 = vst [vmem:[#allocation2 + $0x118] sm:$0xff] %v2079
      %2096 = vst [vmem:[#allocation2 + $0x120] sm:$0xff] %v2080
      %2097 = vst [vmem:[#allocation2 + $0x128] sm:$0xff] %v2081
      %2098 = vst [vmem:[#allocation2 + $0x130] sm:$0xff] %v2082
      %2099 = vst [vmem:[#allocation2 + $0x138] sm:$0xff] %v2083
      %2100 = vst [vmem:[#allocation2 + $0x140] sm:$0xff] %v2084
      %2101 = vst [vmem:[#allocation2 + $0x148] sm:$0xff] %v2085
      %2102 = vst [vmem:[#allocation2 + $0x150] sm:$0xff] %v2086
      %2103 = vst [vmem:[#allocation2 + $0x158] sm:$0xff] %v2087
      %2104 = vst [vmem:[#allocation2 + $0x160] sm:$0xff] %v2088
      %2105 = vst [vmem:[#allocation2 + $0x168] sm:$0xff] %v2089
      %2106 = vst [vmem:[#allocation2 + $0x170] sm:$0xff] %v2090
      %2107 = vst [vmem:[#allocation2 + $0x178] sm:$0xff] %v2091
      %2108 = vrot.lane.b32.xlu0 %v1816, 1
      %v2109 = vpop.permute.xlu0 %2108
      %2110 = vrot.lane.b32.xlu0 %v1818, 1
      %v2111 = vpop.permute.xlu0 %2110
      %2112 = vrot.lane.b32.xlu0 %v1820, 1
      %v2113 = vpop.permute.xlu0 %2112
      %2114 = vrot.lane.b32.xlu0 %v1822, 1
      %v2115 = vpop.permute.xlu0 %2114
      %2116 = vrot.lane.b32.xlu0 %v1824, 1
      %v2117 = vpop.permute.xlu0 %2116
      %2118 = vrot.lane.b32.xlu0 %v1826, 1
      %v2119 = vpop.permute.xlu0 %2118
      %2120 = vrot.lane.b32.xlu0 %v1828, 1
      %v2121 = vpop.permute.xlu0 %2120
      %2122 = vrot.lane.b32.xlu0 %v1830, 1
      %v2123 = vpop.permute.xlu0 %2122
      %2124 = vrot.lane.b32.xlu0 %v1817, 1
      %v2125 = vpop.permute.xlu0 %2124
      %2126 = vrot.lane.b32.xlu0 %v1819, 1
      %v2127 = vpop.permute.xlu0 %2126
      %2128 = vrot.lane.b32.xlu0 %v1821, 1
      %v2129 = vpop.permute.xlu0 %2128
      %2130 = vrot.lane.b32.xlu0 %v1823, 1
      %v2131 = vpop.permute.xlu0 %2130
      %2132 = vrot.lane.b32.xlu0 %v1825, 1
      %v2133 = vpop.permute.xlu0 %2132
      %2134 = vrot.lane.b32.xlu0 %v1827, 1
      %v2135 = vpop.permute.xlu0 %2134
      %2136 = vrot.lane.b32.xlu0 %v1829, 1
      %v2137 = vpop.permute.xlu0 %2136
      %2138 = vrot.lane.b32.xlu0 %v1831, 1
      %v2139 = vpop.permute.xlu0 %2138
      %v2140 = vsel %vm556, %v2109, %v2125
      %v2141 = vsel %vm556, %v2111, %v2127
      %v2142 = vsel %vm556, %v2113, %v2129
      %v2143 = vsel %vm556, %v2115, %v2131
      %v2144 = vsel %vm556, %v2117, %v2133
      %v2145 = vsel %vm556, %v2119, %v2135
      %v2146 = vsel %vm556, %v2121, %v2137
      %v2147 = vsel %vm556, %v2123, %v2139
      %v2148 = vsel %vm556, %v2125, %v2109
      %v2149 = vsel %vm556, %v2127, %v2111
      %v2150 = vsel %vm556, %v2129, %v2113
      %v2151 = vsel %vm556, %v2131, %v2115
      %v2152 = vsel %vm556, %v2133, %v2117
      %v2153 = vsel %vm556, %v2135, %v2119
      %v2154 = vsel %vm556, %v2137, %v2121
      %v2155 = vsel %vm556, %v2139, %v2123
      %v2156 = vld [vmem:[%s573] ss:$8 sm:$0x3]
      %v2158 = vlaneseq
      %v2159 = vshrl.u32 %v2158, 7
      %v2160 = vsub.s32 0, %v2159
      %v2161 = vrot.slane %v2156, %v2160
      %v2162 = vlaneseq
      %v2163 = vshrl.u32 %v2162, 7
      %v2164 = vsub.s32 1, %v2163
      %v2165 = vrot.slane %v2156, %v2164
      %v2168 = vmul.f32 %v2148, %v2161
      %v2169 = vmul.f32 %v2140, %v2165
      %v2170 = vmul.f32 %v2149, %v2161
      %v2171 = vmul.f32 %v2141, %v2165
      %v2172 = vmul.f32 %v2150, %v2161
      %v2173 = vmul.f32 %v2142, %v2165
      %v2174 = vmul.f32 %v2151, %v2161
      %v2175 = vmul.f32 %v2143, %v2165
      %v2176 = vmul.f32 %v2152, %v2161
      %v2177 = vmul.f32 %v2144, %v2165
      %v2178 = vmul.f32 %v2153, %v2161
      %v2179 = vmul.f32 %v2145, %v2165
      %v2180 = vmul.f32 %v2154, %v2161
      %v2181 = vmul.f32 %v2146, %v2165
      %v2182 = vmul.f32 %v2155, %v2161
      %v2183 = vmul.f32 %v2147, %v2165
      %2184 = vst [vmem:[#allocation2 + $0x180] sm:$0xff] %v2168
      %2185 = vst [vmem:[#allocation2 + $0x188] sm:$0xff] %v2169
      %2186 = vst [vmem:[#allocation2 + $0x190] sm:$0xff] %v2170
      %2187 = vst [vmem:[#allocation2 + $0x198] sm:$0xff] %v2171
      %2188 = vst [vmem:[#allocation2 + $0x1a0] sm:$0xff] %v2172
      %2189 = vst [vmem:[#allocation2 + $0x1a8] sm:$0xff] %v2173
      %2190 = vst [vmem:[#allocation2 + $0x1b0] sm:$0xff] %v2174
      %2191 = vst [vmem:[#allocation2 + $0x1b8] sm:$0xff] %v2175
      %2192 = vst [vmem:[#allocation2 + $0x1c0] sm:$0xff] %v2176
      %2193 = vst [vmem:[#allocation2 + $0x1c8] sm:$0xff] %v2177
      %2194 = vst [vmem:[#allocation2 + $0x1d0] sm:$0xff] %v2178
      %2195 = vst [vmem:[#allocation2 + $0x1d8] sm:$0xff] %v2179
      %2196 = vst [vmem:[#allocation2 + $0x1e0] sm:$0xff] %v2180
      %2197 = vst [vmem:[#allocation2 + $0x1e8] sm:$0xff] %v2181
      %2198 = vst [vmem:[#allocation2 + $0x1f0] sm:$0xff] %v2182
      %2199 = vst [vmem:[#allocation2 + $0x1f8] sm:$0xff] %v2183
      %2200 = vst [vmem:[#allocation2 + $0x200] sm:$0xff] %v1816
      %2201 = vst [vmem:[#allocation2 + $0x208] sm:$0xff] %v1817
      %2202 = vst [vmem:[#allocation2 + $0x210] sm:$0xff] %v1818
      %2203 = vst [vmem:[#allocation2 + $0x218] sm:$0xff] %v1819
      %2204 = vst [vmem:[#allocation2 + $0x220] sm:$0xff] %v1820
      %2205 = vst [vmem:[#allocation2 + $0x228] sm:$0xff] %v1821
      %2206 = vst [vmem:[#allocation2 + $0x230] sm:$0xff] %v1822
      %2207 = vst [vmem:[#allocation2 + $0x238] sm:$0xff] %v1823
      %2208 = vst [vmem:[#allocation2 + $0x240] sm:$0xff] %v1824
      %2209 = vst [vmem:[#allocation2 + $0x248] sm:$0xff] %v1825
      %2210 = vst [vmem:[#allocation2 + $0x250] sm:$0xff] %v1826
      %2211 = vst [vmem:[#allocation2 + $0x258] sm:$0xff] %v1827
      %2212 = vst [vmem:[#allocation2 + $0x260] sm:$0xff] %v1828
      %2213 = vst [vmem:[#allocation2 + $0x268] sm:$0xff] %v1829
      %2214 = vst [vmem:[#allocation2 + $0x270] sm:$0xff] %v1830
      %2215 = vst [vmem:[#allocation2 + $0x278] sm:$0xff] %v1831
      %2216 = vrot.lane.b32.xlu0 %v1816, 127
      %v2217 = vpop.permute.xlu0 %2216
      %2218 = vrot.lane.b32.xlu0 %v1818, 127
      %v2219 = vpop.permute.xlu0 %2218
      %2220 = vrot.lane.b32.xlu0 %v1820, 127
      %v2221 = vpop.permute.xlu0 %2220
      %2222 = vrot.lane.b32.xlu0 %v1822, 127
      %v2223 = vpop.permute.xlu0 %2222
      %2224 = vrot.lane.b32.xlu0 %v1824, 127
      %v2225 = vpop.permute.xlu0 %2224
      %2226 = vrot.lane.b32.xlu0 %v1826, 127
      %v2227 = vpop.permute.xlu0 %2226
      %2228 = vrot.lane.b32.xlu0 %v1828, 127
      %v2229 = vpop.permute.xlu0 %2228
      %2230 = vrot.lane.b32.xlu0 %v1830, 127
      %v2231 = vpop.permute.xlu0 %2230
      %2232 = vrot.lane.b32.xlu0 %v1817, 127
      %v2233 = vpop.permute.xlu0 %2232
      %2234 = vrot.lane.b32.xlu0 %v1819, 127
      %v2235 = vpop.permute.xlu0 %2234
      %2236 = vrot.lane.b32.xlu0 %v1821, 127
      %v2237 = vpop.permute.xlu0 %2236
      %2238 = vrot.lane.b32.xlu0 %v1823, 127
      %v2239 = vpop.permute.xlu0 %2238
      %2240 = vrot.lane.b32.xlu0 %v1825, 127
      %v2241 = vpop.permute.xlu0 %2240
      %2242 = vrot.lane.b32.xlu0 %v1827, 127
      %v2243 = vpop.permute.xlu0 %2242
      %2244 = vrot.lane.b32.xlu0 %v1829, 127
      %v2245 = vpop.permute.xlu0 %2244
      %2246 = vrot.lane.b32.xlu0 %v1831, 127
      %v2247 = vpop.permute.xlu0 %2246
      %v2248 = vsel %vm666, %v2217, %v2233
      %v2249 = vsel %vm666, %v2219, %v2235
      %v2250 = vsel %vm666, %v2221, %v2237
      %v2251 = vsel %vm666, %v2223, %v2239
      %v2252 = vsel %vm666, %v2225, %v2241
      %v2253 = vsel %vm666, %v2227, %v2243
      %v2254 = vsel %vm666, %v2229, %v2245
      %v2255 = vsel %vm666, %v2231, %v2247
      %v2256 = vsel %vm666, %v2233, %v2217
      %v2257 = vsel %vm666, %v2235, %v2219
      %v2258 = vsel %vm666, %v2237, %v2221
      %v2259 = vsel %vm666, %v2239, %v2223
      %v2260 = vsel %vm666, %v2241, %v2225
      %v2261 = vsel %vm666, %v2243, %v2227
      %v2262 = vsel %vm666, %v2245, %v2229
      %v2263 = vsel %vm666, %v2247, %v2231
      %v2264 = vld [vmem:[%s683] ss:$8 sm:$0x3]
      %v2266 = vlaneseq
      %v2267 = vshrl.u32 %v2266, 7
      %v2268 = vsub.s32 0, %v2267
      %v2269 = vrot.slane %v2264, %v2268
      %v2270 = vlaneseq
      %v2271 = vshrl.u32 %v2270, 7
      %v2272 = vsub.s32 1, %v2271
      %v2273 = vrot.slane %v2264, %v2272
      %v2276 = vmul.f32 %v2248, %v2269
      %v2277 = vmul.f32 %v2256, %v2273
      %v2278 = vmul.f32 %v2249, %v2269
      %v2279 = vmul.f32 %v2257, %v2273
      %v2280 = vmul.f32 %v2250, %v2269
      %v2281 = vmul.f32 %v2258, %v2273
      %v2282 = vmul.f32 %v2251, %v2269
      %v2283 = vmul.f32 %v2259, %v2273
      %v2284 = vmul.f32 %v2252, %v2269
      %v2285 = vmul.f32 %v2260, %v2273
      %v2286 = vmul.f32 %v2253, %v2269
      %v2287 = vmul.f32 %v2261, %v2273
      %v2288 = vmul.f32 %v2254, %v2269
      %v2289 = vmul.f32 %v2262, %v2273
      %v2290 = vmul.f32 %v2255, %v2269
      %v2291 = vmul.f32 %v2263, %v2273
      %2292 = vst [vmem:[#allocation2 + $0x280] sm:$0xff] %v2276
      %2293 = vst [vmem:[#allocation2 + $0x288] sm:$0xff] %v2277
      %2294 = vst [vmem:[#allocation2 + $0x290] sm:$0xff] %v2278
      %2295 = vst [vmem:[#allocation2 + $0x298] sm:$0xff] %v2279
      %2296 = vst [vmem:[#allocation2 + $0x2a0] sm:$0xff] %v2280
      %2297 = vst [vmem:[#allocation2 + $0x2a8] sm:$0xff] %v2281
      %2298 = vst [vmem:[#allocation2 + $0x2b0] sm:$0xff] %v2282
      %2299 = vst [vmem:[#allocation2 + $0x2b8] sm:$0xff] %v2283
      %2300 = vst [vmem:[#allocation2 + $0x2c0] sm:$0xff] %v2284
      %2301 = vst [vmem:[#allocation2 + $0x2c8] sm:$0xff] %v2285
      %2302 = vst [vmem:[#allocation2 + $0x2d0] sm:$0xff] %v2286
      %2303 = vst [vmem:[#allocation2 + $0x2d8] sm:$0xff] %v2287
      %2304 = vst [vmem:[#allocation2 + $0x2e0] sm:$0xff] %v2288
      %2305 = vst [vmem:[#allocation2 + $0x2e8] sm:$0xff] %v2289
      %2306 = vst [vmem:[#allocation2 + $0x2f0] sm:$0xff] %v2290
      %2307 = vst [vmem:[#allocation2 + $0x2f8] sm:$0xff] %v2291
      %2308 = vrot.lane.b32.xlu0 %v1816, 113
      %v2309 = vpop.permute.xlu0 %2308
      %2310 = vrot.lane.b32.xlu0 %v1818, 113
      %v2311 = vpop.permute.xlu0 %2310
      %2312 = vrot.lane.b32.xlu0 %v1820, 113
      %v2313 = vpop.permute.xlu0 %2312
      %2314 = vrot.lane.b32.xlu0 %v1822, 113
      %v2315 = vpop.permute.xlu0 %2314
      %2316 = vrot.lane.b32.xlu0 %v1824, 113
      %v2317 = vpop.permute.xlu0 %2316
      %2318 = vrot.lane.b32.xlu0 %v1826, 113
      %v2319 = vpop.permute.xlu0 %2318
      %2320 = vrot.lane.b32.xlu0 %v1828, 113
      %v2321 = vpop.permute.xlu0 %2320
      %2322 = vrot.lane.b32.xlu0 %v1830, 113
      %v2323 = vpop.permute.xlu0 %2322
      %2324 = vrot.lane.b32.xlu0 %v1817, 113
      %v2325 = vpop.permute.xlu0 %2324
      %2326 = vrot.lane.b32.xlu0 %v1819, 113
      %v2327 = vpop.permute.xlu0 %2326
      %2328 = vrot.lane.b32.xlu0 %v1821, 113
      %v2329 = vpop.permute.xlu0 %2328
      %2330 = vrot.lane.b32.xlu0 %v1823, 113
      %v2331 = vpop.permute.xlu0 %2330
      %2332 = vrot.lane.b32.xlu0 %v1825, 113
      %v2333 = vpop.permute.xlu0 %2332
      %2334 = vrot.lane.b32.xlu0 %v1827, 113
      %v2335 = vpop.permute.xlu0 %2334
      %2336 = vrot.lane.b32.xlu0 %v1829, 113
      %v2337 = vpop.permute.xlu0 %2336
      %2338 = vrot.lane.b32.xlu0 %v1831, 113
      %v2339 = vpop.permute.xlu0 %2338
      %v2340 = vsel %vm760, %v2309, %v2325
      %v2341 = vsel %vm760, %v2311, %v2327
      %v2342 = vsel %vm760, %v2313, %v2329
      %v2343 = vsel %vm760, %v2315, %v2331
      %v2344 = vsel %vm760, %v2317, %v2333
      %v2345 = vsel %vm760, %v2319, %v2335
      %v2346 = vsel %vm760, %v2321, %v2337
      %v2347 = vsel %vm760, %v2323, %v2339
      %v2348 = vsel %vm760, %v2325, %v2309
      %v2349 = vsel %vm760, %v2327, %v2311
      %v2350 = vsel %vm760, %v2329, %v2313
      %v2351 = vsel %vm760, %v2331, %v2315
      %v2352 = vsel %vm760, %v2333, %v2317
      %v2353 = vsel %vm760, %v2335, %v2319
      %v2354 = vsel %vm760, %v2337, %v2321
      %v2355 = vsel %vm760, %v2339, %v2323
      %v2356 = vld [vmem:[%s777] ss:$8 sm:$0x3]
      %v2358 = vlaneseq
      %v2359 = vshrl.u32 %v2358, 7
      %v2360 = vsub.s32 0, %v2359
      %v2361 = vrot.slane %v2356, %v2360
      %v2362 = vlaneseq
      %v2363 = vshrl.u32 %v2362, 7
      %v2364 = vsub.s32 1, %v2363
      %v2365 = vrot.slane %v2356, %v2364
      %v2368 = vmul.f32 %v2340, %v2361
      %v2369 = vmul.f32 %v2348, %v2365
      %v2370 = vmul.f32 %v2341, %v2361
      %v2371 = vmul.f32 %v2349, %v2365
      %v2372 = vmul.f32 %v2342, %v2361
      %v2373 = vmul.f32 %v2350, %v2365
      %v2374 = vmul.f32 %v2343, %v2361
      %v2375 = vmul.f32 %v2351, %v2365
      %v2376 = vmul.f32 %v2344, %v2361
      %v2377 = vmul.f32 %v2352, %v2365
      %v2378 = vmul.f32 %v2345, %v2361
      %v2379 = vmul.f32 %v2353, %v2365
      %v2380 = vmul.f32 %v2346, %v2361
      %v2381 = vmul.f32 %v2354, %v2365
      %v2382 = vmul.f32 %v2347, %v2361
      %v2383 = vmul.f32 %v2355, %v2365
      %2384 = vst [vmem:[#allocation2 + $0x300] sm:$0xff] %v2368
      %2385 = vst [vmem:[#allocation2 + $0x308] sm:$0xff] %v2369
      %2386 = vst [vmem:[#allocation2 + $0x310] sm:$0xff] %v2370
      %2387 = vst [vmem:[#allocation2 + $0x318] sm:$0xff] %v2371
      %2388 = vst [vmem:[#allocation2 + $0x320] sm:$0xff] %v2372
      %2389 = vst [vmem:[#allocation2 + $0x328] sm:$0xff] %v2373
      %2390 = vst [vmem:[#allocation2 + $0x330] sm:$0xff] %v2374
      %2391 = vst [vmem:[#allocation2 + $0x338] sm:$0xff] %v2375
      %2392 = vst [vmem:[#allocation2 + $0x340] sm:$0xff] %v2376
      %2393 = vst [vmem:[#allocation2 + $0x348] sm:$0xff] %v2377
      %2394 = vst [vmem:[#allocation2 + $0x350] sm:$0xff] %v2378
      %2395 = vst [vmem:[#allocation2 + $0x358] sm:$0xff] %v2379
      %2396 = vst [vmem:[#allocation2 + $0x360] sm:$0xff] %v2380
      %2397 = vst [vmem:[#allocation2 + $0x368] sm:$0xff] %v2381
      %2398 = vst [vmem:[#allocation2 + $0x370] sm:$0xff] %v2382
      %2399 = vst [vmem:[#allocation2 + $0x378] sm:$0xff] %v2383
      %2400 = vrot.lane.b32.xlu0 %v1816, 112
      %v2401 = vpop.permute.xlu0 %2400
      %2402 = vrot.lane.b32.xlu0 %v1818, 112
      %v2403 = vpop.permute.xlu0 %2402
      %2404 = vrot.lane.b32.xlu0 %v1820, 112
      %v2405 = vpop.permute.xlu0 %2404
      %2406 = vrot.lane.b32.xlu0 %v1822, 112
      %v2407 = vpop.permute.xlu0 %2406
      %2408 = vrot.lane.b32.xlu0 %v1824, 112
      %v2409 = vpop.permute.xlu0 %2408
      %2410 = vrot.lane.b32.xlu0 %v1826, 112
      %v2411 = vpop.permute.xlu0 %2410
      %2412 = vrot.lane.b32.xlu0 %v1828, 112
      %v2413 = vpop.permute.xlu0 %2412
      %2414 = vrot.lane.b32.xlu0 %v1830, 112
      %v2415 = vpop.permute.xlu0 %2414
      %2416 = vrot.lane.b32.xlu0 %v1817, 112
      %v2417 = vpop.permute.xlu0 %2416
      %2418 = vrot.lane.b32.xlu0 %v1819, 112
      %v2419 = vpop.permute.xlu0 %2418
      %2420 = vrot.lane.b32.xlu0 %v1821, 112
      %v2421 = vpop.permute.xlu0 %2420
      %2422 = vrot.lane.b32.xlu0 %v1823, 112
      %v2423 = vpop.permute.xlu0 %2422
      %2424 = vrot.lane.b32.xlu0 %v1825, 112
      %v2425 = vpop.permute.xlu0 %2424
      %2426 = vrot.lane.b32.xlu0 %v1827, 112
      %v2427 = vpop.permute.xlu0 %2426
      %2428 = vrot.lane.b32.xlu0 %v1829, 112
      %v2429 = vpop.permute.xlu0 %2428
      %2430 = vrot.lane.b32.xlu0 %v1831, 112
      %v2431 = vpop.permute.xlu0 %2430
      %v2432 = vsel %vm854, %v2401, %v2417
      %v2433 = vsel %vm854, %v2403, %v2419
      %v2434 = vsel %vm854, %v2405, %v2421
      %v2435 = vsel %vm854, %v2407, %v2423
      %v2436 = vsel %vm854, %v2409, %v2425
      %v2437 = vsel %vm854, %v2411, %v2427
      %v2438 = vsel %vm854, %v2413, %v2429
      %v2439 = vsel %vm854, %v2415, %v2431
      %v2440 = vsel %vm854, %v2417, %v2401
      %v2441 = vsel %vm854, %v2419, %v2403
      %v2442 = vsel %vm854, %v2421, %v2405
      %v2443 = vsel %vm854, %v2423, %v2407
      %v2444 = vsel %vm854, %v2425, %v2409
      %v2445 = vsel %vm854, %v2427, %v2411
      %v2446 = vsel %vm854, %v2429, %v2413
      %v2447 = vsel %vm854, %v2431, %v2415
      %v2448 = vld [vmem:[%s871] ss:$8 sm:$0x3]
      %v2450 = vlaneseq
      %v2451 = vshrl.u32 %v2450, 7
      %v2452 = vsub.s32 0, %v2451
      %v2453 = vrot.slane %v2448, %v2452
      %v2454 = vlaneseq
      %v2455 = vshrl.u32 %v2454, 7
      %v2456 = vsub.s32 1, %v2455
      %v2457 = vrot.slane %v2448, %v2456
      %v2460 = vmul.f32 %v2432, %v2453
      %v2461 = vmul.f32 %v2440, %v2457
      %v2462 = vmul.f32 %v2433, %v2453
      %v2463 = vmul.f32 %v2441, %v2457
      %v2464 = vmul.f32 %v2434, %v2453
      %v2465 = vmul.f32 %v2442, %v2457
      %v2466 = vmul.f32 %v2435, %v2453
      %v2467 = vmul.f32 %v2443, %v2457
      %v2468 = vmul.f32 %v2436, %v2453
      %v2469 = vmul.f32 %v2444, %v2457
      %v2470 = vmul.f32 %v2437, %v2453
      %v2471 = vmul.f32 %v2445, %v2457
      %v2472 = vmul.f32 %v2438, %v2453
      %v2473 = vmul.f32 %v2446, %v2457
      %v2474 = vmul.f32 %v2439, %v2453
      %v2475 = vmul.f32 %v2447, %v2457
      %2476 = vst [vmem:[#allocation2 + $0x380] sm:$0xff] %v2460
      %2477 = vst [vmem:[#allocation2 + $0x388] sm:$0xff] %v2461
      %2478 = vst [vmem:[#allocation2 + $0x390] sm:$0xff] %v2462
      %2479 = vst [vmem:[#allocation2 + $0x398] sm:$0xff] %v2463
      %2480 = vst [vmem:[#allocation2 + $0x3a0] sm:$0xff] %v2464
      %2481 = vst [vmem:[#allocation2 + $0x3a8] sm:$0xff] %v2465
      %2482 = vst [vmem:[#allocation2 + $0x3b0] sm:$0xff] %v2466
      %2483 = vst [vmem:[#allocation2 + $0x3b8] sm:$0xff] %v2467
      %2484 = vst [vmem:[#allocation2 + $0x3c0] sm:$0xff] %v2468
      %2485 = vst [vmem:[#allocation2 + $0x3c8] sm:$0xff] %v2469
      %2486 = vst [vmem:[#allocation2 + $0x3d0] sm:$0xff] %v2470
      %2487 = vst [vmem:[#allocation2 + $0x3d8] sm:$0xff] %v2471
      %2488 = vst [vmem:[#allocation2 + $0x3e0] sm:$0xff] %v2472
      %2489 = vst [vmem:[#allocation2 + $0x3e8] sm:$0xff] %v2473
      %2490 = vst [vmem:[#allocation2 + $0x3f0] sm:$0xff] %v2474
      %2491 = vst [vmem:[#allocation2 + $0x3f8] sm:$0xff] %v2475
      %2492 = vrot.lane.b32.xlu0 %v1816, 111
      %v2493 = vpop.permute.xlu0 %2492
      %2494 = vrot.lane.b32.xlu0 %v1818, 111
      %v2495 = vpop.permute.xlu0 %2494
      %2496 = vrot.lane.b32.xlu0 %v1820, 111
      %v2497 = vpop.permute.xlu0 %2496
      %2498 = vrot.lane.b32.xlu0 %v1822, 111
      %v2499 = vpop.permute.xlu0 %2498
      %2500 = vrot.lane.b32.xlu0 %v1824, 111
      %v2501 = vpop.permute.xlu0 %2500
      %2502 = vrot.lane.b32.xlu0 %v1826, 111
      %v2503 = vpop.permute.xlu0 %2502
      %2504 = vrot.lane.b32.xlu0 %v1828, 111
      %v2505 = vpop.permute.xlu0 %2504
      %2506 = vrot.lane.b32.xlu0 %v1830, 111
      %v2507 = vpop.permute.xlu0 %2506
      %2508 = vrot.lane.b32.xlu0 %v1817, 111
      %v2509 = vpop.permute.xlu0 %2508
      %2510 = vrot.lane.b32.xlu0 %v1819, 111
      %v2511 = vpop.permute.xlu0 %2510
      %2512 = vrot.lane.b32.xlu0 %v1821, 111
      %v2513 = vpop.permute.xlu0 %2512
      %2514 = vrot.lane.b32.xlu0 %v1823, 111
      %v2515 = vpop.permute.xlu0 %2514
      %2516 = vrot.lane.b32.xlu0 %v1825, 111
      %v2517 = vpop.permute.xlu0 %2516
      %2518 = vrot.lane.b32.xlu0 %v1827, 111
      %v2519 = vpop.permute.xlu0 %2518
      %2520 = vrot.lane.b32.xlu0 %v1829, 111
      %v2521 = vpop.permute.xlu0 %2520
      %2522 = vrot.lane.b32.xlu0 %v1831, 111
      %v2523 = vpop.permute.xlu0 %2522
      %v2524 = vsel %vm948, %v2493, %v2509
      %v2525 = vsel %vm948, %v2495, %v2511
      %v2526 = vsel %vm948, %v2497, %v2513
      %v2527 = vsel %vm948, %v2499, %v2515
      %v2528 = vsel %vm948, %v2501, %v2517
      %v2529 = vsel %vm948, %v2503, %v2519
      %v2530 = vsel %vm948, %v2505, %v2521
      %v2531 = vsel %vm948, %v2507, %v2523
      %v2532 = vsel %vm948, %v2509, %v2493
      %v2533 = vsel %vm948, %v2511, %v2495
      %v2534 = vsel %vm948, %v2513, %v2497
      %v2535 = vsel %vm948, %v2515, %v2499
      %v2536 = vsel %vm948, %v2517, %v2501
      %v2537 = vsel %vm948, %v2519, %v2503
      %v2538 = vsel %vm948, %v2521, %v2505
      %v2539 = vsel %vm948, %v2523, %v2507
      %v2540 = vld [vmem:[%s965] ss:$8 sm:$0x3]
      %v2542 = vlaneseq
      %v2543 = vshrl.u32 %v2542, 7
      %v2544 = vsub.s32 0, %v2543
      %v2545 = vrot.slane %v2540, %v2544
      %v2546 = vlaneseq
      %v2547 = vshrl.u32 %v2546, 7
      %v2548 = vsub.s32 1, %v2547
      %v2549 = vrot.slane %v2540, %v2548
      %v2552 = vmul.f32 %v2524, %v2545
      %v2553 = vmul.f32 %v2532, %v2549
      %v2554 = vmul.f32 %v2525, %v2545
      %v2555 = vmul.f32 %v2533, %v2549
      %v2556 = vmul.f32 %v2526, %v2545
      %v2557 = vmul.f32 %v2534, %v2549
      %v2558 = vmul.f32 %v2527, %v2545
      %v2559 = vmul.f32 %v2535, %v2549
      %v2560 = vmul.f32 %v2528, %v2545
      %v2561 = vmul.f32 %v2536, %v2549
      %v2562 = vmul.f32 %v2529, %v2545
      %v2563 = vmul.f32 %v2537, %v2549
      %v2564 = vmul.f32 %v2530, %v2545
      %v2565 = vmul.f32 %v2538, %v2549
      %v2566 = vmul.f32 %v2531, %v2545
      %v2567 = vmul.f32 %v2539, %v2549
      %2568 = vst [vmem:[#allocation2 + $0x400] sm:$0xff] %v2552
      %2569 = vst [vmem:[#allocation2 + $0x408] sm:$0xff] %v2553
      %2570 = vst [vmem:[#allocation2 + $0x410] sm:$0xff] %v2554
      %2571 = vst [vmem:[#allocation2 + $0x418] sm:$0xff] %v2555
      %2572 = vst [vmem:[#allocation2 + $0x420] sm:$0xff] %v2556
      %2573 = vst [vmem:[#allocation2 + $0x428] sm:$0xff] %v2557
      %2574 = vst [vmem:[#allocation2 + $0x430] sm:$0xff] %v2558
      %2575 = vst [vmem:[#allocation2 + $0x438] sm:$0xff] %v2559
      %2576 = vst [vmem:[#allocation2 + $0x440] sm:$0xff] %v2560
      %2577 = vst [vmem:[#allocation2 + $0x448] sm:$0xff] %v2561
      %2578 = vst [vmem:[#allocation2 + $0x450] sm:$0xff] %v2562
      %2579 = vst [vmem:[#allocation2 + $0x458] sm:$0xff] %v2563
      %2580 = vst [vmem:[#allocation2 + $0x460] sm:$0xff] %v2564
      %2581 = vst [vmem:[#allocation2 + $0x468] sm:$0xff] %v2565
      %2582 = vst [vmem:[#allocation2 + $0x470] sm:$0xff] %v2566
      %2583 = vst [vmem:[#allocation2 + $0x478] sm:$0xff] %v2567
      %v2584 = vld [vmem:[%s2] sm:$0xff]
      %v2585 = vld [vmem:[%s2 + $0x8] sm:$0xff]
      %v2586 = vld [vmem:[%s2 + $0x10] sm:$0xff]
      %v2587 = vld [vmem:[%s2 + $0x18] sm:$0xff]
      %v2588 = vld [vmem:[%s2 + $0x20] sm:$0xff]
      %v2589 = vld [vmem:[%s2 + $0x28] sm:$0xff]
      %v2590 = vld [vmem:[%s2 + $0x30] sm:$0xff]
      %v2591 = vld [vmem:[%s2 + $0x38] sm:$0xff]
      %v2592 = vld [vmem:[%s2 + $0x40] sm:$0xff]
      %v2593 = vld [vmem:[%s2 + $0x48] sm:$0xff]
      %v2594 = vld [vmem:[%s2 + $0x50] sm:$0xff]
      %v2595 = vld [vmem:[%s2 + $0x58] sm:$0xff]
      %v2596 = vld [vmem:[%s2 + $0x60] sm:$0xff]
      %v2597 = vld [vmem:[%s2 + $0x68] sm:$0xff]
      %v2598 = vld [vmem:[%s2 + $0x70] sm:$0xff]
      %v2599 = vld [vmem:[%s2 + $0x78] sm:$0xff]
      %v2600 = vld [vmem:[%s2 + $0x80] sm:$0xff]
      %v2601 = vld [vmem:[%s2 + $0x88] sm:$0xff]
      %v2602 = vld [vmem:[%s2 + $0x90] sm:$0xff]
      %v2603 = vld [vmem:[%s2 + $0x98] sm:$0xff]
      %v2604 = vld [vmem:[%s2 + $0xa0] sm:$0xff]
      %v2605 = vld [vmem:[%s2 + $0xa8] sm:$0xff]
      %v2606 = vld [vmem:[%s2 + $0xb0] sm:$0xff]
      %v2607 = vld [vmem:[%s2 + $0xb8] sm:$0xff]
      %v2608 = vld [vmem:[%s2 + $0xc0] sm:$0xff]
      %v2609 = vld [vmem:[%s2 + $0xc8] sm:$0xff]
      %v2610 = vld [vmem:[%s2 + $0xd0] sm:$0xff]
      %v2611 = vld [vmem:[%s2 + $0xd8] sm:$0xff]
      %v2612 = vld [vmem:[%s2 + $0xe0] sm:$0xff]
      %v2613 = vld [vmem:[%s2 + $0xe8] sm:$0xff]
      %v2614 = vld [vmem:[%s2 + $0xf0] sm:$0xff]
      %v2615 = vld [vmem:[%s2 + $0xf8] sm:$0xff]
      %v2616 = vld [vmem:[%s2 + $0x100] sm:$0xff]
      %v2617 = vld [vmem:[%s2 + $0x108] sm:$0xff]
      %v2618 = vld [vmem:[%s2 + $0x110] sm:$0xff]
      %v2619 = vld [vmem:[%s2 + $0x118] sm:$0xff]
      %v2620 = vld [vmem:[%s2 + $0x120] sm:$0xff]
      %v2621 = vld [vmem:[%s2 + $0x128] sm:$0xff]
      %v2622 = vld [vmem:[%s2 + $0x130] sm:$0xff]
      %v2623 = vld [vmem:[%s2 + $0x138] sm:$0xff]
      %v2624 = vld [vmem:[#allocation2] sm:$0xff]
      %v2625 = vld [vmem:[#allocation2 + $0x8] sm:$0xff]
      %v2626 = vld [vmem:[#allocation2 + $0x10] sm:$0xff]
      %v2627 = vld [vmem:[#allocation2 + $0x18] sm:$0xff]
      %v2628 = vld [vmem:[#allocation2 + $0x20] sm:$0xff]
      %v2629 = vld [vmem:[#allocation2 + $0x28] sm:$0xff]
      %v2630 = vld [vmem:[#allocation2 + $0x30] sm:$0xff]
      %v2631 = vld [vmem:[#allocation2 + $0x38] sm:$0xff]
      %v2632 = vld [vmem:[#allocation2 + $0x40] sm:$0xff]
      %v2633 = vld [vmem:[#allocation2 + $0x48] sm:$0xff]
      %v2634 = vld [vmem:[#allocation2 + $0x50] sm:$0xff]
      %v2635 = vld [vmem:[#allocation2 + $0x58] sm:$0xff]
      %v2636 = vld [vmem:[#allocation2 + $0x60] sm:$0xff]
      %v2637 = vld [vmem:[#allocation2 + $0x68] sm:$0xff]
      %v2638 = vld [vmem:[#allocation2 + $0x70] sm:$0xff]
      %v2639 = vld [vmem:[#allocation2 + $0x78] sm:$0xff]
      %v2640 = vld [vmem:[#allocation2 + $0x80] sm:$0xff]
      %v2641 = vld [vmem:[#allocation2 + $0x88] sm:$0xff]
      %v2642 = vld [vmem:[#allocation2 + $0x90] sm:$0xff]
      %v2643 = vld [vmem:[#allocation2 + $0x98] sm:$0xff]
      %v2644 = vld [vmem:[#allocation2 + $0xa0] sm:$0xff]
      %v2645 = vld [vmem:[#allocation2 + $0xa8] sm:$0xff]
      %v2646 = vld [vmem:[#allocation2 + $0xb0] sm:$0xff]
      %v2647 = vld [vmem:[#allocation2 + $0xb8] sm:$0xff]
      %v2648 = vld [vmem:[#allocation2 + $0xc0] sm:$0xff]
      %v2649 = vld [vmem:[#allocation2 + $0xc8] sm:$0xff]
      %v2650 = vld [vmem:[#allocation2 + $0xd0] sm:$0xff]
      %v2651 = vld [vmem:[#allocation2 + $0xd8] sm:$0xff]
      %v2652 = vld [vmem:[#allocation2 + $0xe0] sm:$0xff]
      %v2653 = vld [vmem:[#allocation2 + $0xe8] sm:$0xff]
      %v2654 = vld [vmem:[#allocation2 + $0xf0] sm:$0xff]
      %v2655 = vld [vmem:[#allocation2 + $0xf8] sm:$0xff]
      %v2656 = vld [vmem:[#allocation2 + $0x100] sm:$0xff]
      %v2657 = vld [vmem:[#allocation2 + $0x108] sm:$0xff]
      %v2658 = vld [vmem:[#allocation2 + $0x110] sm:$0xff]
      %v2659 = vld [vmem:[#allocation2 + $0x118] sm:$0xff]
      %v2660 = vld [vmem:[#allocation2 + $0x120] sm:$0xff]
      %v2661 = vld [vmem:[#allocation2 + $0x128] sm:$0xff]
      %v2662 = vld [vmem:[#allocation2 + $0x130] sm:$0xff]
      %v2663 = vld [vmem:[#allocation2 + $0x138] sm:$0xff]
      %v2664 = vld [vmem:[#allocation2 + $0x140] sm:$0xff]
      %v2665 = vld [vmem:[#allocation2 + $0x148] sm:$0xff]
      %v2666 = vld [vmem:[#allocation2 + $0x150] sm:$0xff]
      %v2667 = vld [vmem:[#allocation2 + $0x158] sm:$0xff]
      %v2668 = vld [vmem:[#allocation2 + $0x160] sm:$0xff]
      %v2669 = vld [vmem:[#allocation2 + $0x168] sm:$0xff]
      %v2670 = vld [vmem:[#allocation2 + $0x170] sm:$0xff]
      %v2671 = vld [vmem:[#allocation2 + $0x178] sm:$0xff]
      %v2672 = vld [vmem:[#allocation2 + $0x180] sm:$0xff]
      %v2673 = vld [vmem:[#allocation2 + $0x188] sm:$0xff]
      %v2674 = vld [vmem:[#allocation2 + $0x190] sm:$0xff]
      %v2675 = vld [vmem:[#allocation2 + $0x198] sm:$0xff]
      %v2676 = vld [vmem:[#allocation2 + $0x1a0] sm:$0xff]
      %v2677 = vld [vmem:[#allocation2 + $0x1a8] sm:$0xff]
      %v2678 = vld [vmem:[#allocation2 + $0x1b0] sm:$0xff]
      %v2679 = vld [vmem:[#allocation2 + $0x1b8] sm:$0xff]
      %v2680 = vld [vmem:[#allocation2 + $0x1c0] sm:$0xff]
      %v2681 = vld [vmem:[#allocation2 + $0x1c8] sm:$0xff]
      %v2682 = vld [vmem:[#allocation2 + $0x1d0] sm:$0xff]
      %v2683 = vld [vmem:[#allocation2 + $0x1d8] sm:$0xff]
      %v2684 = vld [vmem:[#allocation2 + $0x1e0] sm:$0xff]
      %v2685 = vld [vmem:[#allocation2 + $0x1e8] sm:$0xff]
      %v2686 = vld [vmem:[#allocation2 + $0x1f0] sm:$0xff]
      %v2687 = vld [vmem:[#allocation2 + $0x1f8] sm:$0xff]
      %v2688 = vld [vmem:[#allocation2 + $0x200] sm:$0xff]
      %v2689 = vld [vmem:[#allocation2 + $0x208] sm:$0xff]
      %v2690 = vld [vmem:[#allocation2 + $0x210] sm:$0xff]
      %v2691 = vld [vmem:[#allocation2 + $0x218] sm:$0xff]
      %v2692 = vld [vmem:[#allocation2 + $0x220] sm:$0xff]
      %v2693 = vld [vmem:[#allocation2 + $0x228] sm:$0xff]
      %v2694 = vld [vmem:[#allocation2 + $0x230] sm:$0xff]
      %v2695 = vld [vmem:[#allocation2 + $0x238] sm:$0xff]
      %v2696 = vld [vmem:[#allocation2 + $0x240] sm:$0xff]
      %v2697 = vld [vmem:[#allocation2 + $0x248] sm:$0xff]
      %v2698 = vld [vmem:[#allocation2 + $0x250] sm:$0xff]
      %v2699 = vld [vmem:[#allocation2 + $0x258] sm:$0xff]
      %v2700 = vld [vmem:[#allocation2 + $0x260] sm:$0xff]
      %v2701 = vld [vmem:[#allocation2 + $0x268] sm:$0xff]
      %v2702 = vld [vmem:[#allocation2 + $0x270] sm:$0xff]
      %v2703 = vld [vmem:[#allocation2 + $0x278] sm:$0xff]
      %v2704 = vld [vmem:[#allocation2 + $0x280] sm:$0xff]
      %v2705 = vld [vmem:[#allocation2 + $0x288] sm:$0xff]
      %v2706 = vld [vmem:[#allocation2 + $0x290] sm:$0xff]
      %v2707 = vld [vmem:[#allocation2 + $0x298] sm:$0xff]
      %v2708 = vld [vmem:[#allocation2 + $0x2a0] sm:$0xff]
      %v2709 = vld [vmem:[#allocation2 + $0x2a8] sm:$0xff]
      %v2710 = vld [vmem:[#allocation2 + $0x2b0] sm:$0xff]
      %v2711 = vld [vmem:[#allocation2 + $0x2b8] sm:$0xff]
      %v2712 = vld [vmem:[#allocation2 + $0x2c0] sm:$0xff]
      %v2713 = vld [vmem:[#allocation2 + $0x2c8] sm:$0xff]
      %v2714 = vld [vmem:[#allocation2 + $0x2d0] sm:$0xff]
      %v2715 = vld [vmem:[#allocation2 + $0x2d8] sm:$0xff]
      %v2716 = vld [vmem:[#allocation2 + $0x2e0] sm:$0xff]
      %v2717 = vld [vmem:[#allocation2 + $0x2e8] sm:$0xff]
      %v2718 = vld [vmem:[#allocation2 + $0x2f0] sm:$0xff]
      %v2719 = vld [vmem:[#allocation2 + $0x2f8] sm:$0xff]
      %v2720 = vld [vmem:[#allocation2 + $0x300] sm:$0xff]
      %v2721 = vld [vmem:[#allocation2 + $0x308] sm:$0xff]
      %v2722 = vld [vmem:[#allocation2 + $0x310] sm:$0xff]
      %v2723 = vld [vmem:[#allocation2 + $0x318] sm:$0xff]
      %v2724 = vld [vmem:[#allocation2 + $0x320] sm:$0xff]
      %v2725 = vld [vmem:[#allocation2 + $0x328] sm:$0xff]
      %v2726 = vld [vmem:[#allocation2 + $0x330] sm:$0xff]
      %v2727 = vld [vmem:[#allocation2 + $0x338] sm:$0xff]
      %v2728 = vld [vmem:[#allocation2 + $0x340] sm:$0xff]
      %v2729 = vld [vmem:[#allocation2 + $0x348] sm:$0xff]
      %v2730 = vld [vmem:[#allocation2 + $0x350] sm:$0xff]
      %v2731 = vld [vmem:[#allocation2 + $0x358] sm:$0xff]
      %v2732 = vld [vmem:[#allocation2 + $0x360] sm:$0xff]
      %v2733 = vld [vmem:[#allocation2 + $0x368] sm:$0xff]
      %v2734 = vld [vmem:[#allocation2 + $0x370] sm:$0xff]
      %v2735 = vld [vmem:[#allocation2 + $0x378] sm:$0xff]
      %v2736 = vld [vmem:[#allocation2 + $0x380] sm:$0xff]
      %v2737 = vld [vmem:[#allocation2 + $0x388] sm:$0xff]
      %v2738 = vld [vmem:[#allocation2 + $0x390] sm:$0xff]
      %v2739 = vld [vmem:[#allocation2 + $0x398] sm:$0xff]
      %v2740 = vld [vmem:[#allocation2 + $0x3a0] sm:$0xff]
      %v2741 = vld [vmem:[#allocation2 + $0x3a8] sm:$0xff]
      %v2742 = vld [vmem:[#allocation2 + $0x3b0] sm:$0xff]
      %v2743 = vld [vmem:[#allocation2 + $0x3b8] sm:$0xff]
      %v2744 = vld [vmem:[#allocation2 + $0x3c0] sm:$0xff]
      %v2745 = vld [vmem:[#allocation2 + $0x3c8] sm:$0xff]
      %v2746 = vld [vmem:[#allocation2 + $0x3d0] sm:$0xff]
      %v2747 = vld [vmem:[#allocation2 + $0x3d8] sm:$0xff]
      %v2748 = vld [vmem:[#allocation2 + $0x3e0] sm:$0xff]
      %v2749 = vld [vmem:[#allocation2 + $0x3e8] sm:$0xff]
      %v2750 = vld [vmem:[#allocation2 + $0x3f0] sm:$0xff]
      %v2751 = vld [vmem:[#allocation2 + $0x3f8] sm:$0xff]
      %v2752 = vld [vmem:[#allocation2 + $0x400] sm:$0xff]
      %v2753 = vld [vmem:[#allocation2 + $0x408] sm:$0xff]
      %v2754 = vld [vmem:[#allocation2 + $0x410] sm:$0xff]
      %v2755 = vld [vmem:[#allocation2 + $0x418] sm:$0xff]
      %v2756 = vld [vmem:[#allocation2 + $0x420] sm:$0xff]
      %v2757 = vld [vmem:[#allocation2 + $0x428] sm:$0xff]
      %v2758 = vld [vmem:[#allocation2 + $0x430] sm:$0xff]
      %v2759 = vld [vmem:[#allocation2 + $0x438] sm:$0xff]
      %v2760 = vld [vmem:[#allocation2 + $0x440] sm:$0xff]
      %v2761 = vld [vmem:[#allocation2 + $0x448] sm:$0xff]
      %v2762 = vld [vmem:[#allocation2 + $0x450] sm:$0xff]
      %v2763 = vld [vmem:[#allocation2 + $0x458] sm:$0xff]
      %v2764 = vld [vmem:[#allocation2 + $0x460] sm:$0xff]
      %v2765 = vld [vmem:[#allocation2 + $0x468] sm:$0xff]
      %v2766 = vld [vmem:[#allocation2 + $0x470] sm:$0xff]
      %v2767 = vld [vmem:[#allocation2 + $0x478] sm:$0xff]
      %v2769 = vsel %vm1194, %v2588, 0
      %v2772 = vsel %vm1194, %v2593, 0
      %v2775 = vsel %vm1194, %v2598, 0
      %v2778 = vsel %vm1194, %v2603, 0
      %v2781 = vsel %vm1194, %v2608, 0
      %v2784 = vsel %vm1194, %v2613, 0
      %v2787 = vsel %vm1194, %v2618, 0
      %v2790 = vsel %vm1194, %v2623, 0
      %2792 = vmatprep.subr.mxu0 %v2625
      %2793 = vmatpush1.msra.mxu0 %v2624
      %2794 = vmatprep.subr.mxu0 %v2627
      %2795 = vmatpush1.msra.mxu0 %v2626
      %2796 = vmatprep.subr.mxu0 %v2629
      %2797 = vmatpush1.msra.mxu0 %v2628
      %2798 = vmatprep.subr.mxu0 %v2631
      %2799 = vmatpush1.msra.mxu0 %v2630
      %2800 = vmatprep.subr.mxu0 %v2633
      %2801 = vmatpush1.msra.mxu0 %v2632
      %2802 = vmatprep.subr.mxu0 %v2635
      %2803 = vmatpush1.msra.mxu0 %v2634
      %2804 = vmatprep.subr.mxu0 %v2637
      %2805 = vmatpush1.msra.mxu0 %v2636
      %2806 = vmatprep.subr.mxu0 %v2639
      %2807 = vmatpush1.msra.mxu0 %v2638
      %2808 = vmatprep.subr.mxu0 %v2641
      %2809 = vmatpush1.msra.mxu0 %v2640
      %2810 = vmatprep.subr.mxu0 %v2643
      %2811 = vmatpush1.msra.mxu0 %v2642
      %2812 = vmatprep.subr.mxu0 %v2645
      %2813 = vmatpush1.msra.mxu0 %v2644
      %2814 = vmatprep.subr.mxu0 %v2647
      %2815 = vmatpush1.msra.mxu0 %v2646
      %2816 = vmatprep.subr.mxu0 %v2649
      %2817 = vmatpush1.msra.mxu0 %v2648
      %2818 = vmatprep.subr.mxu0 %v2651
      %2819 = vmatpush1.msra.mxu0 %v2650
      %2820 = vmatprep.subr.mxu0 %v2653
      %2821 = vmatpush1.msra.mxu0 %v2652
      %2822 = vmatprep.subr.mxu0 %v2655
      %2823 = vmatpush1.msra.mxu0 %v2654
      %2824 = vmatprep.subr.mxu0 %v2657
      %2825 = vmatpush1.msra.mxu0 %v2656
      %2826 = vmatprep.subr.mxu0 %v2659
      %2827 = vmatpush1.msra.mxu0 %v2658
      %2828 = vmatprep.subr.mxu0 %v2661
      %2829 = vmatpush1.msra.mxu0 %v2660
      %2830 = vmatprep.subr.mxu0 %v2663
      %2831 = vmatpush1.msra.mxu0 %v2662
      %2832 = vmatprep.subr.mxu0 %v2665
      %2833 = vmatpush1.msra.mxu0 %v2664
      %2834 = vmatprep.subr.mxu0 %v2667
      %2835 = vmatpush1.msra.mxu0 %v2666
      %2836 = vmatprep.subr.mxu0 %v2669
      %2837 = vmatpush1.msra.mxu0 %v2668
      %2838 = vmatprep.subr.mxu0 %v2671
      %2839 = vmatpush1.msra.mxu0 %v2670
      %2840 = vmatprep.subr.mxu0 %v2673
      %2841 = vmatpush1.msra.mxu0 %v2672
      %2842 = vmatprep.subr.mxu0 %v2675
      %2843 = vmatpush1.msra.mxu0 %v2674
      %2844 = vmatprep.subr.mxu0 %v2677
      %2845 = vmatpush1.msra.mxu0 %v2676
      %2846 = vmatprep.subr.mxu0 %v2679
      %2847 = vmatpush1.msra.mxu0 %v2678
      %2848 = vmatprep.subr.mxu0 %v2681
      %2849 = vmatpush1.msra.mxu0 %v2680
      %2850 = vmatprep.subr.mxu0 %v2683
      %2851 = vmatpush1.msra.mxu0 %v2682
      %2852 = vmatprep.subr.mxu0 %v2685
      %2853 = vmatpush1.msra.mxu0 %v2684
      %2854 = vmatprep.subr.mxu0 %v2687
      %2855 = vmatpush1.msra.mxu0 %v2686
      %2856 = vmatprep.mubr.f32.mxu0 %v2585
      %2857 = vmatmul.mubr.f32.gmra.mrb[0].mxu0 %v2584
      %v2858 = vpop.f32.mrb[0].mxu0
      %v2859 = vadd.f32 0.0, %v2858
      %v2860 = vpop.f32.mrb[0].mxu0
      %v2861 = vadd.f32 0.0, %v2860
      %2862 = vmatprep.mubr.f32.mxu0 %v2590
      %2863 = vmatmul.mubr.f32.gmra.mrb[0].mxu0 %v2589
      %v2864 = vpop.f32.mrb[0].mxu0
      %v2865 = vadd.f32 0.0, %v2864
      %v2866 = vpop.f32.mrb[0].mxu0
      %v2867 = vadd.f32 0.0, %v2866
      %2868 = vmatprep.mubr.f32.mxu0 %v2595
      %2869 = vmatmul.mubr.f32.gmra.mrb[0].mxu0 %v2594
      %v2870 = vpop.f32.mrb[0].mxu0
      %v2871 = vadd.f32 0.0, %v2870
      %v2872 = vpop.f32.mrb[0].mxu0
      %v2873 = vadd.f32 0.0, %v2872
      %2874 = vmatprep.mubr.f32.mxu0 %v2600
      %2875 = vmatmul.mubr.f32.gmra.mrb[0].mxu0 %v2599
      %v2876 = vpop.f32.mrb[0].mxu0
      %v2877 = vadd.f32 0.0, %v2876
      %v2878 = vpop.f32.mrb[0].mxu0
      %v2879 = vadd.f32 0.0, %v2878
      %2880 = vmatprep.mubr.f32.mxu0 %v2605
      %2881 = vmatmul.mubr.f32.gmra.mrb[0].mxu0 %v2604
      %v2882 = vpop.f32.mrb[0].mxu0
      %v2883 = vadd.f32 0.0, %v2882
      %v2884 = vpop.f32.mrb[0].mxu0
      %v2885 = vadd.f32 0.0, %v2884
      %2886 = vmatprep.mubr.f32.mxu0 %v2610
      %2887 = vmatmul.mubr.f32.gmra.mrb[0].mxu0 %v2609
      %v2888 = vpop.f32.mrb[0].mxu0
      %v2889 = vadd.f32 0.0, %v2888
      %v2890 = vpop.f32.mrb[0].mxu0
      %v2891 = vadd.f32 0.0, %v2890
      %2892 = vmatprep.mubr.f32.mxu0 %v2615
      %2893 = vmatmul.mubr.f32.gmra.mrb[0].mxu0 %v2614
      %v2894 = vpop.f32.mrb[0].mxu0
      %v2895 = vadd.f32 0.0, %v2894
      %v2896 = vpop.f32.mrb[0].mxu0
      %v2897 = vadd.f32 0.0, %v2896
      %2898 = vmatprep.mubr.f32.mxu0 %v2620
      %2899 = vmatmul.mubr.f32.gmra.mrb[0].mxu0 %v2619
      %v2900 = vpop.f32.mrb[0].mxu0
      %v2901 = vadd.f32 0.0, %v2900
      %v2902 = vpop.f32.mrb[0].mxu0
      %v2903 = vadd.f32 0.0, %v2902
      %2904 = vdwg.mxu0
      %2905 = vmatprep.subr.mxu0 %v2689
      %2906 = vmatpush1.msra.mxu0 %v2688
      %2907 = vmatprep.subr.mxu0 %v2691
      %2908 = vmatpush1.msra.mxu0 %v2690
      %2909 = vmatprep.subr.mxu0 %v2693
      %2910 = vmatpush1.msra.mxu0 %v2692
      %2911 = vmatprep.subr.mxu0 %v2695
      %2912 = vmatpush1.msra.mxu0 %v2694
      %2913 = vmatprep.subr.mxu0 %v2697
      %2914 = vmatpush1.msra.mxu0 %v2696
      %2915 = vmatprep.subr.mxu0 %v2699
      %2916 = vmatpush1.msra.mxu0 %v2698
      %2917 = vmatprep.subr.mxu0 %v2701
      %2918 = vmatpush1.msra.mxu0 %v2700
      %2919 = vmatprep.subr.mxu0 %v2703
      %2920 = vmatpush1.msra.mxu0 %v2702
      %2921 = vmatprep.subr.mxu0 %v2705
      %2922 = vmatpush1.msra.mxu0 %v2704
      %2923 = vmatprep.subr.mxu0 %v2707
      %2924 = vmatpush1.msra.mxu0 %v2706
      %2925 = vmatprep.subr.mxu0 %v2709
      %2926 = vmatpush1.msra.mxu0 %v2708
      %2927 = vmatprep.subr.mxu0 %v2711
      %2928 = vmatpush1.msra.mxu0 %v2710
      %2929 = vmatprep.subr.mxu0 %v2713
      %2930 = vmatpush1.msra.mxu0 %v2712
      %2931 = vmatprep.subr.mxu0 %v2715
      %2932 = vmatpush1.msra.mxu0 %v2714
      %2933 = vmatprep.subr.mxu0 %v2717
      %2934 = vmatpush1.msra.mxu0 %v2716
      %2935 = vmatprep.subr.mxu0 %v2719
      %2936 = vmatpush1.msra.mxu0 %v2718
      %2937 = vmatprep.subr.mxu0 %v2721
      %2938 = vmatpush1.msra.mxu0 %v2720
      %2939 = vmatprep.subr.mxu0 %v2723
      %2940 = vmatpush1.msra.mxu0 %v2722
      %2941 = vmatprep.subr.mxu0 %v2725
      %2942 = vmatpush1.msra.mxu0 %v2724
      %2943 = vmatprep.subr.mxu0 %v2727
      %2944 = vmatpush1.msra.mxu0 %v2726
      %2945 = vmatprep.subr.mxu0 %v2729
      %2946 = vmatpush1.msra.mxu0 %v2728
      %2947 = vmatprep.subr.mxu0 %v2731
      %2948 = vmatpush1.msra.mxu0 %v2730
      %2949 = vmatprep.subr.mxu0 %v2733
      %2950 = vmatpush1.msra.mxu0 %v2732
      %2951 = vmatprep.subr.mxu0 %v2735
      %2952 = vmatpush1.msra.mxu0 %v2734
      %2953 = vmatprep.subr.mxu0 %v2737
      %2954 = vmatpush1.msra.mxu0 %v2736
      %2955 = vmatprep.subr.mxu0 %v2739
      %2956 = vmatpush1.msra.mxu0 %v2738
      %2957 = vmatprep.subr.mxu0 %v2741
      %2958 = vmatpush1.msra.mxu0 %v2740
      %2959 = vmatprep.subr.mxu0 %v2743
      %2960 = vmatpush1.msra.mxu0 %v2742
      %2961 = vmatprep.subr.mxu0 %v2745
      %2962 = vmatpush1.msra.mxu0 %v2744
      %2963 = vmatprep.subr.mxu0 %v2747
      %2964 = vmatpush1.msra.mxu0 %v2746
      %2965 = vmatprep.subr.mxu0 %v2749
      %2966 = vmatpush1.msra.mxu0 %v2748
      %2967 = vmatprep.subr.mxu0 %v2751
      %2968 = vmatpush1.msra.mxu0 %v2750
      %2969 = vmatprep.mubr.f32.mxu0 %v2587
      %2970 = vmatmul.mubr.f32.gmra.mrb[0].mxu0 %v2586
      %v2971 = vpop.f32.mrb[0].mxu0
      %v2972 = vadd.f32 %v2859, %v2971
      %v2973 = vpop.f32.mrb[0].mxu0
      %v2974 = vadd.f32 %v2861, %v2973
      %2975 = vmatprep.mubr.f32.mxu0 %v2592
      %2976 = vmatmul.mubr.f32.gmra.mrb[0].mxu0 %v2591
      %v2977 = vpop.f32.mrb[0].mxu0
      %v2978 = vadd.f32 %v2865, %v2977
      %v2979 = vpop.f32.mrb[0].mxu0
      %v2980 = vadd.f32 %v2867, %v2979
      %2981 = vmatprep.mubr.f32.mxu0 %v2597
      %2982 = vmatmul.mubr.f32.gmra.mrb[0].mxu0 %v2596
      %v2983 = vpop.f32.mrb[0].mxu0
      %v2984 = vadd.f32 %v2871, %v2983
      %v2985 = vpop.f32.mrb[0].mxu0
      %v2986 = vadd.f32 %v2873, %v2985
      %2987 = vmatprep.mubr.f32.mxu0 %v2602
      %2988 = vmatmul.mubr.f32.gmra.mrb[0].mxu0 %v2601
      %v2989 = vpop.f32.mrb[0].mxu0
      %v2990 = vadd.f32 %v2877, %v2989
      %v2991 = vpop.f32.mrb[0].mxu0
      %v2992 = vadd.f32 %v2879, %v2991
      %2993 = vmatprep.mubr.f32.mxu0 %v2607
      %2994 = vmatmul.mubr.f32.gmra.mrb[0].mxu0 %v2606
      %v2995 = vpop.f32.mrb[0].mxu0
      %v2996 = vadd.f32 %v2883, %v2995
      %v2997 = vpop.f32.mrb[0].mxu0
      %v2998 = vadd.f32 %v2885, %v2997
      %2999 = vmatprep.mubr.f32.mxu0 %v2612
      %3000 = vmatmul.mubr.f32.gmra.mrb[0].mxu0 %v2611
      %v3001 = vpop.f32.mrb[0].mxu0
      %v3002 = vadd.f32 %v2889, %v3001
      %v3003 = vpop.f32.mrb[0].mxu0
      %v3004 = vadd.f32 %v2891, %v3003
      %3005 = vmatprep.mubr.f32.mxu0 %v2617
      %3006 = vmatmul.mubr.f32.gmra.mrb[0].mxu0 %v2616
      %v3007 = vpop.f32.mrb[0].mxu0
      %v3008 = vadd.f32 %v2895, %v3007
      %v3009 = vpop.f32.mrb[0].mxu0
      %v3010 = vadd.f32 %v2897, %v3009
      %3011 = vmatprep.mubr.f32.mxu0 %v2622
      %3012 = vmatmul.mubr.f32.gmra.mrb[0].mxu0 %v2621
      %v3013 = vpop.f32.mrb[0].mxu0
      %v3014 = vadd.f32 %v2901, %v3013
      %v3015 = vpop.f32.mrb[0].mxu0
      %v3016 = vadd.f32 %v2903, %v3015
      %3017 = vdwg.mxu0
      %3018 = vmatprep.subr.mxu0 %v2753
      %3019 = vmatpush1.msra.mxu0 %v2752
      %3020 = vmatprep.subr.mxu0 %v2755
      %3021 = vmatpush1.msra.mxu0 %v2754
      %3022 = vmatprep.subr.mxu0 %v2757
      %3023 = vmatpush1.msra.mxu0 %v2756
      %3024 = vmatprep.subr.mxu0 %v2759
      %3025 = vmatpush1.msra.mxu0 %v2758
      %3026 = vmatprep.subr.mxu0 %v2761
      %3027 = vmatpush1.msra.mxu0 %v2760
      %3028 = vmatprep.subr.mxu0 %v2763
      %3029 = vmatpush1.msra.mxu0 %v2762
      %3030 = vmatprep.subr.mxu0 %v2765
      %3031 = vmatpush1.msra.mxu0 %v2764
      %3032 = vmatprep.subr.mxu0 %v2767
      %3033 = vmatpush1.msra.mxu0 %v2766
      %3034 = vmatprep.subr.mxu0 0.0
      %3035 = vmatpush1.msra.mxu0 0.0
      %3036 = vmatprep.subr.mxu0 0.0
      %3037 = vmatpush1.msra.mxu0 0.0
      %3038 = vmatprep.subr.mxu0 0.0
      %3039 = vmatpush1.msra.mxu0 0.0
      %3040 = vmatprep.subr.mxu0 0.0
      %3041 = vmatpush1.msra.mxu0 0.0
      %3042 = vmatprep.subr.mxu0 0.0
      %3043 = vmatpush1.msra.mxu0 0.0
      %3044 = vmatprep.subr.mxu0 0.0
      %3045 = vmatpush1.msra.mxu0 0.0
      %3046 = vmatprep.subr.mxu0 0.0
      %3047 = vmatpush1.msra.mxu0 0.0
      %3048 = vmatprep.subr.mxu0 0.0
      %3049 = vmatpush1.msra.mxu0 0.0
      %3050 = vmatprep.subr.mxu0 0.0
      %3051 = vmatpush1.msra.mxu0 0.0
      %3052 = vmatprep.subr.mxu0 0.0
      %3053 = vmatpush1.msra.mxu0 0.0
      %3054 = vmatprep.subr.mxu0 0.0
      %3055 = vmatpush1.msra.mxu0 0.0
      %3056 = vmatprep.subr.mxu0 0.0
      %3057 = vmatpush1.msra.mxu0 0.0
      %3058 = vmatprep.subr.mxu0 0.0
      %3059 = vmatpush1.msra.mxu0 0.0
      %3060 = vmatprep.subr.mxu0 0.0
      %3061 = vmatpush1.msra.mxu0 0.0
      %3062 = vmatprep.subr.mxu0 0.0
      %3063 = vmatpush1.msra.mxu0 0.0
      %3064 = vmatprep.subr.mxu0 0.0
      %3065 = vmatpush1.msra.mxu0 0.0
      %3066 = vmatprep.subr.mxu0 0.0
      %3067 = vmatpush1.msra.mxu0 0.0
      %3068 = vmatprep.subr.mxu0 0.0
      %3069 = vmatpush1.msra.mxu0 0.0
      %3070 = vmatprep.subr.mxu0 0.0
      %3071 = vmatpush1.msra.mxu0 0.0
      %3072 = vmatprep.subr.mxu0 0.0
      %3073 = vmatpush1.msra.mxu0 0.0
      %3074 = vmatprep.subr.mxu0 0.0
      %3075 = vmatpush1.msra.mxu0 0.0
      %3076 = vmatprep.subr.mxu0 0.0
      %3077 = vmatpush1.msra.mxu0 0.0
      %3078 = vmatprep.subr.mxu0 0.0
      %3079 = vmatpush1.msra.mxu0 0.0
      %3080 = vmatprep.subr.mxu0 0.0
      %3081 = vmatpush1.msra.mxu0 0.0
      %3082 = vmatprep.mubr.f32.mxu0 0.0
      %3083 = vmatmul.mubr.f32.gmra.mrb[0].mxu0 %v2769
      %v3084 = vpop.f32.mrb[0].mxu0
      %v3085 = vadd.f32 %v2972, %v3084
      %v3086 = vpop.f32.mrb[0].mxu0
      %v3087 = vadd.f32 %v2974, %v3086
      %3088 = vmatprep.mubr.f32.mxu0 0.0
      %3089 = vmatmul.mubr.f32.gmra.mrb[0].mxu0 %v2772
      %v3090 = vpop.f32.mrb[0].mxu0
      %v3091 = vadd.f32 %v2978, %v3090
      %v3092 = vpop.f32.mrb[0].mxu0
      %v3093 = vadd.f32 %v2980, %v3092
      %3094 = vmatprep.mubr.f32.mxu0 0.0
      %3095 = vmatmul.mubr.f32.gmra.mrb[0].mxu0 %v2775
      %v3096 = vpop.f32.mrb[0].mxu0
      %v3097 = vadd.f32 %v2984, %v3096
      %v3098 = vpop.f32.mrb[0].mxu0
      %v3099 = vadd.f32 %v2986, %v3098
      %3100 = vmatprep.mubr.f32.mxu0 0.0
      %3101 = vmatmul.mubr.f32.gmra.mrb[0].mxu0 %v2778
      %v3102 = vpop.f32.mrb[0].mxu0
      %v3103 = vadd.f32 %v2990, %v3102
      %v3104 = vpop.f32.mrb[0].mxu0
      %v3105 = vadd.f32 %v2992, %v3104
      %3106 = vmatprep.mubr.f32.mxu0 0.0
      %3107 = vmatmul.mubr.f32.gmra.mrb[0].mxu0 %v2781
      %v3108 = vpop.f32.mrb[0].mxu0
      %v3109 = vadd.f32 %v2996, %v3108
      %v3110 = vpop.f32.mrb[0].mxu0
      %v3111 = vadd.f32 %v2998, %v3110
      %3112 = vmatprep.mubr.f32.mxu0 0.0
      %3113 = vmatmul.mubr.f32.gmra.mrb[0].mxu0 %v2784
      %v3114 = vpop.f32.mrb[0].mxu0
      %v3115 = vadd.f32 %v3002, %v3114
      %v3116 = vpop.f32.mrb[0].mxu0
      %v3117 = vadd.f32 %v3004, %v3116
      %3118 = vmatprep.mubr.f32.mxu0 0.0
      %3119 = vmatmul.mubr.f32.gmra.mrb[0].mxu0 %v2787
      %v3120 = vpop.f32.mrb[0].mxu0
      %v3121 = vadd.f32 %v3008, %v3120
      %v3122 = vpop.f32.mrb[0].mxu0
      %v3123 = vadd.f32 %v3010, %v3122
      %3124 = vmatprep.mubr.f32.mxu0 0.0
      %3125 = vmatmul.mubr.f32.gmra.mrb[0].mxu0 %v2790
      %v3126 = vpop.f32.mrb[0].mxu0
      %v3127 = vadd.f32 %v3014, %v3126
      %v3128 = vpop.f32.mrb[0].mxu0
      %v3129 = vadd.f32 %v3016, %v3128
      %3130 = vdwg.mxu0
      %s3131 = scalar_lea.vmem %s3, 128
      %v3132 = vld [vmem:[%s3131] sm:$0xff]
      %v3133 = vld [vmem:[%s3131 + $0x8] sm:$0xff]
      %v3134 = vld [vmem:[%s3131 + $0x10] sm:$0xff]
      %v3135 = vld [vmem:[%s3131 + $0x18] sm:$0xff]
      %v3136 = vld [vmem:[%s3131 + $0x20] sm:$0xff]
      %v3137 = vld [vmem:[%s3131 + $0x28] sm:$0xff]
      %v3138 = vld [vmem:[%s3131 + $0x30] sm:$0xff]
      %v3139 = vld [vmem:[%s3131 + $0x38] sm:$0xff]
      %s3140 = scalar_lea.vmem %s3, 192
      %v3141 = vld [vmem:[%s3140] sm:$0xff]
      %v3142 = vld [vmem:[%s3140 + $0x8] sm:$0xff]
      %v3143 = vld [vmem:[%s3140 + $0x10] sm:$0xff]
      %v3144 = vld [vmem:[%s3140 + $0x18] sm:$0xff]
      %v3145 = vld [vmem:[%s3140 + $0x20] sm:$0xff]
      %v3146 = vld [vmem:[%s3140 + $0x28] sm:$0xff]
      %v3147 = vld [vmem:[%s3140 + $0x30] sm:$0xff]
      %v3148 = vld [vmem:[%s3140 + $0x38] sm:$0xff]
      %v3149 = vadd.f32 %v3085, %v3087
      %3150 = vadd.xlane.f32.xlu0 %v3149
      %v3151 = vpop.xlane.xlu0 %3150
      %v3152 = vadd.f32 %v3091, %v3093
      %3153 = vadd.xlane.f32.xlu0 %v3152
      %v3154 = vpop.xlane.xlu0 %3153
      %v3155 = vadd.f32 %v3097, %v3099
      %3156 = vadd.xlane.f32.xlu0 %v3155
      %v3157 = vpop.xlane.xlu0 %3156
      %v3158 = vadd.f32 %v3103, %v3105
      %3159 = vadd.xlane.f32.xlu0 %v3158
      %v3160 = vpop.xlane.xlu0 %3159
      %v3161 = vadd.f32 %v3109, %v3111
      %3162 = vadd.xlane.f32.xlu0 %v3161
      %v3163 = vpop.xlane.xlu0 %3162
      %v3164 = vadd.f32 %v3115, %v3117
      %3165 = vadd.xlane.f32.xlu0 %v3164
      %v3166 = vpop.xlane.xlu0 %3165
      %v3167 = vadd.f32 %v3121, %v3123
      %3168 = vadd.xlane.f32.xlu0 %v3167
      %v3169 = vpop.xlane.xlu0 %3168
      %v3170 = vadd.f32 %v3127, %v3129
      %3171 = vadd.xlane.f32.xlu0 %v3170
      %v3172 = vpop.xlane.xlu0 %3171
      %v3173 = vmul.f32 %v3151, %v1599
      %v3174 = vmul.f32 %v3154, %v1599
      %v3175 = vmul.f32 %v3157, %v1599
      %v3176 = vmul.f32 %v3160, %v1599
      %v3177 = vmul.f32 %v3163, %v1599
      %v3178 = vmul.f32 %v3166, %v1599
      %v3179 = vmul.f32 %v3169, %v1599
      %v3180 = vmul.f32 %v3172, %v1599
      %v3181 = vsub.f32 %v3085, %v3173
      %v3182 = vsub.f32 %v3087, %v3173
      %v3183 = vsub.f32 %v3091, %v3174
      %v3184 = vsub.f32 %v3093, %v3174
      %v3185 = vsub.f32 %v3097, %v3175
      %v3186 = vsub.f32 %v3099, %v3175
      %v3187 = vsub.f32 %v3103, %v3176
      %v3188 = vsub.f32 %v3105, %v3176
      %v3189 = vsub.f32 %v3109, %v3177
      %v3190 = vsub.f32 %v3111, %v3177
      %v3191 = vsub.f32 %v3115, %v3178
      %v3192 = vsub.f32 %v3117, %v3178
      %v3193 = vsub.f32 %v3121, %v3179
      %v3194 = vsub.f32 %v3123, %v3179
      %v3195 = vsub.f32 %v3127, %v3180
      %v3196 = vsub.f32 %v3129, %v3180
      %v3197 = vmul.f32 %v3181, %v3181
      %v3198 = vmul.f32 %v3182, %v3182
      %v3199 = vmul.f32 %v3183, %v3183
      %v3200 = vmul.f32 %v3184, %v3184
      %v3201 = vmul.f32 %v3185, %v3185
      %v3202 = vmul.f32 %v3186, %v3186
      %v3203 = vmul.f32 %v3187, %v3187
      %v3204 = vmul.f32 %v3188, %v3188
      %v3205 = vmul.f32 %v3189, %v3189
      %v3206 = vmul.f32 %v3190, %v3190
      %v3207 = vmul.f32 %v3191, %v3191
      %v3208 = vmul.f32 %v3192, %v3192
      %v3209 = vmul.f32 %v3193, %v3193
      %v3210 = vmul.f32 %v3194, %v3194
      %v3211 = vmul.f32 %v3195, %v3195
      %v3212 = vmul.f32 %v3196, %v3196
      %v3213 = vadd.f32 %v3197, %v3198
      %3214 = vadd.xlane.f32.xlu0 %v3213
      %v3215 = vpop.xlane.xlu0 %3214
      %v3216 = vadd.f32 %v3199, %v3200
      %3217 = vadd.xlane.f32.xlu0 %v3216
      %v3218 = vpop.xlane.xlu0 %3217
      %v3219 = vadd.f32 %v3201, %v3202
      %3220 = vadd.xlane.f32.xlu0 %v3219
      %v3221 = vpop.xlane.xlu0 %3220
      %v3222 = vadd.f32 %v3203, %v3204
      %3223 = vadd.xlane.f32.xlu0 %v3222
      %v3224 = vpop.xlane.xlu0 %3223
      %v3225 = vadd.f32 %v3205, %v3206
      %3226 = vadd.xlane.f32.xlu0 %v3225
      %v3227 = vpop.xlane.xlu0 %3226
      %v3228 = vadd.f32 %v3207, %v3208
      %3229 = vadd.xlane.f32.xlu0 %v3228
      %v3230 = vpop.xlane.xlu0 %3229
      %v3231 = vadd.f32 %v3209, %v3210
      %3232 = vadd.xlane.f32.xlu0 %v3231
      %v3233 = vpop.xlane.xlu0 %3232
      %v3234 = vadd.f32 %v3211, %v3212
      %3235 = vadd.xlane.f32.xlu0 %v3234
      %v3236 = vpop.xlane.xlu0 %3235
      %v3237 = vmul.f32 %v3215, %v1599
      %v3238 = vmul.f32 %v3218, %v1599
      %v3239 = vmul.f32 %v3221, %v1599
      %v3240 = vmul.f32 %v3224, %v1599
      %v3241 = vmul.f32 %v3227, %v1599
      %v3242 = vmul.f32 %v3230, %v1599
      %v3243 = vmul.f32 %v3233, %v1599
      %v3244 = vmul.f32 %v3236, %v1599
      %v3245 = vadd.f32 %v3237, 1e-05
      %v3246 = vadd.f32 %v3238, 1e-05
      %v3247 = vadd.f32 %v3239, 1e-05
      %v3248 = vadd.f32 %v3240, 1e-05
      %v3249 = vadd.f32 %v3241, 1e-05
      %v3250 = vadd.f32 %v3242, 1e-05
      %v3251 = vadd.f32 %v3243, 1e-05
      %v3252 = vadd.f32 %v3244, 1e-05
      %v3253 = vrsqrt.pop %v3245
      %v3254 = vrsqrt.pop %v3246
      %v3255 = vrsqrt.pop %v3247
      %v3256 = vrsqrt.pop %v3248
      %v3257 = vrsqrt.pop %v3249
      %v3258 = vrsqrt.pop %v3250
      %v3259 = vrsqrt.pop %v3251
      %v3260 = vrsqrt.pop %v3252
      %v3261 = vmul.f32 %v3181, %v3253
      %v3262 = vmul.f32 %v3182, %v3253
      %v3263 = vmul.f32 %v3183, %v3254
      %v3264 = vmul.f32 %v3184, %v3254
      %v3265 = vmul.f32 %v3185, %v3255
      %v3266 = vmul.f32 %v3186, %v3255
      %v3267 = vmul.f32 %v3187, %v3256
      %v3268 = vmul.f32 %v3188, %v3256
      %v3269 = vmul.f32 %v3189, %v3257
      %v3270 = vmul.f32 %v3190, %v3257
      %v3271 = vmul.f32 %v3191, %v3258
      %v3272 = vmul.f32 %v3192, %v3258
      %v3273 = vmul.f32 %v3193, %v3259
      %v3274 = vmul.f32 %v3194, %v3259
      %v3275 = vmul.f32 %v3195, %v3260
      %v3276 = vmul.f32 %v3196, %v3260
      %3278 = vset.pattern.permute.xlu0 0
      %3279 = vperm.xlu0 %3278, %v3132
      %v3280 = vpop.permute.xlu0 %3279
      %3283 = vset.pattern.permute.xlu0 0
      %3284 = vperm.xlu0 %3283, %v3133
      %v3285 = vpop.permute.xlu0 %3284
      %3288 = vset.pattern.permute.xlu0 0
      %3289 = vperm.xlu0 %3288, %v3134
      %v3290 = vpop.permute.xlu0 %3289
      %3293 = vset.pattern.permute.xlu0 0
      %3294 = vperm.xlu0 %3293, %v3135
      %v3295 = vpop.permute.xlu0 %3294
      %3298 = vset.pattern.permute.xlu0 0
      %3299 = vperm.xlu0 %3298, %v3136
      %v3300 = vpop.permute.xlu0 %3299
      %3303 = vset.pattern.permute.xlu0 0
      %3304 = vperm.xlu0 %3303, %v3137
      %v3305 = vpop.permute.xlu0 %3304
      %3308 = vset.pattern.permute.xlu0 0
      %3309 = vperm.xlu0 %3308, %v3138
      %v3310 = vpop.permute.xlu0 %3309
      %3313 = vset.pattern.permute.xlu0 0
      %3314 = vperm.xlu0 %3313, %v3139
      %v3315 = vpop.permute.xlu0 %3314
      %v3317 = vmul.f32 %v3261, %v3280
      %v3318 = vmul.f32 %v3262, %v3280
      %v3319 = vmul.f32 %v3263, %v3285
      %v3320 = vmul.f32 %v3264, %v3285
      %v3321 = vmul.f32 %v3265, %v3290
      %v3322 = vmul.f32 %v3266, %v3290
      %v3323 = vmul.f32 %v3267, %v3295
      %v3324 = vmul.f32 %v3268, %v3295
      %v3325 = vmul.f32 %v3269, %v3300
      %v3326 = vmul.f32 %v3270, %v3300
      %v3327 = vmul.f32 %v3271, %v3305
      %v3328 = vmul.f32 %v3272, %v3305
      %v3329 = vmul.f32 %v3273, %v3310
      %v3330 = vmul.f32 %v3274, %v3310
      %v3331 = vmul.f32 %v3275, %v3315
      %v3332 = vmul.f32 %v3276, %v3315
      %3334 = vset.pattern.permute.xlu0 0
      %3335 = vperm.xlu0 %3334, %v3141
      %v3336 = vpop.permute.xlu0 %3335
      %3339 = vset.pattern.permute.xlu0 0
      %3340 = vperm.xlu0 %3339, %v3142
      %v3341 = vpop.permute.xlu0 %3340
      %3344 = vset.pattern.permute.xlu0 0
      %3345 = vperm.xlu0 %3344, %v3143
      %v3346 = vpop.permute.xlu0 %3345
      %3349 = vset.pattern.permute.xlu0 0
      %3350 = vperm.xlu0 %3349, %v3144
      %v3351 = vpop.permute.xlu0 %3350
      %3354 = vset.pattern.permute.xlu0 0
      %3355 = vperm.xlu0 %3354, %v3145
      %v3356 = vpop.permute.xlu0 %3355
      %3359 = vset.pattern.permute.xlu0 0
      %3360 = vperm.xlu0 %3359, %v3146
      %v3361 = vpop.permute.xlu0 %3360
      %3364 = vset.pattern.permute.xlu0 0
      %3365 = vperm.xlu0 %3364, %v3147
      %v3366 = vpop.permute.xlu0 %3365
      %3369 = vset.pattern.permute.xlu0 0
      %3370 = vperm.xlu0 %3369, %v3148
      %v3371 = vpop.permute.xlu0 %3370
      %v3373 = vadd.f32 %v3317, %v3336
      %v3374 = vadd.f32 %v3318, %v3336
      %v3375 = vadd.f32 %v3319, %v3341
      %v3376 = vadd.f32 %v3320, %v3341
      %v3377 = vadd.f32 %v3321, %v3346
      %v3378 = vadd.f32 %v3322, %v3346
      %v3379 = vadd.f32 %v3323, %v3351
      %v3380 = vadd.f32 %v3324, %v3351
      %v3381 = vadd.f32 %v3325, %v3356
      %v3382 = vadd.f32 %v3326, %v3356
      %v3383 = vadd.f32 %v3327, %v3361
      %v3384 = vadd.f32 %v3328, %v3361
      %v3385 = vadd.f32 %v3329, %v3366
      %v3386 = vadd.f32 %v3330, %v3366
      %v3387 = vadd.f32 %v3331, %v3371
      %v3388 = vadd.f32 %v3332, %v3371
      %v3389 = vadd.f32 %v225, %v3373
      %v3390 = vadd.f32 %v226, %v3374
      %v3391 = vadd.f32 %v227, %v3375
      %v3392 = vadd.f32 %v228, %v3376
      %v3393 = vadd.f32 %v229, %v3377
      %v3394 = vadd.f32 %v230, %v3378
      %v3395 = vadd.f32 %v231, %v3379
      %v3396 = vadd.f32 %v232, %v3380
      %v3397 = vadd.f32 %v233, %v3381
      %v3398 = vadd.f32 %v234, %v3382
      %v3399 = vadd.f32 %v235, %v3383
      %v3400 = vadd.f32 %v236, %v3384
      %v3401 = vadd.f32 %v237, %v3385
      %v3402 = vadd.f32 %v238, %v3386
      %v3403 = vadd.f32 %v239, %v3387
      %v3404 = vadd.f32 %v240, %v3388
      %3405 = vst [vmem:[%s224] sm:$0xff] %v3389
      %3406 = vst [vmem:[%s224 + $0x8] sm:$0xff] %v3390
      %3407 = vst [vmem:[%s224 + $0x10] sm:$0xff] %v3391
      %3408 = vst [vmem:[%s224 + $0x18] sm:$0xff] %v3392
      %3409 = vst [vmem:[%s224 + $0x20] sm:$0xff] %v3393
      %3410 = vst [vmem:[%s224 + $0x28] sm:$0xff] %v3394
      %3411 = vst [vmem:[%s224 + $0x30] sm:$0xff] %v3395
      %3412 = vst [vmem:[%s224 + $0x38] sm:$0xff] %v3396
      %3413 = vst [vmem:[%s224 + $0x40] sm:$0xff] %v3397
      %3414 = vst [vmem:[%s224 + $0x48] sm:$0xff] %v3398
      %3415 = vst [vmem:[%s224 + $0x50] sm:$0xff] %v3399
      %3416 = vst [vmem:[%s224 + $0x58] sm:$0xff] %v3400
      %3417 = vst [vmem:[%s224 + $0x60] sm:$0xff] %v3401
      %3418 = vst [vmem:[%s224 + $0x68] sm:$0xff] %v3402
      %3419 = vst [vmem:[%s224 + $0x70] sm:$0xff] %v3403
      %3420 = vst [vmem:[%s224 + $0x78] sm:$0xff] %v3404
      %p3421 = scmp.lt.s32.totalorder %s16, 1
      %s3422 = scalar_select %p3421, %s16, 1
      %s3423 = smul.addr %s3422, 16
      %s3424 = smul.addr %s3423, 8
      %s3425 = scalar_lea.vmem %s5, %s3424
      // Predicated region
      $region41: #{residual_block.1} parent=39 // pred_check
        %p3426 = pneg %p144
      $region42: #{residual_block.1} parent=39 // pred_check_branch
        %3428 = sbr.rel (%p3426) target = $region44
      $region43: #{residual_block.1} parent=39 // pred_region
        _
      $region44: #{residual_block.1} parent=39 // pred_fallthru
        _
    $region40: #{residual_block.1} parent=5 // pred_fallthru
      _
    %p3429 = scmp.le.s32.totalorder 2, %s11
    // Predicated region
    $region45: #{residual_block.1} parent=5 // pred_check
      %p3430 = pneg %p3429
    $region46: #{residual_block.1} parent=5 // pred_check_branch
      %3432 = sbr.rel (%p3430) target = $region48
    $region47: #{residual_block.1} parent=5 // pred_region
      %s3433 = ssub.s32 %s11, 2
      // Predicated region
      $region49: #{residual_block.1} parent=47 // pred_check
        %p3434 = pneg %p150
      $region50: #{residual_block.1} parent=47 // pred_check_branch
        %3436 = sbr.rel (%p3434) target = $region52
      $region51: #{residual_block.1} parent=47 // pred_region
        %p3437 = scmp.lt.s32.totalorder %s17, 1
        %s3438 = scalar_select %p3437, %s17, 1
        %s3439 = smul.addr %s3438, 16
        %s3440 = smul.addr %s3439, 8
        %s3441 = scalar_lea.vmem %s5, %s3440
      $region52: #{residual_block.1} parent=47 // pred_fallthru
        _
    $region48: #{residual_block.1} parent=5 // pred_fallthru
      _
  $region6: #{residual_block.1} parent=0 // loop_footer
    %s15 = sadd.s32 1, %s11
  $region7: #{residual_block.1} parent=0 // loop_footer_branch
    %10 = sbr.rel target = $region3
  $region8: #{residual_block.1} parent=0 // loop_exit
    _

</llo_original>
